<compile_context>
chip_gen: v5e
topology: v5e:2x2
jax: 0.10.0
libtpu: 0.0.40
codegen_flags: <defaults>
</compile_context>

<pallas_src>
import math
import functools

import jax
import jax.numpy as jnp
import numpy as np
from jax import lax
from jax.experimental import pallas as pl
from jax.experimental.pallas import tpu as pltpu


# ----------------------------- shared math helpers -----------------------------

def _layer_norm(x, gamma, beta, eps=1e-5):
    inv_c = 1.0 / x.shape[-1]
    mu = jnp.sum(x, axis=-1, keepdims=True) * inv_c
    xc = x - mu
    var = jnp.sum(xc * xc, axis=-1, keepdims=True) * inv_c
    return xc * lax.rsqrt(var + eps) * gamma + beta


def _gelu_tanh(x):
    # TODO(synk): PyTorch nn.GELU() defaults to exact erf; the tanh form keeps the
    # transcendental on the EUP slot and deviates by <= ~3e-4 abs.
    c = 0.7978845608028654  # sqrt(2/pi)
    return 0.5 * x * (1.0 + jnp.tanh(c * (x + 0.044715 * x * x * x)))


# ------------------------------- Pallas kernel ----------------------------------

def _aifi_kernel(src_tile_ref, src_full_ref, pos_ref,
                 wqk_ref, bqk_ref, wv_ref, bv_ref,
                 wo_ref, bo_ref, w1_ref, b1_ref, w2_ref, b2_ref,
                 g1_ref, be1_ref, g2_ref, be2_ref,
                 out_ref,
                 q_sc, kT_sc, v_sc,
                 *, num_heads, head_dim, tq):
    C = num_heads * head_dim
    qi = pl.program_id(1)

    # ---- per-batch Q / K / V projections: computed once (query-tile 0), kept in VMEM ----
    @pl.when(qi == 0)
    def _():
        src_full = src_full_ref[0]                                      # (N, C) f32
        qk_in = (src_full + pos_ref[...]).astype(jnp.bfloat16)          # q = k = src + pos
        # Fused Q/K projection: one bf16 [C, 2C] MXU pass, f32 accumulation.
        qk = jnp.dot(qk_in, wqk_ref[...],
                     preferred_element_type=jnp.float32) + bqk_ref[...]  # (N, 2C) f32
        scale = 1.0 / math.sqrt(head_dim)
        q_sc[...] = (qk[:, :C] * scale).astype(jnp.bfloat16)            # 1/sqrt(dh) folded into Q
        kT_sc[...] = qk[:, C:].T.astype(jnp.bfloat16)                   # (C, N): sublane-aligned heads
        v_sc[...] = (jnp.dot(src_full.astype(jnp.bfloat16), wv_ref[...],
                             preferred_element_type=jnp.float32)
                     + bv_ref[...]).astype(jnp.bfloat16)                # (N, C)

    # ---- attention for this query tile; wo fused into the per-head loop ----
    start = pl.multiple_of(qi * tq, tq)
    q_tile = q_sc[pl.ds(start, tq), :]                                  # (TQ, C) bf16 (pre-scaled)
    v_all = v_sc[...]                                                   # (N, C) bf16

    acc = jnp.zeros((tq, C), jnp.float32)                               # lane-dense f32 accumulator
    for h in range(num_heads):                                          # static unroll over heads
        lo = h * head_dim
        s = jnp.dot(q_tile[:, lo:lo + head_dim], kT_sc[lo:lo + head_dim, :],
                    preferred_element_type=jnp.float32)                 # (TQ, N) f32
        m = jnp.max(s, axis=-1, keepdims=True)
        e = jnp.exp(s - m)
        inv = pl.reciprocal(jnp.sum(e, axis=-1, keepdims=True), approx=True)
        p = (e * inv).astype(jnp.bfloat16)
        o_h = jnp.dot(p, v_all[:, lo:lo + head_dim],
                      preferred_element_type=jnp.float32)               # (TQ, hd) f32
        # Fused output projection: attn @ wo == sum_h o_h @ wo[h*hd:(h+1)*hd, :]
        acc = acc + jnp.dot(o_h.astype(jnp.bfloat16), wo_ref[lo:lo + head_dim, :],
                            preferred_element_type=jnp.float32)
    attn = acc + bo_ref[...]

    # residual + post-norm 1 (dropout p=0 -> identity), f32
    x = _layer_norm(src_tile_ref[0] + attn, g1_ref[...], be1_ref[...])

    # FFN: fc2(GELU(fc1(x)))
    h1 = _gelu_tanh(jnp.dot(x.astype(jnp.bfloat16), w1_ref[...],
                            preferred_element_type=jnp.float32) + b1_ref[...])
    h2 = jnp.dot(h1.astype(jnp.bfloat16), w2_ref[...],
                 preferred_element_type=jnp.float32) + b2_ref[...]

    # residual + post-norm 2
    x = _layer_norm(x + h2, g2_ref[...], be2_ref[...])
    out_ref[0] = x.astype(out_ref.dtype)


# ------------------------------ glue / wrapper ---------------------------------

def build_2d_sincos_position_embedding(w, h, embed_dim, temperature=10000.0):
    assert embed_dim % 4 == 0
    grid_w = jnp.arange(w, dtype=jnp.float32)
    grid_h = jnp.arange(h, dtype=jnp.float32)
    gw, gh = jnp.meshgrid(grid_w, grid_h, indexing="ij")
    pos_dim = embed_dim // 4
    omega = jnp.arange(pos_dim, dtype=jnp.float32) / pos_dim
    omega = 1.0 / (temperature ** omega)
    out_w = gw.reshape(-1)[:, None] * omega[None]
    out_h = gh.reshape(-1)[:, None] * omega[None]
    return jnp.concatenate(
        [jnp.sin(out_w), jnp.cos(out_w), jnp.sin(out_h), jnp.cos(out_h)], axis=1)  # [h*w, C]


def init_params(key, c1, cm):
    """Deterministic synthetic parameters in PyTorch layout, pre-transposed for the kernel."""
    ks = jax.random.split(key, 6)
    s = 0.05
    in_proj_w = jax.random.normal(ks[0], (3 * c1, c1), jnp.float32) * s
    in_proj_b = jax.random.normal(ks[1], (3 * c1,), jnp.float32) * s
    out_w = jax.random.normal(ks[2], (c1, c1), jnp.float32) * s
    out_b = jnp.zeros((c1,), jnp.float32)
    fc1_w = jax.random.normal(ks[3], (cm, c1), jnp.float32) * s
    fc1_b = jax.random.normal(ks[4], (cm,), jnp.float32) * s
    fc2_w = jax.random.normal(ks[5], (c1, cm), jnp.float32) * s
    fc2_b = jnp.zeros((c1,), jnp.float32)
    return {
        "wq": in_proj_w[:c1].T,          "bq": in_proj_b[:c1].reshape(1, c1),
        "wk": in_proj_w[c1:2 * c1].T,    "bk": in_proj_b[c1:2 * c1].reshape(1, c1),
        "wv": in_proj_w[2 * c1:].T,      "bv": in_proj_b[2 * c1:].reshape(1, c1),
        "wo": out_w.T,                   "bo": out_b.reshape(1, c1),
        "w1": fc1_w.T,                   "b1": fc1_b.reshape(1, cm),
        "w2": fc2_w.T,                   "b2": fc2_b.reshape(1, c1),
        "g1": jnp.ones((1, c1), jnp.float32), "be1": jnp.zeros((1, c1), jnp.float32),
        "g2": jnp.ones((1, c1), jnp.float32), "be2": jnp.zeros((1, c1), jnp.float32),
    }


def _pick_query_tile(n):
    for t in (128, 64, 32, 16, 8):
        if n % t == 0 and n // t >= 2:
            return t
    return n


def aifi_forward(x_nchw, params, num_heads, *, compute_dtype=jnp.bfloat16):
    B, C, H, W = x_nchw.shape
    N = H * W
    cm = params["w1"].shape[1]
    head_dim = C // num_heads
    tq = _pick_query_tile(N)
    n_q = N // tq

    src = jnp.transpose(x_nchw.reshape(B, C, N), (0, 2, 1)).astype(jnp.float32)  # (B, N, C)
    pos = build_2d_sincos_position_embedding(W, H, C).astype(jnp.float32)         # (N, C)

    # Fuse Q/K projection weights into one [C, 2C] operand; pre-cast matmul
    # weights to bf16 (half weight DMA, native MXU rate).  Biases / LN params f32.
    wqk = jnp.concatenate([params["wq"], params["wk"]], axis=1).astype(compute_dtype)
    bqk = jnp.concatenate([params["bq"], params["bk"]], axis=1)
    wv = params["wv"].astype(compute_dtype)
    wo = params["wo"].astype(compute_dtype)
    w1 = params["w1"].astype(compute_dtype)
    w2 = params["w2"].astype(compute_dtype)

    invariants = [pos, wqk, bqk, wv, params["bv"], wo, params["bo"],
                  w1, params["b1"], w2, params["b2"],
                  params["g1"], params["be1"], params["g2"], params["be2"]]

    def invariant_spec(a):
        # Grid-invariant operand: single-buffered, no pointless double buffering.
        return pl.BlockSpec(a.shape, lambda b, q: (0,) * a.ndim,
                            pipeline_mode=pl.Buffered(1))

    in_specs = ([pl.BlockSpec((1, tq, C), lambda b, q: (b, q, 0)),   # src: query tile (residual)
                 pl.BlockSpec((1, N, C), lambda b, q: (b, 0, 0))]    # src: full rows (K/V at q==0)
                + [invariant_spec(a) for a in invariants])

    # Advisory cost estimate (projections + attention + FFN).
    flops = (2 * B * N * C * (3 * C)      # Q/K/V projections
             + 4 * B * N * N * C          # scores + P@V across heads
             + 2 * B * N * C * C          # fused output projection
             + 4 * B * N * C * cm)        # FFN
    transcendentals = B * (num_heads * N * N + N * cm + 4 * N)
    bytes_accessed = (3 * B * N * C * 4 + N * C * 4
                      + (4 * C * C + 2 * C * cm) * 2
                      + (7 * C + cm) * 4)

    kernel = functools.partial(_aifi_kernel, num_heads=num_heads,
                               head_dim=head_dim, tq=tq)
    out = pl.pallas_call(
        kernel,
        out_shape=jax.ShapeDtypeStruct((B, N, C), jnp.float32),
        grid_spec=pltpu.PrefetchScalarGridSpec(
            num_scalar_prefetch=0,
            grid=(B, n_q),
            in_specs=in_specs,
            out_specs=pl.BlockSpec((1, tq, C), lambda b, q: (b, q, 0)),
            scratch_shapes=[pltpu.VMEM((N, C), compute_dtype),   # Q (pre-scaled)
                            pltpu.VMEM((C, N), compute_dtype),   # K^T
                            pltpu.VMEM((N, C), compute_dtype)],  # V
        ),
        compiler_params=pltpu.CompilerParams(
            # batch axis megacore-parallel; query-tile axis sequential so the
            # per-batch K/V/Q scratch written at q==0 stays valid for q>0.
            dimension_semantics=("parallel", "arbitrary"),
            vmem_limit_bytes=32 * 1024 * 1024,
        ),
        cost_estimate=pl.CostEstimate(flops=flops,
                                      transcendentals=transcendentals,
                                      bytes_accessed=bytes_accessed),
    )(src, src, *invariants)
    return jnp.transpose(out, (0, 2, 1)).reshape(B, C, H, W)


# ------------------------------ pure-JAX reference ------------------------------

def reference_forward(x_nchw, params, num_heads):
    B, C, H, W = x_nchw.shape
    N = H * W
    dh = C // num_heads
    src = jnp.transpose(x_nchw.reshape(B, C, N), (0, 2, 1))
    pos = build_2d_sincos_position_embedding(W, H, C)[None]
    qk = src + pos
    q = qk @ params["wq"] + params["bq"]
    k = qk @ params["wk"] + params["bk"]
    v = src @ params["wv"] + params["bv"]

    def split(t):
        return jnp.transpose(t.reshape(B, N, num_heads, dh), (0, 2, 1, 3))

    qh, kh, vh = split(q), split(k), split(v)
    s = jnp.einsum("bhqd,bhkd->bhqk", qh, kh) / math.sqrt(dh)
    p = jax.nn.softmax(s, axis=-1)
    o = jnp.einsum("bhqk,bhkd->bhqd", p, vh)
    o = jnp.transpose(o, (0, 2, 1, 3)).reshape(B, N, C)
    o = o @ params["wo"] + params["bo"]
    x = _layer_norm(src + o, params["g1"], params["be1"])
    h1 = jax.nn.gelu(x @ params["w1"] + params["b1"], approximate=False)
    h2 = h1 @ params["w2"] + params["b2"]
    x = _layer_norm(x + h2, params["g2"], params["be2"])
    return jnp.transpose(x, (0, 2, 1)).reshape(B, C, H, W)


if __name__ == "__main__":
    # C is a multiple of 128 so every block presented to the kernel is lane-dense.
    B, C, H, W = 2, 128, 8, 8       # N = 64 tokens -> 2 query tiles of 32
    num_heads, cm = 8, 256          # head_dim = 16

    key = jax.random.PRNGKey(0)
    kx, kp = jax.random.split(key)
    x = jax.random.normal(kx, (B, C, H, W), jnp.float32)
    params = init_params(kp, C, cm)

    out = jax.block_until_ready(aifi_forward(x, params, num_heads))
    ref = reference_forward(x, params, num_heads)
    assert out.shape == (B, C, H, W)
    # Kernel uses bf16 MXU operands (f32 accumulation), tanh GELU and approx
    # reciprocal; reference is all-f32 with exact-erf GELU -> loosened tolerance.
    np.testing.assert_allclose(np.asarray(out), np.asarray(ref), rtol=1e-2, atol=1e-2)
    print("KERNEL_OK")
</pallas_src>

<mosaic_0001>
module attributes {stable_mosaic.version = 11 : i64} {
  func.func @_aifi_kernel(%arg0: i32, %arg1: i32, %arg2: memref<1x32x128xf32, #tpu.memory_space<vmem>>, %arg3: memref<1x64x128xf32, #tpu.memory_space<vmem>>, %arg4: memref<64x128xf32, #tpu.memory_space<vmem>>, %arg5: memref<128x256xbf16, #tpu.memory_space<vmem>>, %arg6: memref<1x256xf32, #tpu.memory_space<vmem>>, %arg7: memref<128x128xbf16, #tpu.memory_space<vmem>>, %arg8: memref<1x128xf32, #tpu.memory_space<vmem>>, %arg9: memref<128x128xbf16, #tpu.memory_space<vmem>>, %arg10: memref<1x128xf32, #tpu.memory_space<vmem>>, %arg11: memref<128x256xbf16, #tpu.memory_space<vmem>>, %arg12: memref<1x256xf32, #tpu.memory_space<vmem>>, %arg13: memref<256x128xbf16, #tpu.memory_space<vmem>>, %arg14: memref<1x128xf32, #tpu.memory_space<vmem>>, %arg15: memref<1x128xf32, #tpu.memory_space<vmem>>, %arg16: memref<1x128xf32, #tpu.memory_space<vmem>>, %arg17: memref<1x128xf32, #tpu.memory_space<vmem>>, %arg18: memref<1x128xf32, #tpu.memory_space<vmem>>, %arg19: memref<1x32x128xf32, #tpu.memory_space<vmem>>, %arg20: memref<64x128xbf16, #tpu.memory_space<vmem>>, %arg21: memref<128x64xbf16, #tpu.memory_space<vmem>>, %arg22: memref<64x128xbf16, #tpu.memory_space<vmem>>) attributes {dimension_semantics = [#tpu.dimension_semantics<parallel>, #tpu.dimension_semantics<arbitrary>], iteration_bounds = array<i64: 2, 2>, scalar_prefetch = 0 : i64, scratch_operands = 3 : i64, tpu.core_type = #tpu.core_type<tc>, window_params = [{transform_indices = @transform_0, window_bounds = array<i64: 1, 32, 128>}, {transform_indices = @transform_1, window_bounds = array<i64: 1, 64, 128>}, {pipeline_mode = #tpu.pipeline_mode<synchronous>, transform_indices = @transform_2, window_bounds = array<i64: 64, 128>}, {pipeline_mode = #tpu.pipeline_mode<synchronous>, transform_indices = @transform_3, window_bounds = array<i64: 128, 256>}, {pipeline_mode = #tpu.pipeline_mode<synchronous>, transform_indices = @transform_4, window_bounds = array<i64: 1, 256>}, {pipeline_mode = #tpu.pipeline_mode<synchronous>, transform_indices = @transform_5, window_bounds = array<i64: 128, 128>}, {pipeline_mode = #tpu.pipeline_mode<synchronous>, transform_indices = @transform_6, window_bounds = array<i64: 1, 128>}, {pipeline_mode = #tpu.pipeline_mode<synchronous>, transform_indices = @transform_7, window_bounds = array<i64: 128, 128>}, {pipeline_mode = #tpu.pipeline_mode<synchronous>, transform_indices = @transform_8, window_bounds = array<i64: 1, 128>}, {pipeline_mode = #tpu.pipeline_mode<synchronous>, transform_indices = @transform_9, window_bounds = array<i64: 128, 256>}, {pipeline_mode = #tpu.pipeline_mode<synchronous>, transform_indices = @transform_10, window_bounds = array<i64: 1, 256>}, {pipeline_mode = #tpu.pipeline_mode<synchronous>, transform_indices = @transform_11, window_bounds = array<i64: 256, 128>}, {pipeline_mode = #tpu.pipeline_mode<synchronous>, transform_indices = @transform_12, window_bounds = array<i64: 1, 128>}, {pipeline_mode = #tpu.pipeline_mode<synchronous>, transform_indices = @transform_13, window_bounds = array<i64: 1, 128>}, {pipeline_mode = #tpu.pipeline_mode<synchronous>, transform_indices = @transform_14, window_bounds = array<i64: 1, 128>}, {pipeline_mode = #tpu.pipeline_mode<synchronous>, transform_indices = @transform_15, window_bounds = array<i64: 1, 128>}, {pipeline_mode = #tpu.pipeline_mode<synchronous>, transform_indices = @transform_16, window_bounds = array<i64: 1, 128>}, {transform_indices = @transform_17, window_bounds = array<i64: 1, 32, 128>}]} {
    %c0_i32 = arith.constant 0 : i32
    %0 = arith.cmpi eq, %arg1, %c0_i32 : i32
    %1 = arith.extui %0 : i1 to i32
    %c0_i32_0 = arith.constant 0 : i32
    %2 = arith.cmpi ne, %1, %c0_i32_0 : i32
    scf.if %2 {
      %c0_108 = arith.constant 0 : index
      %c0_109 = arith.constant 0 : index
      %c0_110 = arith.constant 0 : index
      %248 = vector.load %arg3[%c0_108, %c0_109, %c0_110] : memref<1x64x128xf32, #tpu.memory_space<vmem>>, vector<1x64x128xf32>
      %249 = vector.shape_cast %248 : vector<1x64x128xf32> to vector<64x128xf32>
      %c0_111 = arith.constant 0 : index
      %c0_112 = arith.constant 0 : index
      %250 = vector.load %arg4[%c0_111, %c0_112] : memref<64x128xf32, #tpu.memory_space<vmem>>, vector<64x128xf32>
      %251 = arith.addf %249, %250 : vector<64x128xf32>
      %252 = arith.truncf %251 : vector<64x128xf32> to vector<64x128xbf16>
      %c0_113 = arith.constant 0 : index
      %c0_114 = arith.constant 0 : index
      %253 = vector.load %arg5[%c0_113, %c0_114] : memref<128x256xbf16, #tpu.memory_space<vmem>>, vector<128x256xbf16>
      %cst_115 = arith.constant dense<0.000000e+00> : vector<64x256xf32>
      %254 = tpu.matmul %252, %253, %cst_115 {dimension_numbers = #tpu.dot_dimension_numbers<[1], [0], [0], [1], [0, 0, 1, 1], [], []>} : vector<64x128xbf16>, vector<128x256xbf16>, vector<64x256xf32> -> vector<64x256xf32>
      %c0_116 = arith.constant 0 : index
      %c0_117 = arith.constant 0 : index
      %255 = vector.load %arg6[%c0_116, %c0_117] : memref<1x256xf32, #tpu.memory_space<vmem>>, vector<1x256xf32>
      %256 = vector.broadcast %255 : vector<1x256xf32> to vector<64x256xf32>
      %257 = arith.addf %254, %256 : vector<64x256xf32>
      %258 = vector.extract_strided_slice %257 {offsets = [0, 0], sizes = [64, 128], strides = [1, 1]} : vector<64x256xf32> to vector<64x128xf32>
      %cst_118 = arith.constant 2.500000e-01 : f32
      %259 = vector.broadcast %cst_118 : f32 to vector<64x128xf32>
      %260 = arith.mulf %258, %259 : vector<64x128xf32>
      %261 = arith.truncf %260 : vector<64x128xf32> to vector<64x128xbf16>
      %c0_119 = arith.constant 0 : index
      %c0_120 = arith.constant 0 : index
      %262 = vector.load %arg20[%c0_119, %c0_120] : memref<64x128xbf16, #tpu.memory_space<vmem>>, vector<64x128xbf16>
      tpu.vector_store %arg20[%c0_119, %c0_120], %261 {strides = array<i32>} : memref<64x128xbf16, #tpu.memory_space<vmem>>, vector<64x128xbf16>,
      %263 = vector.extract_strided_slice %257 {offsets = [0, 128], sizes = [64, 128], strides = [1, 1]} : vector<64x256xf32> to vector<64x128xf32>
      %264 = tpu.transpose %263, [1, 0] : vector<64x128xf32> -> vector<128x64xf32>
      %265 = arith.truncf %264 : vector<128x64xf32> to vector<128x64xbf16>
      %c0_121 = arith.constant 0 : index
      %c0_122 = arith.constant 0 : index
      %266 = vector.load %arg21[%c0_121, %c0_122] : memref<128x64xbf16, #tpu.memory_space<vmem>>, vector<128x64xbf16>
      tpu.vector_store %arg21[%c0_121, %c0_122], %265 {strides = array<i32>} : memref<128x64xbf16, #tpu.memory_space<vmem>>, vector<128x64xbf16>,
      %267 = arith.truncf %249 : vector<64x128xf32> to vector<64x128xbf16>
      %c0_123 = arith.constant 0 : index
      %c0_124 = arith.constant 0 : index
      %268 = vector.load %arg7[%c0_123, %c0_124] : memref<128x128xbf16, #tpu.memory_space<vmem>>, vector<128x128xbf16>
      %cst_125 = arith.constant dense<0.000000e+00> : vector<64x128xf32>
      %269 = tpu.matmul %267, %268, %cst_125 {dimension_numbers = #tpu.dot_dimension_numbers<[1], [0], [0], [1], [0, 0, 1, 1], [], []>} : vector<64x128xbf16>, vector<128x128xbf16>, vector<64x128xf32> -> vector<64x128xf32>
      %c0_126 = arith.constant 0 : index
      %c0_127 = arith.constant 0 : index
      %270 = vector.load %arg8[%c0_126, %c0_127] : memref<1x128xf32, #tpu.memory_space<vmem>>, vector<1x128xf32>
      %271 = vector.broadcast %270 : vector<1x128xf32> to vector<64x128xf32>
      %272 = arith.addf %269, %271 : vector<64x128xf32>
      %273 = arith.truncf %272 : vector<64x128xf32> to vector<64x128xbf16>
      %c0_128 = arith.constant 0 : index
      %c0_129 = arith.constant 0 : index
      %274 = vector.load %arg22[%c0_128, %c0_129] : memref<64x128xbf16, #tpu.memory_space<vmem>>, vector<64x128xbf16>
      tpu.vector_store %arg22[%c0_128, %c0_129], %273 {strides = array<i32>} : memref<64x128xbf16, #tpu.memory_space<vmem>>, vector<64x128xbf16>,
    } else {
    }
    %c32_i32 = arith.constant 32 : i32
    %3 = arith.muli %arg1, %c32_i32 : i32
    %4 = tpu.assume_multiple %3, 32 : i32
    %5 = arith.index_cast %4 : i32 to index
    %c0 = arith.constant 0 : index
    %6 = vector.load %arg20[%5, %c0] : memref<64x128xbf16, #tpu.memory_space<vmem>>, vector<32x128xbf16>
    %c0_1 = arith.constant 0 : index
    %c0_2 = arith.constant 0 : index
    %7 = vector.load %arg22[%c0_1, %c0_2] : memref<64x128xbf16, #tpu.memory_space<vmem>>, vector<64x128xbf16>
    %cst = arith.constant 0.000000e+00 : f32
    %8 = vector.broadcast %cst : f32 to vector<32x128xf32>
    %9 = vector.extract_strided_slice %6 {offsets = [0, 0], sizes = [32, 16], strides = [1, 1]} : vector<32x128xbf16> to vector<32x16xbf16>
    %c0_3 = arith.constant 0 : index
    %c0_4 = arith.constant 0 : index
    %10 = vector.load %arg21[%c0_3, %c0_4] : memref<128x64xbf16, #tpu.memory_space<vmem>>, vector<16x64xbf16>
    %cst_5 = arith.constant dense<0.000000e+00> : vector<32x64xf32>
    %11 = tpu.matmul %9, %10, %cst_5 {dimension_numbers = #tpu.dot_dimension_numbers<[1], [0], [0], [1], [0, 0, 1, 1], [], []>} : vector<32x16xbf16>, vector<16x64xbf16>, vector<32x64xf32> -> vector<32x64xf32>
    %cst_6 = arith.constant dense<0xFF800000> : vector<32xf32>
    %12 = vector.multi_reduction <maximumf>, %11, %cst_6 [1] : vector<32x64xf32> to vector<32xf32>
    %13 = vector.shape_cast %12 : vector<32xf32> to vector<32x1xf32>
    %14 = vector.broadcast %13 : vector<32x1xf32> to vector<32x64xf32>
    %15 = arith.subf %11, %14 : vector<32x64xf32>
    %16 = math.exp %15 : vector<32x64xf32>
    %cst_7 = arith.constant dense<0.000000e+00> : vector<32xf32>
    %17 = vector.multi_reduction <add>, %16, %cst_7 [1] : vector<32x64xf32> to vector<32xf32>
    %18 = vector.shape_cast %17 : vector<32xf32> to vector<32x1xf32>
    %19 = tpu.reciprocal %18 {approx = true} : vector<32x1xf32> -> vector<32x1xf32>
    %20 = vector.broadcast %19 : vector<32x1xf32> to vector<32x64xf32>
    %21 = arith.mulf %16, %20 : vector<32x64xf32>
    %22 = arith.truncf %21 : vector<32x64xf32> to vector<32x64xbf16>
    %23 = vector.extract_strided_slice %7 {offsets = [0, 0], sizes = [64, 16], strides = [1, 1]} : vector<64x128xbf16> to vector<64x16xbf16>
    %cst_8 = arith.constant dense<0.000000e+00> : vector<32x16xf32>
    %24 = tpu.matmul %22, %23, %cst_8 {dimension_numbers = #tpu.dot_dimension_numbers<[1], [0], [0], [1], [0, 0, 1, 1], [], []>} : vector<32x64xbf16>, vector<64x16xbf16>, vector<32x16xf32> -> vector<32x16xf32>
    %25 = arith.truncf %24 : vector<32x16xf32> to vector<32x16xbf16>
    %c0_9 = arith.constant 0 : index
    %c0_10 = arith.constant 0 : index
    %26 = vector.load %arg9[%c0_9, %c0_10] : memref<128x128xbf16, #tpu.memory_space<vmem>>, vector<16x128xbf16>
    %cst_11 = arith.constant dense<0.000000e+00> : vector<32x128xf32>
    %27 = tpu.matmul %25, %26, %cst_11 {dimension_numbers = #tpu.dot_dimension_numbers<[1], [0], [0], [1], [0, 0, 1, 1], [], []>} : vector<32x16xbf16>, vector<16x128xbf16>, vector<32x128xf32> -> vector<32x128xf32>
    %28 = arith.addf %8, %27 : vector<32x128xf32>
    %29 = vector.extract_strided_slice %6 {offsets = [0, 16], sizes = [32, 16], strides = [1, 1]} : vector<32x128xbf16> to vector<32x16xbf16>
    %c16 = arith.constant 16 : index
    %c0_12 = arith.constant 0 : index
    %30 = vector.load %arg21[%c16, %c0_12] : memref<128x64xbf16, #tpu.memory_space<vmem>>, vector<16x64xbf16>
    %cst_13 = arith.constant dense<0.000000e+00> : vector<32x64xf32>
    %31 = tpu.matmul %29, %30, %cst_13 {dimension_numbers = #tpu.dot_dimension_numbers<[1], [0], [0], [1], [0, 0, 1, 1], [], []>} : vector<32x16xbf16>, vector<16x64xbf16>, vector<32x64xf32> -> vector<32x64xf32>
    %cst_14 = arith.constant dense<0xFF800000> : vector<32xf32>
    %32 = vector.multi_reduction <maximumf>, %31, %cst_14 [1] : vector<32x64xf32> to vector<32xf32>
    %33 = vector.shape_cast %32 : vector<32xf32> to vector<32x1xf32>
    %34 = vector.broadcast %33 : vector<32x1xf32> to vector<32x64xf32>
    %35 = arith.subf %31, %34 : vector<32x64xf32>
    %36 = math.exp %35 : vector<32x64xf32>
    %cst_15 = arith.constant dense<0.000000e+00> : vector<32xf32>
    %37 = vector.multi_reduction <add>, %36, %cst_15 [1] : vector<32x64xf32> to vector<32xf32>
    %38 = vector.shape_cast %37 : vector<32xf32> to vector<32x1xf32>
    %39 = tpu.reciprocal %38 {approx = true} : vector<32x1xf32> -> vector<32x1xf32>
    %40 = vector.broadcast %39 : vector<32x1xf32> to vector<32x64xf32>
    %41 = arith.mulf %36, %40 : vector<32x64xf32>
    %42 = arith.truncf %41 : vector<32x64xf32> to vector<32x64xbf16>
    %43 = vector.extract_strided_slice %7 {offsets = [0, 16], sizes = [64, 16], strides = [1, 1]} : vector<64x128xbf16> to vector<64x16xbf16>
    %cst_16 = arith.constant dense<0.000000e+00> : vector<32x16xf32>
    %44 = tpu.matmul %42, %43, %cst_16 {dimension_numbers = #tpu.dot_dimension_numbers<[1], [0], [0], [1], [0, 0, 1, 1], [], []>} : vector<32x64xbf16>, vector<64x16xbf16>, vector<32x16xf32> -> vector<32x16xf32>
    %45 = arith.truncf %44 : vector<32x16xf32> to vector<32x16xbf16>
    %c16_17 = arith.constant 16 : index
    %c0_18 = arith.constant 0 : index
    %46 = vector.load %arg9[%c16_17, %c0_18] : memref<128x128xbf16, #tpu.memory_space<vmem>>, vector<16x128xbf16>
    %cst_19 = arith.constant dense<0.000000e+00> : vector<32x128xf32>
    %47 = tpu.matmul %45, %46, %cst_19 {dimension_numbers = #tpu.dot_dimension_numbers<[1], [0], [0], [1], [0, 0, 1, 1], [], []>} : vector<32x16xbf16>, vector<16x128xbf16>, vector<32x128xf32> -> vector<32x128xf32>
    %48 = arith.addf %28, %47 : vector<32x128xf32>
    %49 = vector.extract_strided_slice %6 {offsets = [0, 32], sizes = [32, 16], strides = [1, 1]} : vector<32x128xbf16> to vector<32x16xbf16>
    %c32 = arith.constant 32 : index
    %c0_20 = arith.constant 0 : index
    %50 = vector.load %arg21[%c32, %c0_20] : memref<128x64xbf16, #tpu.memory_space<vmem>>, vector<16x64xbf16>
    %cst_21 = arith.constant dense<0.000000e+00> : vector<32x64xf32>
    %51 = tpu.matmul %49, %50, %cst_21 {dimension_numbers = #tpu.dot_dimension_numbers<[1], [0], [0], [1], [0, 0, 1, 1], [], []>} : vector<32x16xbf16>, vector<16x64xbf16>, vector<32x64xf32> -> vector<32x64xf32>
    %cst_22 = arith.constant dense<0xFF800000> : vector<32xf32>
    %52 = vector.multi_reduction <maximumf>, %51, %cst_22 [1] : vector<32x64xf32> to vector<32xf32>
    %53 = vector.shape_cast %52 : vector<32xf32> to vector<32x1xf32>
    %54 = vector.broadcast %53 : vector<32x1xf32> to vector<32x64xf32>
    %55 = arith.subf %51, %54 : vector<32x64xf32>
    %56 = math.exp %55 : vector<32x64xf32>
    %cst_23 = arith.constant dense<0.000000e+00> : vector<32xf32>
    %57 = vector.multi_reduction <add>, %56, %cst_23 [1] : vector<32x64xf32> to vector<32xf32>
    %58 = vector.shape_cast %57 : vector<32xf32> to vector<32x1xf32>
    %59 = tpu.reciprocal %58 {approx = true} : vector<32x1xf32> -> vector<32x1xf32>
    %60 = vector.broadcast %59 : vector<32x1xf32> to vector<32x64xf32>
    %61 = arith.mulf %56, %60 : vector<32x64xf32>
    %62 = arith.truncf %61 : vector<32x64xf32> to vector<32x64xbf16>
    %63 = vector.extract_strided_slice %7 {offsets = [0, 32], sizes = [64, 16], strides = [1, 1]} : vector<64x128xbf16> to vector<64x16xbf16>
    %cst_24 = arith.constant dense<0.000000e+00> : vector<32x16xf32>
    %64 = tpu.matmul %62, %63, %cst_24 {dimension_numbers = #tpu.dot_dimension_numbers<[1], [0], [0], [1], [0, 0, 1, 1], [], []>} : vector<32x64xbf16>, vector<64x16xbf16>, vector<32x16xf32> -> vector<32x16xf32>
    %65 = arith.truncf %64 : vector<32x16xf32> to vector<32x16xbf16>
    %c32_25 = arith.constant 32 : index
    %c0_26 = arith.constant 0 : index
    %66 = vector.load %arg9[%c32_25, %c0_26] : memref<128x128xbf16, #tpu.memory_space<vmem>>, vector<16x128xbf16>
    %cst_27 = arith.constant dense<0.000000e+00> : vector<32x128xf32>
    %67 = tpu.matmul %65, %66, %cst_27 {dimension_numbers = #tpu.dot_dimension_numbers<[1], [0], [0], [1], [0, 0, 1, 1], [], []>} : vector<32x16xbf16>, vector<16x128xbf16>, vector<32x128xf32> -> vector<32x128xf32>
    %68 = arith.addf %48, %67 : vector<32x128xf32>
    %69 = vector.extract_strided_slice %6 {offsets = [0, 48], sizes = [32, 16], strides = [1, 1]} : vector<32x128xbf16> to vector<32x16xbf16>
    %c48 = arith.constant 48 : index
    %c0_28 = arith.constant 0 : index
    %70 = vector.load %arg21[%c48, %c0_28] : memref<128x64xbf16, #tpu.memory_space<vmem>>, vector<16x64xbf16>
    %cst_29 = arith.constant dense<0.000000e+00> : vector<32x64xf32>
    %71 = tpu.matmul %69, %70, %cst_29 {dimension_numbers = #tpu.dot_dimension_numbers<[1], [0], [0], [1], [0, 0, 1, 1], [], []>} : vector<32x16xbf16>, vector<16x64xbf16>, vector<32x64xf32> -> vector<32x64xf32>
    %cst_30 = arith.constant dense<0xFF800000> : vector<32xf32>
    %72 = vector.multi_reduction <maximumf>, %71, %cst_30 [1] : vector<32x64xf32> to vector<32xf32>
    %73 = vector.shape_cast %72 : vector<32xf32> to vector<32x1xf32>
    %74 = vector.broadcast %73 : vector<32x1xf32> to vector<32x64xf32>
    %75 = arith.subf %71, %74 : vector<32x64xf32>
    %76 = math.exp %75 : vector<32x64xf32>
    %cst_31 = arith.constant dense<0.000000e+00> : vector<32xf32>
    %77 = vector.multi_reduction <add>, %76, %cst_31 [1] : vector<32x64xf32> to vector<32xf32>
    %78 = vector.shape_cast %77 : vector<32xf32> to vector<32x1xf32>
    %79 = tpu.reciprocal %78 {approx = true} : vector<32x1xf32> -> vector<32x1xf32>
    %80 = vector.broadcast %79 : vector<32x1xf32> to vector<32x64xf32>
    %81 = arith.mulf %76, %80 : vector<32x64xf32>
    %82 = arith.truncf %81 : vector<32x64xf32> to vector<32x64xbf16>
    %83 = vector.extract_strided_slice %7 {offsets = [0, 48], sizes = [64, 16], strides = [1, 1]} : vector<64x128xbf16> to vector<64x16xbf16>
    %cst_32 = arith.constant dense<0.000000e+00> : vector<32x16xf32>
    %84 = tpu.matmul %82, %83, %cst_32 {dimension_numbers = #tpu.dot_dimension_numbers<[1], [0], [0], [1], [0, 0, 1, 1], [], []>} : vector<32x64xbf16>, vector<64x16xbf16>, vector<32x16xf32> -> vector<32x16xf32>
    %85 = arith.truncf %84 : vector<32x16xf32> to vector<32x16xbf16>
    %c48_33 = arith.constant 48 : index
    %c0_34 = arith.constant 0 : index
    %86 = vector.load %arg9[%c48_33, %c0_34] : memref<128x128xbf16, #tpu.memory_space<vmem>>, vector<16x128xbf16>
    %cst_35 = arith.constant dense<0.000000e+00> : vector<32x128xf32>
    %87 = tpu.matmul %85, %86, %cst_35 {dimension_numbers = #tpu.dot_dimension_numbers<[1], [0], [0], [1], [0, 0, 1, 1], [], []>} : vector<32x16xbf16>, vector<16x128xbf16>, vector<32x128xf32> -> vector<32x128xf32>
    %88 = arith.addf %68, %87 : vector<32x128xf32>
    %89 = vector.extract_strided_slice %6 {offsets = [0, 64], sizes = [32, 16], strides = [1, 1]} : vector<32x128xbf16> to vector<32x16xbf16>
    %c64 = arith.constant 64 : index
    %c0_36 = arith.constant 0 : index
    %90 = vector.load %arg21[%c64, %c0_36] : memref<128x64xbf16, #tpu.memory_space<vmem>>, vector<16x64xbf16>
    %cst_37 = arith.constant dense<0.000000e+00> : vector<32x64xf32>
    %91 = tpu.matmul %89, %90, %cst_37 {dimension_numbers = #tpu.dot_dimension_numbers<[1], [0], [0], [1], [0, 0, 1, 1], [], []>} : vector<32x16xbf16>, vector<16x64xbf16>, vector<32x64xf32> -> vector<32x64xf32>
    %cst_38 = arith.constant dense<0xFF800000> : vector<32xf32>
    %92 = vector.multi_reduction <maximumf>, %91, %cst_38 [1] : vector<32x64xf32> to vector<32xf32>
    %93 = vector.shape_cast %92 : vector<32xf32> to vector<32x1xf32>
    %94 = vector.broadcast %93 : vector<32x1xf32> to vector<32x64xf32>
    %95 = arith.subf %91, %94 : vector<32x64xf32>
    %96 = math.exp %95 : vector<32x64xf32>
    %cst_39 = arith.constant dense<0.000000e+00> : vector<32xf32>
    %97 = vector.multi_reduction <add>, %96, %cst_39 [1] : vector<32x64xf32> to vector<32xf32>
    %98 = vector.shape_cast %97 : vector<32xf32> to vector<32x1xf32>
    %99 = tpu.reciprocal %98 {approx = true} : vector<32x1xf32> -> vector<32x1xf32>
    %100 = vector.broadcast %99 : vector<32x1xf32> to vector<32x64xf32>
    %101 = arith.mulf %96, %100 : vector<32x64xf32>
    %102 = arith.truncf %101 : vector<32x64xf32> to vector<32x64xbf16>
    %103 = vector.extract_strided_slice %7 {offsets = [0, 64], sizes = [64, 16], strides = [1, 1]} : vector<64x128xbf16> to vector<64x16xbf16>
    %cst_40 = arith.constant dense<0.000000e+00> : vector<32x16xf32>
    %104 = tpu.matmul %102, %103, %cst_40 {dimension_numbers = #tpu.dot_dimension_numbers<[1], [0], [0], [1], [0, 0, 1, 1], [], []>} : vector<32x64xbf16>, vector<64x16xbf16>, vector<32x16xf32> -> vector<32x16xf32>
    %105 = arith.truncf %104 : vector<32x16xf32> to vector<32x16xbf16>
    %c64_41 = arith.constant 64 : index
    %c0_42 = arith.constant 0 : index
    %106 = vector.load %arg9[%c64_41, %c0_42] : memref<128x128xbf16, #tpu.memory_space<vmem>>, vector<16x128xbf16>
    %cst_43 = arith.constant dense<0.000000e+00> : vector<32x128xf32>
    %107 = tpu.matmul %105, %106, %cst_43 {dimension_numbers = #tpu.dot_dimension_numbers<[1], [0], [0], [1], [0, 0, 1, 1], [], []>} : vector<32x16xbf16>, vector<16x128xbf16>, vector<32x128xf32> -> vector<32x128xf32>
    %108 = arith.addf %88, %107 : vector<32x128xf32>
    %109 = vector.extract_strided_slice %6 {offsets = [0, 80], sizes = [32, 16], strides = [1, 1]} : vector<32x128xbf16> to vector<32x16xbf16>
    %c80 = arith.constant 80 : index
    %c0_44 = arith.constant 0 : index
    %110 = vector.load %arg21[%c80, %c0_44] : memref<128x64xbf16, #tpu.memory_space<vmem>>, vector<16x64xbf16>
    %cst_45 = arith.constant dense<0.000000e+00> : vector<32x64xf32>
    %111 = tpu.matmul %109, %110, %cst_45 {dimension_numbers = #tpu.dot_dimension_numbers<[1], [0], [0], [1], [0, 0, 1, 1], [], []>} : vector<32x16xbf16>, vector<16x64xbf16>, vector<32x64xf32> -> vector<32x64xf32>
    %cst_46 = arith.constant dense<0xFF800000> : vector<32xf32>
    %112 = vector.multi_reduction <maximumf>, %111, %cst_46 [1] : vector<32x64xf32> to vector<32xf32>
    %113 = vector.shape_cast %112 : vector<32xf32> to vector<32x1xf32>
    %114 = vector.broadcast %113 : vector<32x1xf32> to vector<32x64xf32>
    %115 = arith.subf %111, %114 : vector<32x64xf32>
    %116 = math.exp %115 : vector<32x64xf32>
    %cst_47 = arith.constant dense<0.000000e+00> : vector<32xf32>
    %117 = vector.multi_reduction <add>, %116, %cst_47 [1] : vector<32x64xf32> to vector<32xf32>
    %118 = vector.shape_cast %117 : vector<32xf32> to vector<32x1xf32>
    %119 = tpu.reciprocal %118 {approx = true} : vector<32x1xf32> -> vector<32x1xf32>
    %120 = vector.broadcast %119 : vector<32x1xf32> to vector<32x64xf32>
    %121 = arith.mulf %116, %120 : vector<32x64xf32>
    %122 = arith.truncf %121 : vector<32x64xf32> to vector<32x64xbf16>
    %123 = vector.extract_strided_slice %7 {offsets = [0, 80], sizes = [64, 16], strides = [1, 1]} : vector<64x128xbf16> to vector<64x16xbf16>
    %cst_48 = arith.constant dense<0.000000e+00> : vector<32x16xf32>
    %124 = tpu.matmul %122, %123, %cst_48 {dimension_numbers = #tpu.dot_dimension_numbers<[1], [0], [0], [1], [0, 0, 1, 1], [], []>} : vector<32x64xbf16>, vector<64x16xbf16>, vector<32x16xf32> -> vector<32x16xf32>
    %125 = arith.truncf %124 : vector<32x16xf32> to vector<32x16xbf16>
    %c80_49 = arith.constant 80 : index
    %c0_50 = arith.constant 0 : index
    %126 = vector.load %arg9[%c80_49, %c0_50] : memref<128x128xbf16, #tpu.memory_space<vmem>>, vector<16x128xbf16>
    %cst_51 = arith.constant dense<0.000000e+00> : vector<32x128xf32>
    %127 = tpu.matmul %125, %126, %cst_51 {dimension_numbers = #tpu.dot_dimension_numbers<[1], [0], [0], [1], [0, 0, 1, 1], [], []>} : vector<32x16xbf16>, vector<16x128xbf16>, vector<32x128xf32> -> vector<32x128xf32>
    %128 = arith.addf %108, %127 : vector<32x128xf32>
    %129 = vector.extract_strided_slice %6 {offsets = [0, 96], sizes = [32, 16], strides = [1, 1]} : vector<32x128xbf16> to vector<32x16xbf16>
    %c96 = arith.constant 96 : index
    %c0_52 = arith.constant 0 : index
    %130 = vector.load %arg21[%c96, %c0_52] : memref<128x64xbf16, #tpu.memory_space<vmem>>, vector<16x64xbf16>
    %cst_53 = arith.constant dense<0.000000e+00> : vector<32x64xf32>
    %131 = tpu.matmul %129, %130, %cst_53 {dimension_numbers = #tpu.dot_dimension_numbers<[1], [0], [0], [1], [0, 0, 1, 1], [], []>} : vector<32x16xbf16>, vector<16x64xbf16>, vector<32x64xf32> -> vector<32x64xf32>
    %cst_54 = arith.constant dense<0xFF800000> : vector<32xf32>
    %132 = vector.multi_reduction <maximumf>, %131, %cst_54 [1] : vector<32x64xf32> to vector<32xf32>
    %133 = vector.shape_cast %132 : vector<32xf32> to vector<32x1xf32>
    %134 = vector.broadcast %133 : vector<32x1xf32> to vector<32x64xf32>
    %135 = arith.subf %131, %134 : vector<32x64xf32>
    %136 = math.exp %135 : vector<32x64xf32>
    %cst_55 = arith.constant dense<0.000000e+00> : vector<32xf32>
    %137 = vector.multi_reduction <add>, %136, %cst_55 [1] : vector<32x64xf32> to vector<32xf32>
    %138 = vector.shape_cast %137 : vector<32xf32> to vector<32x1xf32>
    %139 = tpu.reciprocal %138 {approx = true} : vector<32x1xf32> -> vector<32x1xf32>
    %140 = vector.broadcast %139 : vector<32x1xf32> to vector<32x64xf32>
    %141 = arith.mulf %136, %140 : vector<32x64xf32>
    %142 = arith.truncf %141 : vector<32x64xf32> to vector<32x64xbf16>
    %143 = vector.extract_strided_slice %7 {offsets = [0, 96], sizes = [64, 16], strides = [1, 1]} : vector<64x128xbf16> to vector<64x16xbf16>
    %cst_56 = arith.constant dense<0.000000e+00> : vector<32x16xf32>
    %144 = tpu.matmul %142, %143, %cst_56 {dimension_numbers = #tpu.dot_dimension_numbers<[1], [0], [0], [1], [0, 0, 1, 1], [], []>} : vector<32x64xbf16>, vector<64x16xbf16>, vector<32x16xf32> -> vector<32x16xf32>
    %145 = arith.truncf %144 : vector<32x16xf32> to vector<32x16xbf16>
    %c96_57 = arith.constant 96 : index
    %c0_58 = arith.constant 0 : index
    %146 = vector.load %arg9[%c96_57, %c0_58] : memref<128x128xbf16, #tpu.memory_space<vmem>>, vector<16x128xbf16>
    %cst_59 = arith.constant dense<0.000000e+00> : vector<32x128xf32>
    %147 = tpu.matmul %145, %146, %cst_59 {dimension_numbers = #tpu.dot_dimension_numbers<[1], [0], [0], [1], [0, 0, 1, 1], [], []>} : vector<32x16xbf16>, vector<16x128xbf16>, vector<32x128xf32> -> vector<32x128xf32>
    %148 = arith.addf %128, %147 : vector<32x128xf32>
    %149 = vector.extract_strided_slice %6 {offsets = [0, 112], sizes = [32, 16], strides = [1, 1]} : vector<32x128xbf16> to vector<32x16xbf16>
    %c112 = arith.constant 112 : index
    %c0_60 = arith.constant 0 : index
    %150 = vector.load %arg21[%c112, %c0_60] : memref<128x64xbf16, #tpu.memory_space<vmem>>, vector<16x64xbf16>
    %cst_61 = arith.constant dense<0.000000e+00> : vector<32x64xf32>
    %151 = tpu.matmul %149, %150, %cst_61 {dimension_numbers = #tpu.dot_dimension_numbers<[1], [0], [0], [1], [0, 0, 1, 1], [], []>} : vector<32x16xbf16>, vector<16x64xbf16>, vector<32x64xf32> -> vector<32x64xf32>
    %cst_62 = arith.constant dense<0xFF800000> : vector<32xf32>
    %152 = vector.multi_reduction <maximumf>, %151, %cst_62 [1] : vector<32x64xf32> to vector<32xf32>
    %153 = vector.shape_cast %152 : vector<32xf32> to vector<32x1xf32>
    %154 = vector.broadcast %153 : vector<32x1xf32> to vector<32x64xf32>
    %155 = arith.subf %151, %154 : vector<32x64xf32>
    %156 = math.exp %155 : vector<32x64xf32>
    %cst_63 = arith.constant dense<0.000000e+00> : vector<32xf32>
    %157 = vector.multi_reduction <add>, %156, %cst_63 [1] : vector<32x64xf32> to vector<32xf32>
    %158 = vector.shape_cast %157 : vector<32xf32> to vector<32x1xf32>
    %159 = tpu.reciprocal %158 {approx = true} : vector<32x1xf32> -> vector<32x1xf32>
    %160 = vector.broadcast %159 : vector<32x1xf32> to vector<32x64xf32>
    %161 = arith.mulf %156, %160 : vector<32x64xf32>
    %162 = arith.truncf %161 : vector<32x64xf32> to vector<32x64xbf16>
    %163 = vector.extract_strided_slice %7 {offsets = [0, 112], sizes = [64, 16], strides = [1, 1]} : vector<64x128xbf16> to vector<64x16xbf16>
    %cst_64 = arith.constant dense<0.000000e+00> : vector<32x16xf32>
    %164 = tpu.matmul %162, %163, %cst_64 {dimension_numbers = #tpu.dot_dimension_numbers<[1], [0], [0], [1], [0, 0, 1, 1], [], []>} : vector<32x64xbf16>, vector<64x16xbf16>, vector<32x16xf32> -> vector<32x16xf32>
    %165 = arith.truncf %164 : vector<32x16xf32> to vector<32x16xbf16>
    %c112_65 = arith.constant 112 : index
    %c0_66 = arith.constant 0 : index
    %166 = vector.load %arg9[%c112_65, %c0_66] : memref<128x128xbf16, #tpu.memory_space<vmem>>, vector<16x128xbf16>
    %cst_67 = arith.constant dense<0.000000e+00> : vector<32x128xf32>
    %167 = tpu.matmul %165, %166, %cst_67 {dimension_numbers = #tpu.dot_dimension_numbers<[1], [0], [0], [1], [0, 0, 1, 1], [], []>} : vector<32x16xbf16>, vector<16x128xbf16>, vector<32x128xf32> -> vector<32x128xf32>
    %168 = arith.addf %148, %167 : vector<32x128xf32>
    %c0_68 = arith.constant 0 : index
    %c0_69 = arith.constant 0 : index
    %169 = vector.load %arg10[%c0_68, %c0_69] : memref<1x128xf32, #tpu.memory_space<vmem>>, vector<1x128xf32>
    %170 = vector.broadcast %169 : vector<1x128xf32> to vector<32x128xf32>
    %171 = arith.addf %168, %170 : vector<32x128xf32>
    %c0_70 = arith.constant 0 : index
    %c0_71 = arith.constant 0 : index
    %c0_72 = arith.constant 0 : index
    %172 = vector.load %arg2[%c0_70, %c0_71, %c0_72] : memref<1x32x128xf32, #tpu.memory_space<vmem>>, vector<1x32x128xf32>
    %173 = vector.shape_cast %172 : vector<1x32x128xf32> to vector<32x128xf32>
    %174 = arith.addf %173, %171 : vector<32x128xf32>
    %c0_73 = arith.constant 0 : index
    %c0_74 = arith.constant 0 : index
    %175 = vector.load %arg15[%c0_73, %c0_74] : memref<1x128xf32, #tpu.memory_space<vmem>>, vector<1x128xf32>
    %c0_75 = arith.constant 0 : index
    %c0_76 = arith.constant 0 : index
    %176 = vector.load %arg16[%c0_75, %c0_76] : memref<1x128xf32, #tpu.memory_space<vmem>>, vector<1x128xf32>
    %cst_77 = arith.constant dense<0.000000e+00> : vector<32xf32>
    %177 = vector.multi_reduction <add>, %174, %cst_77 [1] : vector<32x128xf32> to vector<32xf32>
    %178 = vector.shape_cast %177 : vector<32xf32> to vector<32x1xf32>
    %cst_78 = arith.constant 7.812500e-03 : f32
    %179 = vector.broadcast %cst_78 : f32 to vector<32x1xf32>
    %180 = arith.mulf %178, %179 : vector<32x1xf32>
    %181 = vector.broadcast %180 : vector<32x1xf32> to vector<32x128xf32>
    %182 = arith.subf %174, %181 : vector<32x128xf32>
    %183 = arith.mulf %182, %182 : vector<32x128xf32>
    %cst_79 = arith.constant dense<0.000000e+00> : vector<32xf32>
    %184 = vector.multi_reduction <add>, %183, %cst_79 [1] : vector<32x128xf32> to vector<32xf32>
    %185 = vector.shape_cast %184 : vector<32xf32> to vector<32x1xf32>
    %cst_80 = arith.constant 7.812500e-03 : f32
    %186 = vector.broadcast %cst_80 : f32 to vector<32x1xf32>
    %187 = arith.mulf %185, %186 : vector<32x1xf32>
    %cst_81 = arith.constant 9.99999974E-6 : f32
    %188 = vector.broadcast %cst_81 : f32 to vector<32x1xf32>
    %189 = arith.addf %187, %188 : vector<32x1xf32>
    %190 = math.rsqrt %189 : vector<32x1xf32>
    %191 = vector.broadcast %190 : vector<32x1xf32> to vector<32x128xf32>
    %192 = arith.mulf %182, %191 : vector<32x128xf32>
    %193 = vector.broadcast %175 : vector<1x128xf32> to vector<32x128xf32>
    %194 = arith.mulf %192, %193 : vector<32x128xf32>
    %195 = vector.broadcast %176 : vector<1x128xf32> to vector<32x128xf32>
    %196 = arith.addf %194, %195 : vector<32x128xf32>
    %197 = arith.truncf %196 : vector<32x128xf32> to vector<32x128xbf16>
    %c0_82 = arith.constant 0 : index
    %c0_83 = arith.constant 0 : index
    %198 = vector.load %arg11[%c0_82, %c0_83] : memref<128x256xbf16, #tpu.memory_space<vmem>>, vector<128x256xbf16>
    %cst_84 = arith.constant dense<0.000000e+00> : vector<32x256xf32>
    %199 = tpu.matmul %197, %198, %cst_84 {dimension_numbers = #tpu.dot_dimension_numbers<[1], [0], [0], [1], [0, 0, 1, 1], [], []>} : vector<32x128xbf16>, vector<128x256xbf16>, vector<32x256xf32> -> vector<32x256xf32>
    %c0_85 = arith.constant 0 : index
    %c0_86 = arith.constant 0 : index
    %200 = vector.load %arg12[%c0_85, %c0_86] : memref<1x256xf32, #tpu.memory_space<vmem>>, vector<1x256xf32>
    %201 = vector.broadcast %200 : vector<1x256xf32> to vector<32x256xf32>
    %202 = arith.addf %199, %201 : vector<32x256xf32>
    %cst_87 = arith.constant 5.000000e-01 : f32
    %203 = vector.broadcast %cst_87 : f32 to vector<32x256xf32>
    %204 = arith.mulf %203, %202 : vector<32x256xf32>
    %cst_88 = arith.constant 4.471500e-02 : f32
    %205 = vector.broadcast %cst_88 : f32 to vector<32x256xf32>
    %206 = arith.mulf %205, %202 : vector<32x256xf32>
    %207 = arith.mulf %206, %202 : vector<32x256xf32>
    %208 = arith.mulf %207, %202 : vector<32x256xf32>
    %209 = arith.addf %202, %208 : vector<32x256xf32>
    %cst_89 = arith.constant 0.797884583 : f32
    %210 = vector.broadcast %cst_89 : f32 to vector<32x256xf32>
    %211 = arith.mulf %210, %209 : vector<32x256xf32>
    %212 = math.tanh %211 : vector<32x256xf32>
    %cst_90 = arith.constant 1.000000e+00 : f32
    %213 = vector.broadcast %cst_90 : f32 to vector<32x256xf32>
    %214 = arith.addf %213, %212 : vector<32x256xf32>
    %215 = arith.mulf %204, %214 : vector<32x256xf32>
    %216 = arith.truncf %215 : vector<32x256xf32> to vector<32x256xbf16>
    %c0_91 = arith.constant 0 : index
    %c0_92 = arith.constant 0 : index
    %217 = vector.load %arg13[%c0_91, %c0_92] : memref<256x128xbf16, #tpu.memory_space<vmem>>, vector<256x128xbf16>
    %cst_93 = arith.constant dense<0.000000e+00> : vector<32x128xf32>
    %218 = tpu.matmul %216, %217, %cst_93 {dimension_numbers = #tpu.dot_dimension_numbers<[1], [0], [0], [1], [0, 0, 1, 1], [], []>} : vector<32x256xbf16>, vector<256x128xbf16>, vector<32x128xf32> -> vector<32x128xf32>
    %c0_94 = arith.constant 0 : index
    %c0_95 = arith.constant 0 : index
    %219 = vector.load %arg14[%c0_94, %c0_95] : memref<1x128xf32, #tpu.memory_space<vmem>>, vector<1x128xf32>
    %220 = vector.broadcast %219 : vector<1x128xf32> to vector<32x128xf32>
    %221 = arith.addf %218, %220 : vector<32x128xf32>
    %222 = arith.addf %196, %221 : vector<32x128xf32>
    %c0_96 = arith.constant 0 : index
    %c0_97 = arith.constant 0 : index
    %223 = vector.load %arg17[%c0_96, %c0_97] : memref<1x128xf32, #tpu.memory_space<vmem>>, vector<1x128xf32>
    %c0_98 = arith.constant 0 : index
    %c0_99 = arith.constant 0 : index
    %224 = vector.load %arg18[%c0_98, %c0_99] : memref<1x128xf32, #tpu.memory_space<vmem>>, vector<1x128xf32>
    %cst_100 = arith.constant dense<0.000000e+00> : vector<32xf32>
    %225 = vector.multi_reduction <add>, %222, %cst_100 [1] : vector<32x128xf32> to vector<32xf32>
    %226 = vector.shape_cast %225 : vector<32xf32> to vector<32x1xf32>
    %cst_101 = arith.constant 7.812500e-03 : f32
    %227 = vector.broadcast %cst_101 : f32 to vector<32x1xf32>
    %228 = arith.mulf %226, %227 : vector<32x1xf32>
    %229 = vector.broadcast %228 : vector<32x1xf32> to vector<32x128xf32>
    %230 = arith.subf %222, %229 : vector<32x128xf32>
    %231 = arith.mulf %230, %230 : vector<32x128xf32>
    %cst_102 = arith.constant dense<0.000000e+00> : vector<32xf32>
    %232 = vector.multi_reduction <add>, %231, %cst_102 [1] : vector<32x128xf32> to vector<32xf32>
    %233 = vector.shape_cast %232 : vector<32xf32> to vector<32x1xf32>
    %cst_103 = arith.constant 7.812500e-03 : f32
    %234 = vector.broadcast %cst_103 : f32 to vector<32x1xf32>
    %235 = arith.mulf %233, %234 : vector<32x1xf32>
    %cst_104 = arith.constant 9.99999974E-6 : f32
    %236 = vector.broadcast %cst_104 : f32 to vector<32x1xf32>
    %237 = arith.addf %235, %236 : vector<32x1xf32>
    %238 = math.rsqrt %237 : vector<32x1xf32>
    %239 = vector.broadcast %238 : vector<32x1xf32> to vector<32x128xf32>
    %240 = arith.mulf %230, %239 : vector<32x128xf32>
    %241 = vector.broadcast %223 : vector<1x128xf32> to vector<32x128xf32>
    %242 = arith.mulf %240, %241 : vector<32x128xf32>
    %243 = vector.broadcast %224 : vector<1x128xf32> to vector<32x128xf32>
    %244 = arith.addf %242, %243 : vector<32x128xf32>
    %c0_105 = arith.constant 0 : index
    %c0_106 = arith.constant 0 : index
    %c0_107 = arith.constant 0 : index
    %245 = vector.load %arg19[%c0_105, %c0_106, %c0_107] : memref<1x32x128xf32, #tpu.memory_space<vmem>>, vector<1x32x128xf32>
    %246 = vector.shape_cast %245 : vector<1x32x128xf32> to vector<32x128xf32>
    %247 = vector.shape_cast %244 : vector<32x128xf32> to vector<1x32x128xf32>
    tpu.vector_store %arg19[%c0_105, %c0_106, %c0_107], %247 {strides = array<i32>} : memref<1x32x128xf32, #tpu.memory_space<vmem>>, vector<1x32x128xf32>,
    return
  }
  func.func @transform_0(%arg0: i32, %arg1: i32) -> (i32, i32, i32) {
    %c0_i32 = arith.constant 0 : i32
    %c0_i32_0 = arith.constant 0 : i32
    return %arg0, %arg1, %c0_i32 : i32, i32, i32
  }
  func.func @transform_1(%arg0: i32, %arg1: i32) -> (i32, i32, i32) {
    %c0_i32 = arith.constant 0 : i32
    %c0_i32_0 = arith.constant 0 : i32
    %c0_i32_1 = arith.constant 0 : i32
    return %arg0, %c0_i32, %c0_i32_0 : i32, i32, i32
  }
  func.func @transform_2(%arg0: i32, %arg1: i32) -> (i32, i32) {
    %c0_i32 = arith.constant 0 : i32
    %c0_i32_0 = arith.constant 0 : i32
    %c0_i32_1 = arith.constant 0 : i32
    return %c0_i32, %c0_i32_0 : i32, i32
  }
  func.func @transform_3(%arg0: i32, %arg1: i32) -> (i32, i32) {
    %c0_i32 = arith.constant 0 : i32
    %c0_i32_0 = arith.constant 0 : i32
    %c0_i32_1 = arith.constant 0 : i32
    return %c0_i32, %c0_i32_0 : i32, i32
  }
  func.func @transform_4(%arg0: i32, %arg1: i32) -> (i32, i32) {
    %c0_i32 = arith.constant 0 : i32
    %c0_i32_0 = arith.constant 0 : i32
    %c0_i32_1 = arith.constant 0 : i32
    return %c0_i32, %c0_i32_0 : i32, i32
  }
  func.func @transform_5(%arg0: i32, %arg1: i32) -> (i32, i32) {
    %c0_i32 = arith.constant 0 : i32
    %c0_i32_0 = arith.constant 0 : i32
    %c0_i32_1 = arith.constant 0 : i32
    return %c0_i32, %c0_i32_0 : i32, i32
  }
  func.func @transform_6(%arg0: i32, %arg1: i32) -> (i32, i32) {
    %c0_i32 = arith.constant 0 : i32
    %c0_i32_0 = arith.constant 0 : i32
    %c0_i32_1 = arith.constant 0 : i32
    return %c0_i32, %c0_i32_0 : i32, i32
  }
  func.func @transform_7(%arg0: i32, %arg1: i32) -> (i32, i32) {
    %c0_i32 = arith.constant 0 : i32
    %c0_i32_0 = arith.constant 0 : i32
    %c0_i32_1 = arith.constant 0 : i32
    return %c0_i32, %c0_i32_0 : i32, i32
  }
  func.func @transform_8(%arg0: i32, %arg1: i32) -> (i32, i32) {
    %c0_i32 = arith.constant 0 : i32
    %c0_i32_0 = arith.constant 0 : i32
    %c0_i32_1 = arith.constant 0 : i32
    return %c0_i32, %c0_i32_0 : i32, i32
  }
  func.func @transform_9(%arg0: i32, %arg1: i32) -> (i32, i32) {
    %c0_i32 = arith.constant 0 : i32
    %c0_i32_0 = arith.constant 0 : i32
    %c0_i32_1 = arith.constant 0 : i32
    return %c0_i32, %c0_i32_0 : i32, i32
  }
  func.func @transform_10(%arg0: i32, %arg1: i32) -> (i32, i32) {
    %c0_i32 = arith.constant 0 : i32
    %c0_i32_0 = arith.constant 0 : i32
    %c0_i32_1 = arith.constant 0 : i32
    return %c0_i32, %c0_i32_0 : i32, i32
  }
  func.func @transform_11(%arg0: i32, %arg1: i32) -> (i32, i32) {
    %c0_i32 = arith.constant 0 : i32
    %c0_i32_0 = arith.constant 0 : i32
    %c0_i32_1 = arith.constant 0 : i32
    return %c0_i32, %c0_i32_0 : i32, i32
  }
  func.func @transform_12(%arg0: i32, %arg1: i32) -> (i32, i32) {
    %c0_i32 = arith.constant 0 : i32
    %c0_i32_0 = arith.constant 0 : i32
    %c0_i32_1 = arith.constant 0 : i32
    return %c0_i32, %c0_i32_0 : i32, i32
  }
  func.func @transform_13(%arg0: i32, %arg1: i32) -> (i32, i32) {
    %c0_i32 = arith.constant 0 : i32
    %c0_i32_0 = arith.constant 0 : i32
    %c0_i32_1 = arith.constant 0 : i32
    return %c0_i32, %c0_i32_0 : i32, i32
  }
  func.func @transform_14(%arg0: i32, %arg1: i32) -> (i32, i32) {
    %c0_i32 = arith.constant 0 : i32
    %c0_i32_0 = arith.constant 0 : i32
    %c0_i32_1 = arith.constant 0 : i32
    return %c0_i32, %c0_i32_0 : i32, i32
  }
  func.func @transform_15(%arg0: i32, %arg1: i32) -> (i32, i32) {
    %c0_i32 = arith.constant 0 : i32
    %c0_i32_0 = arith.constant 0 : i32
    %c0_i32_1 = arith.constant 0 : i32
    return %c0_i32, %c0_i32_0 : i32, i32
  }
  func.func @transform_16(%arg0: i32, %arg1: i32) -> (i32, i32) {
    %c0_i32 = arith.constant 0 : i32
    %c0_i32_0 = arith.constant 0 : i32
    %c0_i32_1 = arith.constant 0 : i32
    return %c0_i32, %c0_i32_0 : i32, i32
  }
  func.func @transform_17(%arg0: i32, %arg1: i32) -> (i32, i32, i32) {
    %c0_i32 = arith.constant 0 : i32
    %c0_i32_0 = arith.constant 0 : i32
    return %arg0, %arg1, %c0_i32 : i32, i32, i32
  }
}

</mosaic_0001>

<llo_original>
// kernel: tpu_custom_call.1
$region0: #{tpu_custom_call.1}
  #allocation0 [shape = 'u32[]', space=smem, size = 0x4, offset = 0x4, fixed_abs, tag = 'smem constant byte address 0x4 - core index']
  #allocation1 [shape = 'u32[72,128]{1,0:T(1,128)}', space=vmem, size = 0x9000, scoped, tag = 'internal scratch']
  #allocation2 [shape = 'bf16[64,128]{1,0:T(8,128)(2,1)}', space=vmem, size = 0x4000, scoped, tag = 'scratch operand']
  #allocation3 [shape = 'bf16[128,64]{1,0:T(8,128)(2,1)}', space=vmem, size = 0x8000, scoped, tag = 'scratch operand']
  #allocation4 [shape = 'bf16[64,128]{1,0:T(8,128)(2,1)}', space=vmem, size = 0x4000, scoped, tag = 'scratch operand']
  %s0 = inlined_call_operand.hbm [shape: f32[2,64,128], index: 0, kind: input, shape index: {}]
  %s1 = inlined_call_operand.hbm [shape: f32[2,64,128], index: 1, kind: input, shape index: {}]
  %s2 = inlined_call_operand.hbm [shape: f32[64,128], index: 2, kind: input, shape index: {}]
  %s3 = inlined_call_operand.hbm [shape: bf16[128,256], index: 3, kind: input, shape index: {}]
  %s4 = inlined_call_operand.vmem [shape: f32[1,256], index: 4, kind: input, shape index: {}]
  %s5 = inlined_call_operand.hbm [shape: bf16[128,128], index: 5, kind: input, shape index: {}]
  %s6 = inlined_call_operand.vmem [shape: f32[1,128], index: 6, kind: input, shape index: {}]
  %s7 = inlined_call_operand.hbm [shape: bf16[128,128], index: 7, kind: input, shape index: {}]
  %s8 = inlined_call_operand.vmem [shape: f32[1,128], index: 8, kind: input, shape index: {}]
  %s9 = inlined_call_operand.hbm [shape: bf16[128,256], index: 9, kind: input, shape index: {}]
  %s10 = inlined_call_operand.vmem [shape: f32[1,256], index: 10, kind: input, shape index: {}]
  %s11 = inlined_call_operand.hbm [shape: bf16[256,128], index: 11, kind: input, shape index: {}]
  %s12 = inlined_call_operand.vmem [shape: f32[1,128], index: 12, kind: input, shape index: {}]
  %s13 = inlined_call_operand.vmem [shape: f32[1,128], index: 13, kind: input, shape index: {}]
  %s14 = inlined_call_operand.vmem [shape: f32[1,128], index: 14, kind: input, shape index: {}]
  %s15 = inlined_call_operand.vmem [shape: f32[1,128], index: 15, kind: input, shape index: {}]
  %s16 = inlined_call_operand.vmem [shape: f32[1,128], index: 16, kind: input, shape index: {}]
  %s17 = inlined_call_operand.hbm [shape: f32[2,64,128], index: 17, kind: output, shape index: {}]
  %s18 = sld [smem:[#allocation0]]
  $region137: #{tpu_custom_call.1} parent=0
    _
  %s20 = ssub.s32 1, %s18
  %s21 = scalar_select 0, %s20, %s18
  $region1: #{tpu_custom_call.1} parent=0
    #allocation5 [shape = 'u8[32768]{0}', space=vmem, size = 0x8000, scoped, tag = 'input window, operand 0']
    #allocation6 [shape = 's32[2]{0}', space=sflag, size = 0x8, scoped, tag = 'scoped memory for tpu_custom_call.1']
    #allocation7 [shape = 's32[2]{0}', space=sflag, size = 0x8, scoped, tag = 'scoped memory for tpu_custom_call.1']
    #allocation8 [shape = 'u8[65536]{0}', space=vmem, size = 0x10000, scoped, tag = 'input window, operand 1']
    #allocation9 [shape = 's32[2]{0}', space=sflag, size = 0x8, scoped, tag = 'scoped memory for tpu_custom_call.1']
    #allocation10 [shape = 'u8[32768]{0}', space=vmem, size = 0x8000, scoped, tag = 'input window, operand 2, single buffered']
    #allocation11 [shape = 'u8[65536]{0}', space=vmem, size = 0x10000, scoped, tag = 'input window, operand 3, single buffered']
    #allocation12 [shape = 's32[1]{0}', space=sflag, size = 0x4, scoped, tag = 'scoped memory for tpu_custom_call.1']
    #allocation13 [shape = 'u8[32768]{0}', space=vmem, size = 0x8000, scoped, tag = 'input window, operand 5, single buffered']
    #allocation14 [shape = 'u8[32768]{0}', space=vmem, size = 0x8000, scoped, tag = 'input window, operand 7, single buffered']
    #allocation15 [shape = 's32[1]{0}', space=sflag, size = 0x4, scoped, tag = 'scoped memory for tpu_custom_call.1']
    #allocation16 [shape = 'u8[65536]{0}', space=vmem, size = 0x10000, scoped, tag = 'input window, operand 9, single buffered']
    #allocation17 [shape = 'u8[65536]{0}', space=vmem, size = 0x10000, scoped, tag = 'input window, operand 11, single buffered']
    #allocation18 [shape = 's32[1]{0}', space=sflag, size = 0x4, scoped, tag = 'scoped memory for tpu_custom_call.1']
    #allocation19 [shape = 'u8[32768]{0}', space=vmem, size = 0x8000, scoped, tag = 'output window, operand 0']
    %22 = vsyncpa [#allocation6], 0
    %s23 = scalar_lea.sflag [#allocation6], 1
    %24 = vsyncpa %s23, 0
    %25 = vsyncpa [#allocation9], 0
    %s26 = scalar_lea.sflag [#allocation9], 1
    %27 = vsyncpa %s26, 0
    %28 = vsyncpa [#allocation12], 0
    %29 = vsyncpa [#allocation15], 0
    %30 = vsyncpa [#allocation18], 0
    %31 = vsyncpa [#allocation7], 0
    %s32 = scalar_lea.sflag [#allocation7], 1
    %33 = vsyncpa %s32, 0
    loop: start=0, step=1, limit=6
    $region2: #{tpu_custom_call.1} parent=1 // loop_pre_header
      _
    $region3: #{tpu_custom_call.1} parent=1 // loop_header
      %s35 = sphi 0, %s39
      %p36 = scmp.ge.s32.totalorder %s35, 6
      %s42 = sphi 0, %s54
      %s43 = sphi 0, %s50
      %s44 = sphi 0, %s42
      %s45 = sphi 0, %s43
      %s46 = sphi 0, %s44
      %s47 = sphi 0, %s45
      %s59 = sphi 0, %s61
      %s62 = sphi 0, %s59
      %s63 = sphi 0, %s62
      %s79 = sphi 0, %s63
      %s85 = sphi 0, %s87
      %s88 = sphi 0, %s85
      %s89 = sphi 0, %s88
      %s105 = sphi 0, %s89
      %s109 = sphi 0, %s109
      %s111 = sphi 0, %s109
      %s112 = sphi 0, %s111
      %s126 = sphi 0, %s112
      %s130 = sphi 0, %s130
      %s132 = sphi 0, %s130
      %s133 = sphi 0, %s132
      %s147 = sphi 0, %s133
      %s151 = sphi 0, %s151
      %s153 = sphi 0, %s151
      %s154 = sphi 0, %s153
      %s168 = sphi 0, %s154
      %s172 = sphi 0, %s172
      %s174 = sphi 0, %s172
      %s175 = sphi 0, %s174
      %s189 = sphi 0, %s175
      %s193 = sphi 0, %s193
      %s195 = sphi 0, %s193
      %s196 = sphi 0, %s195
      %s210 = sphi 0, %s196
      %s214 = sphi 0, %s214
      %s216 = sphi 0, %s214
      %s217 = sphi 0, %s216
      %s231 = sphi 0, %s217
      %s235 = sphi 0, %s235
      %s237 = sphi 0, %s235
      %s238 = sphi 0, %s237
      %s252 = sphi 0, %s238
      %s256 = sphi 0, %s256
      %s258 = sphi 0, %s256
      %s259 = sphi 0, %s258
      %s273 = sphi 0, %s259
      %s277 = sphi 0, %s277
      %s279 = sphi 0, %s277
      %s280 = sphi 0, %s279
      %s294 = sphi 0, %s280
      %s298 = sphi 0, %s298
      %s300 = sphi 0, %s298
      %s301 = sphi 0, %s300
      %s315 = sphi 0, %s301
      %s319 = sphi 0, %s319
      %s321 = sphi 0, %s319
      %s322 = sphi 0, %s321
      %s336 = sphi 0, %s322
      %s340 = sphi 0, %s340
      %s342 = sphi 0, %s340
      %s343 = sphi 0, %s342
      %s357 = sphi 0, %s343
      %s361 = sphi 0, %s361
      %s363 = sphi 0, %s361
      %s364 = sphi 0, %s363
      %s378 = sphi 0, %s364
      %s382 = sphi 0, %s382
      %s384 = sphi 0, %s382
      %s385 = sphi 0, %s384
      %s399 = sphi 0, %s385
      %s403 = sphi 0, %s403
      %s405 = sphi 0, %s403
      %s406 = sphi 0, %s405
      %s420 = sphi 0, %s406
      %s428 = sphi 0, %s430
      %s431 = sphi 0, %s428
      %s432 = sphi 0, %s431
      %s448 = sphi 0, %s432
    $region4: #{tpu_custom_call.1} parent=1 // loop_header_branch
      %38 = sbr.rel (%p36) target = $region8
    $region5: #{tpu_custom_call.1} parent=1 // loop_body
      %s40 = ssub.s32 %s35, 1
      %s41 = ssub.s32 %s35, 2
      %s48 = sadd.s32 1, %s43
      %p49 = scmp.ge.s32.totalorder %s48, 2
      %s50 = scalar_select %p49, 0, %s48
      %s51 = sadd.s32 1, %s42
      %s52 = scalar_select %p49, %s51, %s42
      %p53 = scmp.ge.s32.totalorder %s52, 2
      %s54 = scalar_select %p53, 0, %s52
      %s55 = ssub.s32 %s42, %s54
      %s56 = ssub.s32 %s43, %s50
      %s57 = sor.u32 %s55, %s56
      %p58 = scmp.eq.s32.totalorder %s57, 0
      %s60 = sadd.s32 %s59, 1
      %s61 = scalar_select %p58, %s59, %s60
      %p64 = pneg %p58
      %p65 = scmp.eq.s32.totalorder %s35, 3
      %p66 = por %p64, %p65
      %p67 = scmp.ne.s32.totalorder %s59, %s62
      %p68 = scmp.eq.s32.totalorder %s35, 0
      %p69 = por %p67, %p68
      %p70 = scmp.ne.s32.totalorder %s59, %s62
      %p71 = scmp.eq.s32.totalorder %s40, 3
      %p72 = por %p70, %p71
      %p73 = scmp.ne.s32.totalorder %s62, %s63
      %p74 = scmp.eq.s32.totalorder %s40, 0
      %p75 = por %p73, %p74
      %p76 = scmp.ne.s32.totalorder %s62, %s63
      %p77 = scmp.eq.s32.totalorder %s41, 3
      %p78 = por %p76, %p77
      %p80 = scmp.ne.s32.totalorder %s63, %s79
      %p81 = scmp.eq.s32.totalorder %s41, 0
      %p82 = por %p80, %p81
      %s83 = ssub.s32 %s42, %s54
      %p84 = scmp.eq.s32.totalorder %s83, 0
      %s86 = sadd.s32 %s85, 1
      %s87 = scalar_select %p84, %s85, %s86
      %p90 = pneg %p84
      %p91 = scmp.eq.s32.totalorder %s35, 3
      %p92 = por %p90, %p91
      %p93 = scmp.ne.s32.totalorder %s85, %s88
      %p94 = scmp.eq.s32.totalorder %s35, 0
      %p95 = por %p93, %p94
      %p96 = scmp.ne.s32.totalorder %s85, %s88
      %p97 = scmp.eq.s32.totalorder %s40, 3
      %p98 = por %p96, %p97
      %p99 = scmp.ne.s32.totalorder %s88, %s89
      %p100 = scmp.eq.s32.totalorder %s40, 0
      %p101 = por %p99, %p100
      %p102 = scmp.ne.s32.totalorder %s88, %s89
      %p103 = scmp.eq.s32.totalorder %s41, 3
      %p104 = por %p102, %p103
      %p106 = scmp.ne.s32.totalorder %s89, %s105
      %p107 = scmp.eq.s32.totalorder %s41, 0
      %p108 = por %p106, %p107
      %s110 = sadd.s32 %s109, 1
      %p113 = scmp.eq.s32.totalorder %s35, 3
      %p114 = scmp.ne.s32.totalorder %s109, %s111
      %p115 = scmp.eq.s32.totalorder %s35, 0
      %p116 = por %p114, %p115
      %p117 = scmp.ne.s32.totalorder %s109, %s111
      %p118 = scmp.eq.s32.totalorder %s40, 3
      %p119 = por %p117, %p118
      %p120 = scmp.ne.s32.totalorder %s111, %s112
      %p121 = scmp.eq.s32.totalorder %s40, 0
      %p122 = por %p120, %p121
      %p123 = scmp.ne.s32.totalorder %s111, %s112
      %p124 = scmp.eq.s32.totalorder %s41, 3
      %p125 = por %p123, %p124
      %p127 = scmp.ne.s32.totalorder %s112, %s126
      %p128 = scmp.eq.s32.totalorder %s41, 0
      %p129 = por %p127, %p128
      %s131 = sadd.s32 %s130, 1
      %p134 = scmp.eq.s32.totalorder %s35, 3
      %p135 = scmp.ne.s32.totalorder %s130, %s132
      %p136 = scmp.eq.s32.totalorder %s35, 0
      %p137 = por %p135, %p136
      %p138 = scmp.ne.s32.totalorder %s130, %s132
      %p139 = scmp.eq.s32.totalorder %s40, 3
      %p140 = por %p138, %p139
      %p141 = scmp.ne.s32.totalorder %s132, %s133
      %p142 = scmp.eq.s32.totalorder %s40, 0
      %p143 = por %p141, %p142
      %p144 = scmp.ne.s32.totalorder %s132, %s133
      %p145 = scmp.eq.s32.totalorder %s41, 3
      %p146 = por %p144, %p145
      %p148 = scmp.ne.s32.totalorder %s133, %s147
      %p149 = scmp.eq.s32.totalorder %s41, 0
      %p150 = por %p148, %p149
      %s152 = sadd.s32 %s151, 1
      %p155 = scmp.eq.s32.totalorder %s35, 3
      %p156 = scmp.ne.s32.totalorder %s151, %s153
      %p157 = scmp.eq.s32.totalorder %s35, 0
      %p158 = por %p156, %p157
      %p159 = scmp.ne.s32.totalorder %s151, %s153
      %p160 = scmp.eq.s32.totalorder %s40, 3
      %p161 = por %p159, %p160
      %p162 = scmp.ne.s32.totalorder %s153, %s154
      %p163 = scmp.eq.s32.totalorder %s40, 0
      %p164 = por %p162, %p163
      %p165 = scmp.ne.s32.totalorder %s153, %s154
      %p166 = scmp.eq.s32.totalorder %s41, 3
      %p167 = por %p165, %p166
      %p169 = scmp.ne.s32.totalorder %s154, %s168
      %p170 = scmp.eq.s32.totalorder %s41, 0
      %p171 = por %p169, %p170
      %s173 = sadd.s32 %s172, 1
      %p176 = scmp.eq.s32.totalorder %s35, 3
      %p177 = scmp.ne.s32.totalorder %s172, %s174
      %p178 = scmp.eq.s32.totalorder %s35, 0
      %p179 = por %p177, %p178
      %p180 = scmp.ne.s32.totalorder %s172, %s174
      %p181 = scmp.eq.s32.totalorder %s40, 3
      %p182 = por %p180, %p181
      %p183 = scmp.ne.s32.totalorder %s174, %s175
      %p184 = scmp.eq.s32.totalorder %s40, 0
      %p185 = por %p183, %p184
      %p186 = scmp.ne.s32.totalorder %s174, %s175
      %p187 = scmp.eq.s32.totalorder %s41, 3
      %p188 = por %p186, %p187
      %p190 = scmp.ne.s32.totalorder %s175, %s189
      %p191 = scmp.eq.s32.totalorder %s41, 0
      %p192 = por %p190, %p191
      %s194 = sadd.s32 %s193, 1
      %p197 = scmp.eq.s32.totalorder %s35, 3
      %p198 = scmp.ne.s32.totalorder %s193, %s195
      %p199 = scmp.eq.s32.totalorder %s35, 0
      %p200 = por %p198, %p199
      %p201 = scmp.ne.s32.totalorder %s193, %s195
      %p202 = scmp.eq.s32.totalorder %s40, 3
      %p203 = por %p201, %p202
      %p204 = scmp.ne.s32.totalorder %s195, %s196
      %p205 = scmp.eq.s32.totalorder %s40, 0
      %p206 = por %p204, %p205
      %p207 = scmp.ne.s32.totalorder %s195, %s196
      %p208 = scmp.eq.s32.totalorder %s41, 3
      %p209 = por %p207, %p208
      %p211 = scmp.ne.s32.totalorder %s196, %s210
      %p212 = scmp.eq.s32.totalorder %s41, 0
      %p213 = por %p211, %p212
      %s215 = sadd.s32 %s214, 1
      %p218 = scmp.eq.s32.totalorder %s35, 3
      %p219 = scmp.ne.s32.totalorder %s214, %s216
      %p220 = scmp.eq.s32.totalorder %s35, 0
      %p221 = por %p219, %p220
      %p222 = scmp.ne.s32.totalorder %s214, %s216
      %p223 = scmp.eq.s32.totalorder %s40, 3
      %p224 = por %p222, %p223
      %p225 = scmp.ne.s32.totalorder %s216, %s217
      %p226 = scmp.eq.s32.totalorder %s40, 0
      %p227 = por %p225, %p226
      %p228 = scmp.ne.s32.totalorder %s216, %s217
      %p229 = scmp.eq.s32.totalorder %s41, 3
      %p230 = por %p228, %p229
      %p232 = scmp.ne.s32.totalorder %s217, %s231
      %p233 = scmp.eq.s32.totalorder %s41, 0
      %p234 = por %p232, %p233
      %s236 = sadd.s32 %s235, 1
      %p239 = scmp.eq.s32.totalorder %s35, 3
      %p240 = scmp.ne.s32.totalorder %s235, %s237
      %p241 = scmp.eq.s32.totalorder %s35, 0
      %p242 = por %p240, %p241
      %p243 = scmp.ne.s32.totalorder %s235, %s237
      %p244 = scmp.eq.s32.totalorder %s40, 3
      %p245 = por %p243, %p244
      %p246 = scmp.ne.s32.totalorder %s237, %s238
      %p247 = scmp.eq.s32.totalorder %s40, 0
      %p248 = por %p246, %p247
      %p249 = scmp.ne.s32.totalorder %s237, %s238
      %p250 = scmp.eq.s32.totalorder %s41, 3
      %p251 = por %p249, %p250
      %p253 = scmp.ne.s32.totalorder %s238, %s252
      %p254 = scmp.eq.s32.totalorder %s41, 0
      %p255 = por %p253, %p254
      %s257 = sadd.s32 %s256, 1
      %p260 = scmp.eq.s32.totalorder %s35, 3
      %p261 = scmp.ne.s32.totalorder %s256, %s258
      %p262 = scmp.eq.s32.totalorder %s35, 0
      %p263 = por %p261, %p262
      %p264 = scmp.ne.s32.totalorder %s256, %s258
      %p265 = scmp.eq.s32.totalorder %s40, 3
      %p266 = por %p264, %p265
      %p267 = scmp.ne.s32.totalorder %s258, %s259
      %p268 = scmp.eq.s32.totalorder %s40, 0
      %p269 = por %p267, %p268
      %p270 = scmp.ne.s32.totalorder %s258, %s259
      %p271 = scmp.eq.s32.totalorder %s41, 3
      %p272 = por %p270, %p271
      %p274 = scmp.ne.s32.totalorder %s259, %s273
      %p275 = scmp.eq.s32.totalorder %s41, 0
      %p276 = por %p274, %p275
      %s278 = sadd.s32 %s277, 1
      %p281 = scmp.eq.s32.totalorder %s35, 3
      %p282 = scmp.ne.s32.totalorder %s277, %s279
      %p283 = scmp.eq.s32.totalorder %s35, 0
      %p284 = por %p282, %p283
      %p285 = scmp.ne.s32.totalorder %s277, %s279
      %p286 = scmp.eq.s32.totalorder %s40, 3
      %p287 = por %p285, %p286
      %p288 = scmp.ne.s32.totalorder %s279, %s280
      %p289 = scmp.eq.s32.totalorder %s40, 0
      %p290 = por %p288, %p289
      %p291 = scmp.ne.s32.totalorder %s279, %s280
      %p292 = scmp.eq.s32.totalorder %s41, 3
      %p293 = por %p291, %p292
      %p295 = scmp.ne.s32.totalorder %s280, %s294
      %p296 = scmp.eq.s32.totalorder %s41, 0
      %p297 = por %p295, %p296
      %s299 = sadd.s32 %s298, 1
      %p302 = scmp.eq.s32.totalorder %s35, 3
      %p303 = scmp.ne.s32.totalorder %s298, %s300
      %p304 = scmp.eq.s32.totalorder %s35, 0
      %p305 = por %p303, %p304
      %p306 = scmp.ne.s32.totalorder %s298, %s300
      %p307 = scmp.eq.s32.totalorder %s40, 3
      %p308 = por %p306, %p307
      %p309 = scmp.ne.s32.totalorder %s300, %s301
      %p310 = scmp.eq.s32.totalorder %s40, 0
      %p311 = por %p309, %p310
      %p312 = scmp.ne.s32.totalorder %s300, %s301
      %p313 = scmp.eq.s32.totalorder %s41, 3
      %p314 = por %p312, %p313
      %p316 = scmp.ne.s32.totalorder %s301, %s315
      %p317 = scmp.eq.s32.totalorder %s41, 0
      %p318 = por %p316, %p317
      %s320 = sadd.s32 %s319, 1
      %p323 = scmp.eq.s32.totalorder %s35, 3
      %p324 = scmp.ne.s32.totalorder %s319, %s321
      %p325 = scmp.eq.s32.totalorder %s35, 0
      %p326 = por %p324, %p325
      %p327 = scmp.ne.s32.totalorder %s319, %s321
      %p328 = scmp.eq.s32.totalorder %s40, 3
      %p329 = por %p327, %p328
      %p330 = scmp.ne.s32.totalorder %s321, %s322
      %p331 = scmp.eq.s32.totalorder %s40, 0
      %p332 = por %p330, %p331
      %p333 = scmp.ne.s32.totalorder %s321, %s322
      %p334 = scmp.eq.s32.totalorder %s41, 3
      %p335 = por %p333, %p334
      %p337 = scmp.ne.s32.totalorder %s322, %s336
      %p338 = scmp.eq.s32.totalorder %s41, 0
      %p339 = por %p337, %p338
      %s341 = sadd.s32 %s340, 1
      %p344 = scmp.eq.s32.totalorder %s35, 3
      %p345 = scmp.ne.s32.totalorder %s340, %s342
      %p346 = scmp.eq.s32.totalorder %s35, 0
      %p347 = por %p345, %p346
      %p348 = scmp.ne.s32.totalorder %s340, %s342
      %p349 = scmp.eq.s32.totalorder %s40, 3
      %p350 = por %p348, %p349
      %p351 = scmp.ne.s32.totalorder %s342, %s343
      %p352 = scmp.eq.s32.totalorder %s40, 0
      %p353 = por %p351, %p352
      %p354 = scmp.ne.s32.totalorder %s342, %s343
      %p355 = scmp.eq.s32.totalorder %s41, 3
      %p356 = por %p354, %p355
      %p358 = scmp.ne.s32.totalorder %s343, %s357
      %p359 = scmp.eq.s32.totalorder %s41, 0
      %p360 = por %p358, %p359
      %s362 = sadd.s32 %s361, 1
      %p365 = scmp.eq.s32.totalorder %s35, 3
      %p366 = scmp.ne.s32.totalorder %s361, %s363
      %p367 = scmp.eq.s32.totalorder %s35, 0
      %p368 = por %p366, %p367
      %p369 = scmp.ne.s32.totalorder %s361, %s363
      %p370 = scmp.eq.s32.totalorder %s40, 3
      %p371 = por %p369, %p370
      %p372 = scmp.ne.s32.totalorder %s363, %s364
      %p373 = scmp.eq.s32.totalorder %s40, 0
      %p374 = por %p372, %p373
      %p375 = scmp.ne.s32.totalorder %s363, %s364
      %p376 = scmp.eq.s32.totalorder %s41, 3
      %p377 = por %p375, %p376
      %p379 = scmp.ne.s32.totalorder %s364, %s378
      %p380 = scmp.eq.s32.totalorder %s41, 0
      %p381 = por %p379, %p380
      %s383 = sadd.s32 %s382, 1
      %p386 = scmp.eq.s32.totalorder %s35, 3
      %p387 = scmp.ne.s32.totalorder %s382, %s384
      %p388 = scmp.eq.s32.totalorder %s35, 0
      %p389 = por %p387, %p388
      %p390 = scmp.ne.s32.totalorder %s382, %s384
      %p391 = scmp.eq.s32.totalorder %s40, 3
      %p392 = por %p390, %p391
      %p393 = scmp.ne.s32.totalorder %s384, %s385
      %p394 = scmp.eq.s32.totalorder %s40, 0
      %p395 = por %p393, %p394
      %p396 = scmp.ne.s32.totalorder %s384, %s385
      %p397 = scmp.eq.s32.totalorder %s41, 3
      %p398 = por %p396, %p397
      %p400 = scmp.ne.s32.totalorder %s385, %s399
      %p401 = scmp.eq.s32.totalorder %s41, 0
      %p402 = por %p400, %p401
      %s404 = sadd.s32 %s403, 1
      %p407 = scmp.eq.s32.totalorder %s35, 3
      %p408 = scmp.ne.s32.totalorder %s403, %s405
      %p409 = scmp.eq.s32.totalorder %s35, 0
      %p410 = por %p408, %p409
      %p411 = scmp.ne.s32.totalorder %s403, %s405
      %p412 = scmp.eq.s32.totalorder %s40, 3
      %p413 = por %p411, %p412
      %p414 = scmp.ne.s32.totalorder %s405, %s406
      %p415 = scmp.eq.s32.totalorder %s40, 0
      %p416 = por %p414, %p415
      %p417 = scmp.ne.s32.totalorder %s405, %s406
      %p418 = scmp.eq.s32.totalorder %s41, 3
      %p419 = por %p417, %p418
      %p421 = scmp.ne.s32.totalorder %s406, %s420
      %p422 = scmp.eq.s32.totalorder %s41, 0
      %p423 = por %p421, %p422
      %s424 = ssub.s32 %s42, %s54
      %s425 = ssub.s32 %s43, %s50
      %s426 = sor.u32 %s424, %s425
      %p427 = scmp.eq.s32.totalorder %s426, 0
      %s429 = sadd.s32 %s428, 1
      %s430 = scalar_select %p427, %s428, %s429
      %p433 = pneg %p427
      %p434 = scmp.eq.s32.totalorder %s35, 3
      %p435 = por %p433, %p434
      %p436 = scmp.ne.s32.totalorder %s428, %s431
      %p437 = scmp.eq.s32.totalorder %s35, 0
      %p438 = por %p436, %p437
      %p439 = scmp.ne.s32.totalorder %s428, %s431
      %p440 = scmp.eq.s32.totalorder %s40, 3
      %p441 = por %p439, %p440
      %p442 = scmp.ne.s32.totalorder %s431, %s432
      %p443 = scmp.eq.s32.totalorder %s40, 0
      %p444 = por %p442, %p443
      %p445 = scmp.ne.s32.totalorder %s431, %s432
      %p446 = scmp.eq.s32.totalorder %s41, 3
      %p447 = por %p445, %p446
      %p449 = scmp.ne.s32.totalorder %s432, %s448
      %p450 = scmp.eq.s32.totalorder %s41, 0
      %p451 = por %p449, %p450
      %p452 = scmp.le.s32.totalorder 1, %s35
      %p453 = scmp.lt.s32.totalorder %s35, 5
      %p454 = pnand %p452, %p453
      %p455 = pneg %p454
      // Predicated region
      $region9: #{tpu_custom_call.1} parent=5 // pred_check
        _
      $region10: #{tpu_custom_call.1} parent=5 // pred_check_branch
        %457 = sbr.rel (%p454) target = $region12
      $region11: #{tpu_custom_call.1} parent=5 // pred_region
        %s458 = ssub.s32 %s35, 1
        // Predicated region
        $region13: #{tpu_custom_call.1} parent=11 // pred_check
          %p459 = pneg %p122
        $region14: #{tpu_custom_call.1} parent=11 // pred_check_branch
          %461 = sbr.rel (%p459) target = $region16
        $region15: #{tpu_custom_call.1} parent=11 // pred_region
          %463 = vsyncadd [#allocation9], 0
          %s464 = sshll.u32 %s2, 4
          %s465 = int_to_ptr.hbm [resolvable:$true] %s464
          %s466 = sshll.u32 [#allocation10], 4
          %s467 = int_to_ptr.vmem [resolvable:$true] %s466
          %472 = dma.hbm_to_vmem [thread:$0]  %s465, 1024, %s467, [#allocation9], 128, 128, 8
        $region16: #{tpu_custom_call.1} parent=11 // pred_fallthru
          _
        // Predicated region
        $region17: #{tpu_custom_call.1} parent=11 // pred_check
          %p473 = pneg %p143
        $region18: #{tpu_custom_call.1} parent=11 // pred_check_branch
          %475 = sbr.rel (%p473) target = $region20
        $region19: #{tpu_custom_call.1} parent=11 // pred_region
          %477 = vsyncadd [#allocation12], 0
          %s478 = sshll.u32 %s3, 4
          %s479 = int_to_ptr.hbm [resolvable:$true] %s478
          %s480 = sshll.u32 [#allocation11], 4
          %s481 = int_to_ptr.vmem [resolvable:$true] %s480
          %486 = dma.hbm_to_vmem [thread:$0]  %s479, 2048, %s481, [#allocation12], 128, 128, 8
        $region20: #{tpu_custom_call.1} parent=11 // pred_fallthru
          _
        // Predicated region
        $region21: #{tpu_custom_call.1} parent=11 // pred_check
          %p487 = pneg %p164
        $region22: #{tpu_custom_call.1} parent=11 // pred_check_branch
          %489 = sbr.rel (%p487) target = $region24
        $region23: #{tpu_custom_call.1} parent=11 // pred_region
          _
        $region24: #{tpu_custom_call.1} parent=11 // pred_fallthru
          _
        // Predicated region
        $region25: #{tpu_custom_call.1} parent=11 // pred_check
          %p490 = pneg %p185
        $region26: #{tpu_custom_call.1} parent=11 // pred_check_branch
          %492 = sbr.rel (%p490) target = $region28
        $region27: #{tpu_custom_call.1} parent=11 // pred_region
          %494 = vsyncadd [#allocation12], 0
          %s495 = sshll.u32 %s5, 4
          %s496 = int_to_ptr.hbm [resolvable:$true] %s495
          %s497 = sshll.u32 [#allocation13], 4
          %s498 = int_to_ptr.vmem [resolvable:$true] %s497
          %503 = dma.hbm_to_vmem [thread:$0]  %s496, 1024, %s498, [#allocation12], 64, 64, 4
        $region28: #{tpu_custom_call.1} parent=11 // pred_fallthru
          _
        // Predicated region
        $region29: #{tpu_custom_call.1} parent=11 // pred_check
          %p504 = pneg %p206
        $region30: #{tpu_custom_call.1} parent=11 // pred_check_branch
          %506 = sbr.rel (%p504) target = $region32
        $region31: #{tpu_custom_call.1} parent=11 // pred_region
          _
        $region32: #{tpu_custom_call.1} parent=11 // pred_fallthru
          _
        // Predicated region
        $region33: #{tpu_custom_call.1} parent=11 // pred_check
          %p507 = pneg %p227
        $region34: #{tpu_custom_call.1} parent=11 // pred_check_branch
          %509 = sbr.rel (%p507) target = $region36
        $region35: #{tpu_custom_call.1} parent=11 // pred_region
          %511 = vsyncadd [#allocation15], 0
          %s512 = sshll.u32 %s7, 4
          %s513 = int_to_ptr.hbm [resolvable:$true] %s512
          %s514 = sshll.u32 [#allocation14], 4
          %s515 = int_to_ptr.vmem [resolvable:$true] %s514
          %520 = dma.hbm_to_vmem [thread:$0]  %s513, 1024, %s515, [#allocation15], 64, 64, 4
        $region36: #{tpu_custom_call.1} parent=11 // pred_fallthru
          _
        // Predicated region
        $region37: #{tpu_custom_call.1} parent=11 // pred_check
          %p521 = pneg %p248
        $region38: #{tpu_custom_call.1} parent=11 // pred_check_branch
          %523 = sbr.rel (%p521) target = $region40
        $region39: #{tpu_custom_call.1} parent=11 // pred_region
          _
        $region40: #{tpu_custom_call.1} parent=11 // pred_fallthru
          _
        // Predicated region
        $region41: #{tpu_custom_call.1} parent=11 // pred_check
          %p524 = pneg %p269
        $region42: #{tpu_custom_call.1} parent=11 // pred_check_branch
          %526 = sbr.rel (%p524) target = $region44
        $region43: #{tpu_custom_call.1} parent=11 // pred_region
          %528 = vsyncadd [#allocation15], 0
          %s529 = sshll.u32 %s9, 4
          %s530 = int_to_ptr.hbm [resolvable:$true] %s529
          %s531 = sshll.u32 [#allocation16], 4
          %s532 = int_to_ptr.vmem [resolvable:$true] %s531
          %537 = dma.hbm_to_vmem [thread:$0]  %s530, 2048, %s532, [#allocation15], 128, 128, 8
        $region44: #{tpu_custom_call.1} parent=11 // pred_fallthru
          _
        // Predicated region
        $region45: #{tpu_custom_call.1} parent=11 // pred_check
          %p538 = pneg %p290
        $region46: #{tpu_custom_call.1} parent=11 // pred_check_branch
          %540 = sbr.rel (%p538) target = $region48
        $region47: #{tpu_custom_call.1} parent=11 // pred_region
          _
        $region48: #{tpu_custom_call.1} parent=11 // pred_fallthru
          _
        // Predicated region
        $region49: #{tpu_custom_call.1} parent=11 // pred_check
          %p541 = pneg %p311
        $region50: #{tpu_custom_call.1} parent=11 // pred_check_branch
          %543 = sbr.rel (%p541) target = $region52
        $region51: #{tpu_custom_call.1} parent=11 // pred_region
          %545 = vsyncadd [#allocation18], 0
          %s546 = sshll.u32 %s11, 4
          %s547 = int_to_ptr.hbm [resolvable:$true] %s546
          %s548 = sshll.u32 [#allocation17], 4
          %s549 = int_to_ptr.vmem [resolvable:$true] %s548
          %554 = dma.hbm_to_vmem [thread:$0]  %s547, 2048, %s549, [#allocation18], 64, 64, 4
        $region52: #{tpu_custom_call.1} parent=11 // pred_fallthru
          _
        // Predicated region
        $region53: #{tpu_custom_call.1} parent=11 // pred_check
          %p555 = pneg %p332
        $region54: #{tpu_custom_call.1} parent=11 // pred_check_branch
          %557 = sbr.rel (%p555) target = $region56
        $region55: #{tpu_custom_call.1} parent=11 // pred_region
          _
        $region56: #{tpu_custom_call.1} parent=11 // pred_fallthru
          _
        // Predicated region
        $region57: #{tpu_custom_call.1} parent=11 // pred_check
          %p558 = pneg %p353
        $region58: #{tpu_custom_call.1} parent=11 // pred_check_branch
          %560 = sbr.rel (%p558) target = $region60
        $region59: #{tpu_custom_call.1} parent=11 // pred_region
          _
        $region60: #{tpu_custom_call.1} parent=11 // pred_fallthru
          _
        // Predicated region
        $region61: #{tpu_custom_call.1} parent=11 // pred_check
          %p561 = pneg %p374
        $region62: #{tpu_custom_call.1} parent=11 // pred_check_branch
          %563 = sbr.rel (%p561) target = $region64
        $region63: #{tpu_custom_call.1} parent=11 // pred_region
          _
        $region64: #{tpu_custom_call.1} parent=11 // pred_fallthru
          _
        // Predicated region
        $region65: #{tpu_custom_call.1} parent=11 // pred_check
          %p564 = pneg %p395
        $region66: #{tpu_custom_call.1} parent=11 // pred_check_branch
          %566 = sbr.rel (%p564) target = $region68
        $region67: #{tpu_custom_call.1} parent=11 // pred_region
          _
        $region68: #{tpu_custom_call.1} parent=11 // pred_fallthru
          _
        // Predicated region
        $region69: #{tpu_custom_call.1} parent=11 // pred_check
          %p567 = pneg %p416
        $region70: #{tpu_custom_call.1} parent=11 // pred_check_branch
          %569 = sbr.rel (%p567) target = $region72
        $region71: #{tpu_custom_call.1} parent=11 // pred_region
          _
        $region72: #{tpu_custom_call.1} parent=11 // pred_fallthru
          _
      $region12: #{tpu_custom_call.1} parent=5 // pred_fallthru
        _
      %p570 = scmp.lt.s32.totalorder %s35, 4
      // Predicated region
      $region73: #{tpu_custom_call.1} parent=5 // pred_check
        %p571 = pneg %p570
      $region74: #{tpu_custom_call.1} parent=5 // pred_check_branch
        %573 = sbr.rel (%p571) target = $region76
      $region75: #{tpu_custom_call.1} parent=5 // pred_region
        // Predicated region
        $region77: #{tpu_custom_call.1} parent=75 // pred_check
          %p574 = pneg %p69
        $region78: #{tpu_custom_call.1} parent=75 // pred_check_branch
          %576 = sbr.rel (%p574) target = $region80
        $region79: #{tpu_custom_call.1} parent=75 // pred_region
          %s577 = sand.u32 %s59, 1
          %s578 = scalar_lea.sflag [#allocation6], %s577
          %s579 = sand.u32 %s59, 1
          %s580 = smul.addr %s579, 32
          %s581 = scalar_lea.vmem [#allocation5], %s580
          %s582 = smul.u32 4, %s43
          %584 = vsyncadd %s578, 0
          %s585 = smul.addr %s42, 8
          %s586 = sadd.s32 %s582, %s585
          %s587 = smul.addr %s586, 8
          %s588 = scalar_lea.hbm %s0, %s587
          %s589 = sshll.u32 %s588, 4
          %s590 = int_to_ptr.hbm [resolvable:$true] %s589
          %s591 = sshll.u32 %s581, 4
          %s592 = int_to_ptr.vmem [resolvable:$true] %s591
          %597 = dma.hbm_to_vmem [thread:$0]  %s590, 512, %s592, %s578, 128, 128, 8
        $region80: #{tpu_custom_call.1} parent=75 // pred_fallthru
          _
        // Predicated region
        $region81: #{tpu_custom_call.1} parent=75 // pred_check
          %p598 = pneg %p95
        $region82: #{tpu_custom_call.1} parent=75 // pred_check_branch
          %600 = sbr.rel (%p598) target = $region84
        $region83: #{tpu_custom_call.1} parent=75 // pred_region
          %s601 = sand.u32 %s35, 1
          %s602 = scalar_lea.sflag [#allocation9], %s601
          %s603 = sand.u32 %s85, 1
          %s604 = smul.addr %s603, 64
          %s605 = scalar_lea.vmem [#allocation8], %s604
          %607 = vsyncadd %s602, 0
          %s608 = smul.addr %s42, 8
          %s609 = smul.addr %s608, 8
          %s610 = scalar_lea.hbm %s1, %s609
          %s611 = sshll.u32 %s610, 4
          %s612 = int_to_ptr.hbm [resolvable:$true] %s611
          %s613 = sshll.u32 %s605, 4
          %s614 = int_to_ptr.vmem [resolvable:$true] %s613
          %619 = dma.hbm_to_vmem [thread:$0]  %s612, 1024, %s614, %s602, 128, 128, 8
        $region84: #{tpu_custom_call.1} parent=75 // pred_fallthru
          _
      $region76: #{tpu_custom_call.1} parent=5 // pred_fallthru
        _
      %p620 = scmp.le.s32.totalorder 1, %s35
      %p621 = scmp.lt.s32.totalorder %s35, 5
      %p622 = pnand %p620, %p621
      %p623 = pneg %p622
      // Predicated region
      $region85: #{tpu_custom_call.1} parent=5 // pred_check
        _
      $region86: #{tpu_custom_call.1} parent=5 // pred_check_branch
        %625 = sbr.rel (%p622) target = $region88
      $region87: #{tpu_custom_call.1} parent=5 // pred_region
        %s626 = ssub.s32 %s35, 1
        %s627 = sand.u32 %s62, 1
        %s628 = scalar_lea.sflag [#allocation6], %s627
        %s629 = sand.u32 %s62, 1
        %s630 = smul.addr %s629, 32
        %s631 = scalar_lea.vmem [#allocation5], %s630
        // Predicated region
        $region89: #{tpu_custom_call.1} parent=87 // pred_check
          %p632 = pneg %p75
        $region90: #{tpu_custom_call.1} parent=87 // pred_check_branch
          %634 = sbr.rel (%p632) target = $region92
        $region91: #{tpu_custom_call.1} parent=87 // pred_region
          %636 = dma.done %s628, 512
        $region92: #{tpu_custom_call.1} parent=87 // pred_fallthru
          _
        %s637 = sand.u32 %s40, 1
        %s638 = scalar_lea.sflag [#allocation9], %s637
        %s639 = sand.u32 %s88, 1
        %s640 = smul.addr %s639, 64
        %s641 = scalar_lea.vmem [#allocation8], %s640
        // Predicated region
        $region93: #{tpu_custom_call.1} parent=87 // pred_check
          %p642 = pneg %p101
        $region94: #{tpu_custom_call.1} parent=87 // pred_check_branch
          %644 = sbr.rel (%p642) target = $region96
        $region95: #{tpu_custom_call.1} parent=87 // pred_region
          %646 = dma.done %s638, 1024
        $region96: #{tpu_custom_call.1} parent=87 // pred_fallthru
          _
        // Predicated region
        $region97: #{tpu_custom_call.1} parent=87 // pred_check
          %p647 = pneg %p122
        $region98: #{tpu_custom_call.1} parent=87 // pred_check_branch
          %649 = sbr.rel (%p647) target = $region100
        $region99: #{tpu_custom_call.1} parent=87 // pred_region
          %651 = dma.done [#allocation9], 1024
        $region100: #{tpu_custom_call.1} parent=87 // pred_fallthru
          _
        // Predicated region
        $region101: #{tpu_custom_call.1} parent=87 // pred_check
          %p652 = pneg %p143
        $region102: #{tpu_custom_call.1} parent=87 // pred_check_branch
          %654 = sbr.rel (%p652) target = $region104
        $region103: #{tpu_custom_call.1} parent=87 // pred_region
          %656 = dma.done [#allocation12], 2048
        $region104: #{tpu_custom_call.1} parent=87 // pred_fallthru
          _
        // Predicated region
        $region105: #{tpu_custom_call.1} parent=87 // pred_check
          %p657 = pneg %p185
        $region106: #{tpu_custom_call.1} parent=87 // pred_check_branch
          %659 = sbr.rel (%p657) target = $region108
        $region107: #{tpu_custom_call.1} parent=87 // pred_region
          %661 = dma.done [#allocation12], 1024
        $region108: #{tpu_custom_call.1} parent=87 // pred_fallthru
          _
        // Predicated region
        $region109: #{tpu_custom_call.1} parent=87 // pred_check
          %p662 = pneg %p227
        $region110: #{tpu_custom_call.1} parent=87 // pred_check_branch
          %664 = sbr.rel (%p662) target = $region112
        $region111: #{tpu_custom_call.1} parent=87 // pred_region
          %666 = dma.done [#allocation15], 1024
        $region112: #{tpu_custom_call.1} parent=87 // pred_fallthru
          _
        // Predicated region
        $region113: #{tpu_custom_call.1} parent=87 // pred_check
          %p667 = pneg %p269
        $region114: #{tpu_custom_call.1} parent=87 // pred_check_branch
          %669 = sbr.rel (%p667) target = $region116
        $region115: #{tpu_custom_call.1} parent=87 // pred_region
          %671 = dma.done [#allocation15], 2048
        $region116: #{tpu_custom_call.1} parent=87 // pred_fallthru
          _
        // Predicated region
        $region117: #{tpu_custom_call.1} parent=87 // pred_check
          %p672 = pneg %p311
        $region118: #{tpu_custom_call.1} parent=87 // pred_check_branch
          %674 = sbr.rel (%p672) target = $region120
        $region119: #{tpu_custom_call.1} parent=87 // pred_region
          %676 = dma.done [#allocation18], 2048
        $region120: #{tpu_custom_call.1} parent=87 // pred_fallthru
          _
        %s677 = sand.u32 %s62, 1
        %s678 = scalar_lea.sflag [#allocation6], %s677
        %s679 = sand.u32 %s62, 1
        %s680 = smul.addr %s679, 32
        %s681 = scalar_lea.vmem [#allocation5], %s680
        %p682 = pneg %p75
        %p683 = pneg %p72
        %s684 = sand.u32 %s40, 1
        %s685 = scalar_lea.sflag [#allocation9], %s684
        %s686 = sand.u32 %s88, 1
        %s687 = smul.addr %s686, 64
        %s688 = scalar_lea.vmem [#allocation8], %s687
        %p689 = pneg %p101
        %p690 = pneg %p98
        %p691 = pneg %p122
        %p692 = pneg %p119
        %p693 = pneg %p143
        %p694 = pneg %p140
        %p695 = pneg %p164
        %p696 = pneg %p161
        %p697 = pneg %p185
        %p698 = pneg %p182
        %p699 = pneg %p206
        %p700 = pneg %p203
        %p701 = pneg %p227
        %p702 = pneg %p224
        %p703 = pneg %p248
        %p704 = pneg %p245
        %p705 = pneg %p269
        %p706 = pneg %p266
        %p707 = pneg %p290
        %p708 = pneg %p287
        %p709 = pneg %p311
        %p710 = pneg %p308
        %p711 = pneg %p332
        %p712 = pneg %p329
        %p713 = pneg %p353
        %p714 = pneg %p350
        %p715 = pneg %p374
        %p716 = pneg %p371
        %p717 = pneg %p395
        %p718 = pneg %p392
        %p719 = pneg %p416
        %p720 = pneg %p413
        %p721 = pneg %p444
        %p722 = pneg %p441
        %s723 = sand.u32 %s431, 1
        %s724 = scalar_lea.sflag [#allocation7], %s723
        %s725 = sand.u32 %s431, 1
        %s726 = smul.addr %s725, 32
        %s727 = scalar_lea.vmem [#allocation19], %s726
        %s728 = smul.u32 4, %s45
        %s729 = smul.u32 4, %s45
        %p731 = scmp.eq.s32.totalorder %s45, 0
        // Predicated region
        $region121: #{tpu_custom_call.1} parent=87 // pred_check
          %p732 = pneg %p731
        $region122: #{tpu_custom_call.1} parent=87 // pred_check_branch
          %734 = sbr.rel (%p732) target = $region124
        $region123: #{tpu_custom_call.1} parent=87 // pred_region
          %v735 = vld [vmem:[%s641] sm:$0xff]
          %v736 = vld [vmem:[%s641 + $0x8] sm:$0xff]
          %v737 = vld [vmem:[%s641 + $0x10] sm:$0xff]
          %v738 = vld [vmem:[%s641 + $0x18] sm:$0xff]
          %v739 = vld [vmem:[%s641 + $0x20] sm:$0xff]
          %v740 = vld [vmem:[%s641 + $0x28] sm:$0xff]
          %v741 = vld [vmem:[%s641 + $0x30] sm:$0xff]
          %v742 = vld [vmem:[%s641 + $0x38] sm:$0xff]
          %v743 = vld [vmem:[#allocation10] sm:$0xff]
          %v744 = vld [vmem:[#allocation10 + $0x8] sm:$0xff]
          %v745 = vld [vmem:[#allocation10 + $0x10] sm:$0xff]
          %v746 = vld [vmem:[#allocation10 + $0x18] sm:$0xff]
          %v747 = vld [vmem:[#allocation10 + $0x20] sm:$0xff]
          %v748 = vld [vmem:[#allocation10 + $0x28] sm:$0xff]
          %v749 = vld [vmem:[#allocation10 + $0x30] sm:$0xff]
          %v750 = vld [vmem:[#allocation10 + $0x38] sm:$0xff]
          %v751 = vadd.f32 %v735, %v743
          %v752 = vadd.f32 %v736, %v744
          %v753 = vadd.f32 %v737, %v745
          %v754 = vadd.f32 %v738, %v746
          %v755 = vadd.f32 %v739, %v747
          %v756 = vadd.f32 %v740, %v748
          %v757 = vadd.f32 %v741, %v749
          %v758 = vadd.f32 %v742, %v750
          %v759 = vpack.c.bf16 %v752, %v751
          %v760 = vpack.c.bf16 %v754, %v753
          %v761 = vpack.c.bf16 %v756, %v755
          %v762 = vpack.c.bf16 %v758, %v757
          %v763 = vld [vmem:[#allocation11] sm:$0xff]
          %v764 = vld [vmem:[#allocation11 + $0x8] sm:$0xff]
          %v765 = vld [vmem:[#allocation11 + $0x10] sm:$0xff]
          %v766 = vld [vmem:[#allocation11 + $0x18] sm:$0xff]
          %v767 = vld [vmem:[#allocation11 + $0x20] sm:$0xff]
          %v768 = vld [vmem:[#allocation11 + $0x28] sm:$0xff]
          %v769 = vld [vmem:[#allocation11 + $0x30] sm:$0xff]
          %v770 = vld [vmem:[#allocation11 + $0x38] sm:$0xff]
          %v771 = vld [vmem:[#allocation11 + $0x40] sm:$0xff]
          %v772 = vld [vmem:[#allocation11 + $0x48] sm:$0xff]
          %v773 = vld [vmem:[#allocation11 + $0x50] sm:$0xff]
          %v774 = vld [vmem:[#allocation11 + $0x58] sm:$0xff]
          %v775 = vld [vmem:[#allocation11 + $0x60] sm:$0xff]
          %v776 = vld [vmem:[#allocation11 + $0x68] sm:$0xff]
          %v777 = vld [vmem:[#allocation11 + $0x70] sm:$0xff]
          %v778 = vld [vmem:[#allocation11 + $0x78] sm:$0xff]
          %v779 = vld [vmem:[%s4] sm:$0x3]
          %v781 = vperm.slane %v779, 0
          %v782 = vperm.slane %v779, 1
          %v801 = vunpack.c.l.b16 %v763
          %v802 = vunpack.c.h.b16 %v763
          %v803 = vunpack.c.l.b16 %v764
          %v804 = vunpack.c.h.b16 %v764
          %v805 = vunpack.c.l.b16 %v765
          %v806 = vunpack.c.h.b16 %v765
          %v807 = vunpack.c.l.b16 %v766
          %v808 = vunpack.c.h.b16 %v766
          %v809 = vunpack.c.l.b16 %v767
          %v810 = vunpack.c.h.b16 %v767
          %v811 = vunpack.c.l.b16 %v768
          %v812 = vunpack.c.h.b16 %v768
          %v813 = vunpack.c.l.b16 %v769
          %v814 = vunpack.c.h.b16 %v769
          %v815 = vunpack.c.l.b16 %v770
          %v816 = vunpack.c.h.b16 %v770
          %v817 = vunpack.c.l.b16 %v771
          %v818 = vunpack.c.h.b16 %v771
          %v819 = vunpack.c.l.b16 %v772
          %v820 = vunpack.c.h.b16 %v772
          %v821 = vunpack.c.l.b16 %v773
          %v822 = vunpack.c.h.b16 %v773
          %v823 = vunpack.c.l.b16 %v774
          %v824 = vunpack.c.h.b16 %v774
          %v825 = vunpack.c.l.b16 %v775
          %v826 = vunpack.c.h.b16 %v775
          %v827 = vunpack.c.l.b16 %v776
          %v828 = vunpack.c.h.b16 %v776
          %v829 = vunpack.c.l.b16 %v777
          %v830 = vunpack.c.h.b16 %v777
          %v831 = vunpack.c.l.b16 %v778
          %v832 = vunpack.c.h.b16 %v778
          %v833 = vpack.c.b16 %v803, %v801
          %v834 = vpack.c.b16 %v804, %v802
          %v835 = vpack.c.b16 %v807, %v805
          %v836 = vpack.c.b16 %v808, %v806
          %v837 = vpack.c.b16 %v811, %v809
          %v838 = vpack.c.b16 %v812, %v810
          %v839 = vpack.c.b16 %v815, %v813
          %v840 = vpack.c.b16 %v816, %v814
          %v841 = vpack.c.b16 %v819, %v817
          %v842 = vpack.c.b16 %v820, %v818
          %v843 = vpack.c.b16 %v823, %v821
          %v844 = vpack.c.b16 %v824, %v822
          %v845 = vpack.c.b16 %v827, %v825
          %v846 = vpack.c.b16 %v828, %v826
          %v847 = vpack.c.b16 %v831, %v829
          %v848 = vpack.c.b16 %v832, %v830
          %865 = vmatpush.bf16.msra.mxu0 %v847
          %866 = vmatpush.bf16.msra.mxu0 %v845
          %867 = vmatpush.bf16.msra.mxu0 %v843
          %868 = vmatpush.bf16.msra.mxu0 %v841
          %869 = vmatpush.bf16.msra.mxu0 %v839
          %870 = vmatpush.bf16.msra.mxu0 %v837
          %871 = vmatpush.bf16.msra.mxu0 %v835
          %872 = vmatpush.bf16.msra.mxu0 %v833
          %873 = vmatmul.bf16.gmra.mxu0 %v759
          %v874 = vpop.f32.mrf.mxu0
          %v875 = vadd.f32 %v781, %v874
          %v876 = vpop.f32.mrf.mxu0
          %v877 = vadd.f32 %v781, %v876
          %878 = vmatmul.bf16.gmra.mxu0 %v760
          %v879 = vpop.f32.mrf.mxu0
          %v880 = vadd.f32 %v781, %v879
          %v881 = vpop.f32.mrf.mxu0
          %v882 = vadd.f32 %v781, %v881
          %883 = vmatmul.bf16.gmra.mxu0 %v761
          %v884 = vpop.f32.mrf.mxu0
          %v885 = vadd.f32 %v781, %v884
          %v886 = vpop.f32.mrf.mxu0
          %v887 = vadd.f32 %v781, %v886
          %888 = vmatmul.bf16.gmra.mxu0 %v762
          %v889 = vpop.f32.mrf.mxu0
          %v890 = vadd.f32 %v781, %v889
          %v891 = vpop.f32.mrf.mxu0
          %v892 = vadd.f32 %v781, %v891
          %893 = vdwg.mxu0
          %894 = vmatpush.bf16.msra.mxu0 %v848
          %895 = vmatpush.bf16.msra.mxu0 %v846
          %896 = vmatpush.bf16.msra.mxu0 %v844
          %897 = vmatpush.bf16.msra.mxu0 %v842
          %898 = vmatpush.bf16.msra.mxu0 %v840
          %899 = vmatpush.bf16.msra.mxu0 %v838
          %900 = vmatpush.bf16.msra.mxu0 %v836
          %901 = vmatpush.bf16.msra.mxu0 %v834
          %902 = vmatmul.bf16.gmra.mxu0 %v759
          %v903 = vpop.f32.mrf.mxu0
          %v904 = vadd.f32 %v782, %v903
          %v905 = vpop.f32.mrf.mxu0
          %v906 = vadd.f32 %v782, %v905
          %907 = vmatmul.bf16.gmra.mxu0 %v760
          %v908 = vpop.f32.mrf.mxu0
          %v909 = vadd.f32 %v782, %v908
          %v910 = vpop.f32.mrf.mxu0
          %v911 = vadd.f32 %v782, %v910
          %912 = vmatmul.bf16.gmra.mxu0 %v761
          %v913 = vpop.f32.mrf.mxu0
          %v914 = vadd.f32 %v782, %v913
          %v915 = vpop.f32.mrf.mxu0
          %v916 = vadd.f32 %v782, %v915
          %917 = vmatmul.bf16.gmra.mxu0 %v762
          %v918 = vpop.f32.mrf.mxu0
          %v919 = vadd.f32 %v782, %v918
          %v920 = vpop.f32.mrf.mxu0
          %v921 = vadd.f32 %v782, %v920
          %922 = vdwg.mxu0
          %v923 = vmul.f32 %v875, 0.25
          %v924 = vmul.f32 %v877, 0.25
          %v925 = vmul.f32 %v880, 0.25
          %v926 = vmul.f32 %v882, 0.25
          %v927 = vmul.f32 %v885, 0.25
          %v928 = vmul.f32 %v887, 0.25
          %v929 = vmul.f32 %v890, 0.25
          %v930 = vmul.f32 %v892, 0.25
          %v931 = vpack.c.bf16 %v923, %v923
          %v932 = vpack.c.bf16 %v924, %v924
          %v933 = vpack.c.bf16 %v925, %v925
          %v934 = vpack.c.bf16 %v926, %v926
          %v935 = vpack.c.bf16 %v927, %v927
          %v936 = vpack.c.bf16 %v928, %v928
          %v937 = vpack.c.bf16 %v929, %v929
          %v938 = vpack.c.bf16 %v930, %v930
          %939 = vst [vmem:[#allocation2] sm:$0xf] %v931
          %940 = vst [vmem:[#allocation2 + $0x4] sm:$0xf] %v932
          %941 = vst [vmem:[#allocation2 + $0x8] sm:$0xf] %v933
          %942 = vst [vmem:[#allocation2 + $0xc] sm:$0xf] %v934
          %943 = vst [vmem:[#allocation2 + $0x10] sm:$0xf] %v935
          %944 = vst [vmem:[#allocation2 + $0x14] sm:$0xf] %v936
          %945 = vst [vmem:[#allocation2 + $0x18] sm:$0xf] %v937
          %946 = vst [vmem:[#allocation2 + $0x1c] sm:$0xf] %v938
          %947 = vxpose.xlu0.b32.start [1/16] %v904, 128
          %948 = vxpose.xlu0.b32.cont [2/16] %v906, 128
          %949 = vxpose.xlu0.b32.cont [3/16] %v909, 128
          %950 = vxpose.xlu0.b32.cont [4/16] %v911, 128
          %951 = vxpose.xlu0.b32.cont [5/16] %v914, 128
          %952 = vxpose.xlu0.b32.cont [6/16] %v916, 128
          %953 = vxpose.xlu0.b32.cont [7/16] %v919, 128
          %954 = vxpose.xlu0.b32.cont [8/16] %v921, 128
          %955 = vxpose.xlu0.b32.cont [9/16] 0.0, 128
          %956 = vxpose.xlu0.b32.cont [10/16] 0.0, 128
          %957 = vxpose.xlu0.b32.cont [11/16] 0.0, 128
          %958 = vxpose.xlu0.b32.cont [12/16] 0.0, 128
          %959 = vxpose.xlu0.b32.cont [13/16] 0.0, 128
          %960 = vxpose.xlu0.b32.cont [14/16] 0.0, 128
          %961 = vxpose.xlu0.b32.cont [15/16] 0.0, 128
          %962 = vxpose.xlu0.b32.end [16/16] 0.0, 128
          %v963 = vpop.trf.xlu0
          %v964 = vpop.trf.xlu0
          %v965 = vpop.trf.xlu0
          %v966 = vpop.trf.xlu0
          %v967 = vpop.trf.xlu0
          %v968 = vpop.trf.xlu0
          %v969 = vpop.trf.xlu0
          %v970 = vpop.trf.xlu0
          %v971 = vpop.trf.xlu0
          %v972 = vpop.trf.xlu0
          %v973 = vpop.trf.xlu0
          %v974 = vpop.trf.xlu0
          %v975 = vpop.trf.xlu0
          %v976 = vpop.trf.xlu0
          %v977 = vpop.trf.xlu0
          %v978 = vpop.trf.xlu0
          %v979 = vpack.c.bf16 %v963, %v963
          %v980 = vpack.c.bf16 %v964, %v964
          %v981 = vpack.c.bf16 %v965, %v965
          %v982 = vpack.c.bf16 %v966, %v966
          %v983 = vpack.c.bf16 %v967, %v967
          %v984 = vpack.c.bf16 %v968, %v968
          %v985 = vpack.c.bf16 %v969, %v969
          %v986 = vpack.c.bf16 %v970, %v970
          %v987 = vpack.c.bf16 %v971, %v971
          %v988 = vpack.c.bf16 %v972, %v972
          %v989 = vpack.c.bf16 %v973, %v973
          %v990 = vpack.c.bf16 %v974, %v974
          %v991 = vpack.c.bf16 %v975, %v975
          %v992 = vpack.c.bf16 %v976, %v976
          %v993 = vpack.c.bf16 %v977, %v977
          %v994 = vpack.c.bf16 %v978, %v978
          %vm995 = vcmask 519168
          %996 = vst.msk [vmem:[#allocation3] sm:$0xf] %vm995, %v979
          %997 = vst.msk [vmem:[#allocation3 + $0x4] sm:$0xf] %vm995, %v980
          %998 = vst.msk [vmem:[#allocation3 + $0x8] sm:$0xf] %vm995, %v981
          %999 = vst.msk [vmem:[#allocation3 + $0xc] sm:$0xf] %vm995, %v982
          %1000 = vst.msk [vmem:[#allocation3 + $0x10] sm:$0xf] %vm995, %v983
          %1001 = vst.msk [vmem:[#allocation3 + $0x14] sm:$0xf] %vm995, %v984
          %1002 = vst.msk [vmem:[#allocation3 + $0x18] sm:$0xf] %vm995, %v985
          %1003 = vst.msk [vmem:[#allocation3 + $0x1c] sm:$0xf] %vm995, %v986
          %1004 = vst.msk [vmem:[#allocation3 + $0x20] sm:$0xf] %vm995, %v987
          %1005 = vst.msk [vmem:[#allocation3 + $0x24] sm:$0xf] %vm995, %v988
          %1006 = vst.msk [vmem:[#allocation3 + $0x28] sm:$0xf] %vm995, %v989
          %1007 = vst.msk [vmem:[#allocation3 + $0x2c] sm:$0xf] %vm995, %v990
          %1008 = vst.msk [vmem:[#allocation3 + $0x30] sm:$0xf] %vm995, %v991
          %1009 = vst.msk [vmem:[#allocation3 + $0x34] sm:$0xf] %vm995, %v992
          %1010 = vst.msk [vmem:[#allocation3 + $0x38] sm:$0xf] %vm995, %v993
          %1011 = vst.msk [vmem:[#allocation3 + $0x3c] sm:$0xf] %vm995, %v994
          %v1012 = vpack.c.bf16 %v736, %v735
          %v1013 = vpack.c.bf16 %v738, %v737
          %v1014 = vpack.c.bf16 %v740, %v739
          %v1015 = vpack.c.bf16 %v742, %v741
          %v1016 = vld [vmem:[#allocation13] sm:$0xf]
          %v1017 = vld [vmem:[#allocation13 + $0x4] sm:$0xf]
          %v1018 = vld [vmem:[#allocation13 + $0x8] sm:$0xf]
          %v1019 = vld [vmem:[#allocation13 + $0xc] sm:$0xf]
          %v1020 = vld [vmem:[#allocation13 + $0x10] sm:$0xf]
          %v1021 = vld [vmem:[#allocation13 + $0x14] sm:$0xf]
          %v1022 = vld [vmem:[#allocation13 + $0x18] sm:$0xf]
          %v1023 = vld [vmem:[#allocation13 + $0x1c] sm:$0xf]
          %v1024 = vld [vmem:[#allocation13 + $0x20] sm:$0xf]
          %v1025 = vld [vmem:[#allocation13 + $0x24] sm:$0xf]
          %v1026 = vld [vmem:[#allocation13 + $0x28] sm:$0xf]
          %v1027 = vld [vmem:[#allocation13 + $0x2c] sm:$0xf]
          %v1028 = vld [vmem:[#allocation13 + $0x30] sm:$0xf]
          %v1029 = vld [vmem:[#allocation13 + $0x34] sm:$0xf]
          %v1030 = vld [vmem:[#allocation13 + $0x38] sm:$0xf]
          %v1031 = vld [vmem:[#allocation13 + $0x3c] sm:$0xf]
          %v1032 = vld [vmem:[%s6] sm:$0x1]
          %v1034 = vperm.slane %v1032, 0
          %v1052 = vunpack.c.l.b16 %v1016
          %v1053 = vunpack.c.l.b16 %v1017
          %v1054 = vunpack.c.l.b16 %v1018
          %v1055 = vunpack.c.l.b16 %v1019
          %v1056 = vunpack.c.l.b16 %v1020
          %v1057 = vunpack.c.l.b16 %v1021
          %v1058 = vunpack.c.l.b16 %v1022
          %v1059 = vunpack.c.l.b16 %v1023
          %v1060 = vunpack.c.l.b16 %v1024
          %v1061 = vunpack.c.l.b16 %v1025
          %v1062 = vunpack.c.l.b16 %v1026
          %v1063 = vunpack.c.l.b16 %v1027
          %v1064 = vunpack.c.l.b16 %v1028
          %v1065 = vunpack.c.l.b16 %v1029
          %v1066 = vunpack.c.l.b16 %v1030
          %v1067 = vunpack.c.l.b16 %v1031
          %v1068 = vpack.c.b16 %v1053, %v1052
          %v1069 = vpack.c.b16 %v1055, %v1054
          %v1070 = vpack.c.b16 %v1057, %v1056
          %v1071 = vpack.c.b16 %v1059, %v1058
          %v1072 = vpack.c.b16 %v1061, %v1060
          %v1073 = vpack.c.b16 %v1063, %v1062
          %v1074 = vpack.c.b16 %v1065, %v1064
          %v1075 = vpack.c.b16 %v1067, %v1066
          %1084 = vmatpush.bf16.msra.mxu0 %v1075
          %1085 = vmatpush.bf16.msra.mxu0 %v1074
          %1086 = vmatpush.bf16.msra.mxu0 %v1073
          %1087 = vmatpush.bf16.msra.mxu0 %v1072
          %1088 = vmatpush.bf16.msra.mxu0 %v1071
          %1089 = vmatpush.bf16.msra.mxu0 %v1070
          %1090 = vmatpush.bf16.msra.mxu0 %v1069
          %1091 = vmatpush.bf16.msra.mxu0 %v1068
          %1092 = vmatmul.bf16.gmra.mxu0 %v1012
          %v1093 = vpop.f32.mrf.mxu0
          %v1094 = vadd.f32 %v1034, %v1093
          %v1095 = vpop.f32.mrf.mxu0
          %v1096 = vadd.f32 %v1034, %v1095
          %1097 = vmatmul.bf16.gmra.mxu0 %v1013
          %v1098 = vpop.f32.mrf.mxu0
          %v1099 = vadd.f32 %v1034, %v1098
          %v1100 = vpop.f32.mrf.mxu0
          %v1101 = vadd.f32 %v1034, %v1100
          %1102 = vmatmul.bf16.gmra.mxu0 %v1014
          %v1103 = vpop.f32.mrf.mxu0
          %v1104 = vadd.f32 %v1034, %v1103
          %v1105 = vpop.f32.mrf.mxu0
          %v1106 = vadd.f32 %v1034, %v1105
          %1107 = vmatmul.bf16.gmra.mxu0 %v1015
          %v1108 = vpop.f32.mrf.mxu0
          %v1109 = vadd.f32 %v1034, %v1108
          %v1110 = vpop.f32.mrf.mxu0
          %v1111 = vadd.f32 %v1034, %v1110
          %1112 = vdwg.mxu0
          %v1113 = vpack.c.bf16 %v1094, %v1094
          %v1114 = vpack.c.bf16 %v1096, %v1096
          %v1115 = vpack.c.bf16 %v1099, %v1099
          %v1116 = vpack.c.bf16 %v1101, %v1101
          %v1117 = vpack.c.bf16 %v1104, %v1104
          %v1118 = vpack.c.bf16 %v1106, %v1106
          %v1119 = vpack.c.bf16 %v1109, %v1109
          %v1120 = vpack.c.bf16 %v1111, %v1111
          %1121 = vst [vmem:[#allocation4] sm:$0xf] %v1113
          %1122 = vst [vmem:[#allocation4 + $0x4] sm:$0xf] %v1114
          %1123 = vst [vmem:[#allocation4 + $0x8] sm:$0xf] %v1115
          %1124 = vst [vmem:[#allocation4 + $0xc] sm:$0xf] %v1116
          %1125 = vst [vmem:[#allocation4 + $0x10] sm:$0xf] %v1117
          %1126 = vst [vmem:[#allocation4 + $0x14] sm:$0xf] %v1118
          %1127 = vst [vmem:[#allocation4 + $0x18] sm:$0xf] %v1119
          %1128 = vst [vmem:[#allocation4 + $0x1c] sm:$0xf] %v1120
        $region124: #{tpu_custom_call.1} parent=87 // pred_fallthru
          _
        %s1129 = smul.u32 %s45, 32
        %s1130 = sshra.s32 %s1129, 3
        %s1131 = sand.u32 %s1129, 7
        %s1132 = smul.addr %s1130, 4
        %s1133 = scalar_lea.vmem [#allocation2], %s1132
        %v1134 = vld [vmem:[%s1133] sm:$0xf]
        %v1135 = vld [vmem:[%s1133 + $0x4] sm:$0xf]
        %v1136 = vld [vmem:[%s1133 + $0x8] sm:$0xf]
        %v1137 = vld [vmem:[%s1133 + $0xc] sm:$0xf]
        %v1138 = vld [vmem:[#allocation4] sm:$0xf]
        %v1139 = vld [vmem:[#allocation4 + $0x4] sm:$0xf]
        %v1140 = vld [vmem:[#allocation4 + $0x8] sm:$0xf]
        %v1141 = vld [vmem:[#allocation4 + $0xc] sm:$0xf]
        %v1142 = vld [vmem:[#allocation4 + $0x10] sm:$0xf]
        %v1143 = vld [vmem:[#allocation4 + $0x14] sm:$0xf]
        %v1144 = vld [vmem:[#allocation4 + $0x18] sm:$0xf]
        %v1145 = vld [vmem:[#allocation4 + $0x1c] sm:$0xf]
        %v1146 = vld [vmem:[#allocation3] sm:$0xf]
        %v1147 = vld [vmem:[#allocation3 + $0x4] sm:$0xf]
        %v1152 = vunpack.c.l.b16 %v1134
        %v1153 = vunpack.c.l.b16 %v1135
        %v1154 = vunpack.c.l.b16 %v1136
        %v1155 = vunpack.c.l.b16 %v1137
        %v1156 = vpack.c.b16 %v1153, %v1152
        %v1157 = vpack.c.b16 %v1155, %v1154
        %v1160 = vunpack.c.l.b16 %v1146
        %v1161 = vunpack.c.l.b16 %v1147
        %v1162 = vpack.c.b16 %v1161, %v1160
        %vm1164 = vcmask 130048
        %v1166 = vsel %vm1164, %v1156, 0
        %v1169 = vsel %vm1164, %v1157, 0
        %1171 = vmatpush.bf16.msra.mxu0 0
        %1172 = vmatpush.bf16.msra.mxu0 0
        %1173 = vmatpush.bf16.msra.mxu0 0
        %1174 = vmatpush.bf16.msra.mxu0 0
        %1175 = vmatpush.bf16.msra.mxu0 0
        %1176 = vmatpush.bf16.msra.mxu0 0
        %1177 = vmatpush.bf16.msra.mxu0 0
        %1178 = vmatpush.bf16.msra.mxu0 %v1162
        %1179 = vmatmul.bf16.gmra.mxu0 %v1166
        %v1180 = vpop.f32.mrf.mxu0
        %v1181 = vadd.f32 0.0, %v1180
        %v1182 = vpop.f32.mrf.mxu0
        %v1183 = vadd.f32 0.0, %v1182
        %1184 = vmatmul.bf16.gmra.mxu0 %v1169
        %v1185 = vpop.f32.mrf.mxu0
        %v1186 = vadd.f32 0.0, %v1185
        %v1187 = vpop.f32.mrf.mxu0
        %v1188 = vadd.f32 0.0, %v1187
        %1189 = vdwg.mxu0
        %vm1190 = vcmask 523264
        %v1191 = vsel %vm1190, %v1181, -inf
        %1192 = vmax.xlane.f32.xlu0 %v1191
        %v1193 = vpop.xlane.xlu0 %1192
        %v1194 = vsel %vm1190, %v1183, -inf
        %1195 = vmax.xlane.f32.xlu0 %v1194
        %v1196 = vpop.xlane.xlu0 %1195
        %v1197 = vsel %vm1190, %v1186, -inf
        %1198 = vmax.xlane.f32.xlu0 %v1197
        %v1199 = vpop.xlane.xlu0 %1198
        %v1200 = vsel %vm1190, %v1188, -inf
        %1201 = vmax.xlane.f32.xlu0 %v1200
        %v1202 = vpop.xlane.xlu0 %1201
        %v1203 = vsub.f32 %v1181, %v1193
        %v1204 = vsub.f32 %v1183, %v1196
        %v1205 = vsub.f32 %v1186, %v1199
        %v1206 = vsub.f32 %v1188, %v1202
        %v1207 = vmul.f32 %v1203, 1.442695
        %v1208 = vpow.pop %v1207
        %v1209 = vmul.f32 %v1204, 1.442695
        %v1210 = vpow.pop %v1209
        %v1211 = vmul.f32 %v1205, 1.442695
        %v1212 = vpow.pop %v1211
        %v1213 = vmul.f32 %v1206, 1.442695
        %v1214 = vpow.pop %v1213
        %v1215 = vsel %vm1190, %v1208, 0.0
        %1216 = vadd.xlane.f32.xlu0 %v1215
        %v1217 = vpop.xlane.xlu0 %1216
        %v1218 = vsel %vm1190, %v1210, 0.0
        %1219 = vadd.xlane.f32.xlu0 %v1218
        %v1220 = vpop.xlane.xlu0 %1219
        %v1221 = vsel %vm1190, %v1212, 0.0
        %1222 = vadd.xlane.f32.xlu0 %v1221
        %v1223 = vpop.xlane.xlu0 %1222
        %v1224 = vsel %vm1190, %v1214, 0.0
        %1225 = vadd.xlane.f32.xlu0 %v1224
        %v1226 = vpop.xlane.xlu0 %1225
        %v1227 = vrcp.pop %v1217
        %v1228 = vrcp.pop %v1220
        %v1229 = vrcp.pop %v1223
        %v1230 = vrcp.pop %v1226
        %v1231 = vmul.f32 %v1208, %v1227
        %v1232 = vmul.f32 %v1210, %v1228
        %v1233 = vmul.f32 %v1212, %v1229
        %v1234 = vmul.f32 %v1214, %v1230
        %v1235 = vpack.c.bf16 %v1232, %v1231
        %v1236 = vpack.c.bf16 %v1234, %v1233
        %v1245 = vunpack.c.l.b16 %v1138
        %v1246 = vunpack.c.l.b16 %v1139
        %v1247 = vunpack.c.l.b16 %v1140
        %v1248 = vunpack.c.l.b16 %v1141
        %v1249 = vunpack.c.l.b16 %v1142
        %v1250 = vunpack.c.l.b16 %v1143
        %v1251 = vunpack.c.l.b16 %v1144
        %v1252 = vunpack.c.l.b16 %v1145
        %v1253 = vpack.c.b16 %v1246, %v1245
        %v1254 = vpack.c.b16 %v1248, %v1247
        %v1255 = vpack.c.b16 %v1250, %v1249
        %v1256 = vpack.c.b16 %v1252, %v1251
        %v1262 = vsel %vm1190, %v1235, 0
        %v1265 = vsel %vm1190, %v1236, 0
        %1267 = vmatpush.bf16.msra.mxu0 0
        %1268 = vmatpush.bf16.msra.mxu0 0
        %1269 = vmatpush.bf16.msra.mxu0 0
        %1270 = vmatpush.bf16.msra.mxu0 0
        %1271 = vmatpush.bf16.msra.mxu0 %v1256
        %1272 = vmatpush.bf16.msra.mxu0 %v1255
        %1273 = vmatpush.bf16.msra.mxu0 %v1254
        %1274 = vmatpush.bf16.msra.mxu0 %v1253
        %1275 = vmatmul.bf16.gmra.mxu0 %v1262
        %v1276 = vpop.f32.mrf.mxu0
        %v1277 = vadd.f32 0.0, %v1276
        %v1278 = vpop.f32.mrf.mxu0
        %v1279 = vadd.f32 0.0, %v1278
        %1280 = vmatmul.bf16.gmra.mxu0 %v1265
        %v1281 = vpop.f32.mrf.mxu0
        %v1282 = vadd.f32 0.0, %v1281
        %v1283 = vpop.f32.mrf.mxu0
        %v1284 = vadd.f32 0.0, %v1283
        %1285 = vdwg.mxu0
        %v1286 = vpack.c.bf16 %v1279, %v1277
        %v1287 = vpack.c.bf16 %v1284, %v1282
        %v1288 = vld [vmem:[#allocation14] sm:$0xf]
        %v1289 = vld [vmem:[#allocation14 + $0x4] sm:$0xf]
        %v1290 = vld [vmem:[#allocation3 + $0x8] sm:$0xf]
        %v1291 = vld [vmem:[#allocation3 + $0xc] sm:$0xf]
        %1292 = vrot.lane.b32.xlu0 %v1156, 112
        %v1293 = vpop.permute.xlu0 %1292
        %1294 = vrot.lane.b32.xlu0 %v1157, 112
        %v1295 = vpop.permute.xlu0 %1294
        %v1298 = vunpack.c.l.b16 %v1290
        %v1299 = vunpack.c.l.b16 %v1291
        %v1300 = vpack.c.b16 %v1299, %v1298
        %v1303 = vsel %vm1164, %v1293, 0
        %v1306 = vsel %vm1164, %v1295, 0
        %1308 = vmatpush.bf16.msra.mxu0 0
        %1309 = vmatpush.bf16.msra.mxu0 0
        %1310 = vmatpush.bf16.msra.mxu0 0
        %1311 = vmatpush.bf16.msra.mxu0 0
        %1312 = vmatpush.bf16.msra.mxu0 0
        %1313 = vmatpush.bf16.msra.mxu0 0
        %1314 = vmatpush.bf16.msra.mxu0 0
        %1315 = vmatpush.bf16.msra.mxu0 %v1300
        %1316 = vmatmul.bf16.gmra.mxu0 %v1303
        %v1317 = vpop.f32.mrf.mxu0
        %v1318 = vadd.f32 0.0, %v1317
        %v1319 = vpop.f32.mrf.mxu0
        %v1320 = vadd.f32 0.0, %v1319
        %1321 = vmatmul.bf16.gmra.mxu0 %v1306
        %v1322 = vpop.f32.mrf.mxu0
        %v1323 = vadd.f32 0.0, %v1322
        %v1324 = vpop.f32.mrf.mxu0
        %v1325 = vadd.f32 0.0, %v1324
        %1326 = vdwg.mxu0
        %v1327 = vsel %vm1190, %v1318, -inf
        %1328 = vmax.xlane.f32.xlu0 %v1327
        %v1329 = vpop.xlane.xlu0 %1328
        %v1330 = vsel %vm1190, %v1320, -inf
        %1331 = vmax.xlane.f32.xlu0 %v1330
        %v1332 = vpop.xlane.xlu0 %1331
        %v1333 = vsel %vm1190, %v1323, -inf
        %1334 = vmax.xlane.f32.xlu0 %v1333
        %v1335 = vpop.xlane.xlu0 %1334
        %v1336 = vsel %vm1190, %v1325, -inf
        %1337 = vmax.xlane.f32.xlu0 %v1336
        %v1338 = vpop.xlane.xlu0 %1337
        %v1339 = vsub.f32 %v1318, %v1329
        %v1340 = vsub.f32 %v1320, %v1332
        %v1341 = vsub.f32 %v1323, %v1335
        %v1342 = vsub.f32 %v1325, %v1338
        %v1343 = vmul.f32 %v1339, 1.442695
        %v1344 = vpow.pop %v1343
        %v1345 = vmul.f32 %v1340, 1.442695
        %v1346 = vpow.pop %v1345
        %v1347 = vmul.f32 %v1341, 1.442695
        %v1348 = vpow.pop %v1347
        %v1349 = vmul.f32 %v1342, 1.442695
        %v1350 = vpow.pop %v1349
        %v1351 = vsel %vm1190, %v1344, 0.0
        %1352 = vadd.xlane.f32.xlu0 %v1351
        %v1353 = vpop.xlane.xlu0 %1352
        %v1354 = vsel %vm1190, %v1346, 0.0
        %1355 = vadd.xlane.f32.xlu0 %v1354
        %v1356 = vpop.xlane.xlu0 %1355
        %v1357 = vsel %vm1190, %v1348, 0.0
        %1358 = vadd.xlane.f32.xlu0 %v1357
        %v1359 = vpop.xlane.xlu0 %1358
        %v1360 = vsel %vm1190, %v1350, 0.0
        %1361 = vadd.xlane.f32.xlu0 %v1360
        %v1362 = vpop.xlane.xlu0 %1361
        %v1363 = vrcp.pop %v1353
        %v1364 = vrcp.pop %v1356
        %v1365 = vrcp.pop %v1359
        %v1366 = vrcp.pop %v1362
        %v1367 = vmul.f32 %v1344, %v1363
        %v1368 = vmul.f32 %v1346, %v1364
        %v1369 = vmul.f32 %v1348, %v1365
        %v1370 = vmul.f32 %v1350, %v1366
        %v1371 = vpack.c.bf16 %v1368, %v1367
        %v1372 = vpack.c.bf16 %v1370, %v1369
        %1373 = vrot.lane.b32.xlu0 %v1253, 112
        %v1374 = vpop.permute.xlu0 %1373
        %1375 = vrot.lane.b32.xlu0 %v1254, 112
        %v1376 = vpop.permute.xlu0 %1375
        %1377 = vrot.lane.b32.xlu0 %v1255, 112
        %v1378 = vpop.permute.xlu0 %1377
        %1379 = vrot.lane.b32.xlu0 %v1256, 112
        %v1380 = vpop.permute.xlu0 %1379
        %v1386 = vsel %vm1190, %v1371, 0
        %v1389 = vsel %vm1190, %v1372, 0
        %1391 = vmatpush.bf16.msra.mxu0 0
        %1392 = vmatpush.bf16.msra.mxu0 0
        %1393 = vmatpush.bf16.msra.mxu0 0
        %1394 = vmatpush.bf16.msra.mxu0 0
        %1395 = vmatpush.bf16.msra.mxu0 %v1380
        %1396 = vmatpush.bf16.msra.mxu0 %v1378
        %1397 = vmatpush.bf16.msra.mxu0 %v1376
        %1398 = vmatpush.bf16.msra.mxu0 %v1374
        %1399 = vmatmul.bf16.gmra.mxu0 %v1386
        %v1400 = vpop.f32.mrf.mxu0
        %v1401 = vadd.f32 0.0, %v1400
        %v1402 = vpop.f32.mrf.mxu0
        %v1403 = vadd.f32 0.0, %v1402
        %1404 = vmatmul.bf16.gmra.mxu0 %v1389
        %v1405 = vpop.f32.mrf.mxu0
        %v1406 = vadd.f32 0.0, %v1405
        %v1407 = vpop.f32.mrf.mxu0
        %v1408 = vadd.f32 0.0, %v1407
        %1409 = vdwg.mxu0
        %v1410 = vpack.c.bf16 %v1403, %v1401
        %v1411 = vpack.c.bf16 %v1408, %v1406
        %v1412 = vld [vmem:[#allocation14 + $0x8] sm:$0xf]
        %v1413 = vld [vmem:[#allocation14 + $0xc] sm:$0xf]
        %v1416 = vunpack.c.l.b16 %v1412
        %v1417 = vunpack.c.l.b16 %v1413
        %v1418 = vpack.c.b16 %v1417, %v1416
        %v1421 = vsel %vm1164, %v1410, 0
        %v1424 = vsel %vm1164, %v1411, 0
        %1426 = vmatpush.bf16.msra.mxu0 0
        %1427 = vmatpush.bf16.msra.mxu0 0
        %1428 = vmatpush.bf16.msra.mxu0 0
        %1429 = vmatpush.bf16.msra.mxu0 0
        %1430 = vmatpush.bf16.msra.mxu0 0
        %1431 = vmatpush.bf16.msra.mxu0 0
        %1432 = vmatpush.bf16.msra.mxu0 0
        %1433 = vmatpush.bf16.msra.mxu0 %v1418
        %1434 = vmatmul.bf16.gmra.mxu0 %v1421
        %v1435 = vpop.f32.mrf.mxu0
        %v1436 = vadd.f32 0.0, %v1435
        %v1437 = vpop.f32.mrf.mxu0
        %v1438 = vadd.f32 0.0, %v1437
        %1439 = vmatmul.bf16.gmra.mxu0 %v1424
        %v1440 = vpop.f32.mrf.mxu0
        %v1441 = vadd.f32 0.0, %v1440
        %v1442 = vpop.f32.mrf.mxu0
        %v1443 = vadd.f32 0.0, %v1442
        %1444 = vdwg.mxu0
        %v1447 = vunpack.c.l.b16 %v1288
        %v1448 = vunpack.c.l.b16 %v1289
        %v1449 = vpack.c.b16 %v1448, %v1447
        %v1452 = vsel %vm1164, %v1286, 0
        %v1455 = vsel %vm1164, %v1287, 0
        %1457 = vmatpush.bf16.msra.mxu0 0
        %1458 = vmatpush.bf16.msra.mxu0 0
        %1459 = vmatpush.bf16.msra.mxu0 0
        %1460 = vmatpush.bf16.msra.mxu0 0
        %1461 = vmatpush.bf16.msra.mxu0 0
        %1462 = vmatpush.bf16.msra.mxu0 0
        %1463 = vmatpush.bf16.msra.mxu0 0
        %1464 = vmatpush.bf16.msra.mxu0 %v1449
        %1465 = vmatmul.bf16.gmra.mxu0 %v1452
        %v1466 = vpop.f32.mrf.mxu0
        %v1467 = vadd.f32 %v1436, %v1466
        %v1468 = vpop.f32.mrf.mxu0
        %v1469 = vadd.f32 %v1438, %v1468
        %1470 = vmatmul.bf16.gmra.mxu0 %v1455
        %v1471 = vpop.f32.mrf.mxu0
        %v1472 = vadd.f32 %v1441, %v1471
        %v1473 = vpop.f32.mrf.mxu0
        %v1474 = vadd.f32 %v1443, %v1473
        %1475 = vdwg.mxu0
        %v1476 = vld [vmem:[#allocation3 + $0x10] sm:$0xf]
        %v1477 = vld [vmem:[#allocation3 + $0x14] sm:$0xf]
        %1478 = vrot.lane.b32.xlu0 %v1156, 96
        %v1479 = vpop.permute.xlu0 %1478
        %1480 = vrot.lane.b32.xlu0 %v1157, 96
        %v1481 = vpop.permute.xlu0 %1480
        %v1484 = vunpack.c.l.b16 %v1476
        %v1485 = vunpack.c.l.b16 %v1477
        %v1486 = vpack.c.b16 %v1485, %v1484
        %v1489 = vsel %vm1164, %v1479, 0
        %v1492 = vsel %vm1164, %v1481, 0
        %1494 = vmatpush.bf16.msra.mxu0 0
        %1495 = vmatpush.bf16.msra.mxu0 0
        %1496 = vmatpush.bf16.msra.mxu0 0
        %1497 = vmatpush.bf16.msra.mxu0 0
        %1498 = vmatpush.bf16.msra.mxu0 0
        %1499 = vmatpush.bf16.msra.mxu0 0
        %1500 = vmatpush.bf16.msra.mxu0 0
        %1501 = vmatpush.bf16.msra.mxu0 %v1486
        %1502 = vmatmul.bf16.gmra.mxu0 %v1489
        %v1503 = vpop.f32.mrf.mxu0
        %v1504 = vadd.f32 0.0, %v1503
        %v1505 = vpop.f32.mrf.mxu0
        %v1506 = vadd.f32 0.0, %v1505
        %1507 = vmatmul.bf16.gmra.mxu0 %v1492
        %v1508 = vpop.f32.mrf.mxu0
        %v1509 = vadd.f32 0.0, %v1508
        %v1510 = vpop.f32.mrf.mxu0
        %v1511 = vadd.f32 0.0, %v1510
        %1512 = vdwg.mxu0
        %v1513 = vsel %vm1190, %v1504, -inf
        %1514 = vmax.xlane.f32.xlu0 %v1513
        %v1515 = vpop.xlane.xlu0 %1514
        %v1516 = vsel %vm1190, %v1506, -inf
        %1517 = vmax.xlane.f32.xlu0 %v1516
        %v1518 = vpop.xlane.xlu0 %1517
        %v1519 = vsel %vm1190, %v1509, -inf
        %1520 = vmax.xlane.f32.xlu0 %v1519
        %v1521 = vpop.xlane.xlu0 %1520
        %v1522 = vsel %vm1190, %v1511, -inf
        %1523 = vmax.xlane.f32.xlu0 %v1522
        %v1524 = vpop.xlane.xlu0 %1523
        %v1525 = vsub.f32 %v1504, %v1515
        %v1526 = vsub.f32 %v1506, %v1518
        %v1527 = vsub.f32 %v1509, %v1521
        %v1528 = vsub.f32 %v1511, %v1524
        %v1529 = vmul.f32 %v1525, 1.442695
        %v1530 = vpow.pop %v1529
        %v1531 = vmul.f32 %v1526, 1.442695
        %v1532 = vpow.pop %v1531
        %v1533 = vmul.f32 %v1527, 1.442695
        %v1534 = vpow.pop %v1533
        %v1535 = vmul.f32 %v1528, 1.442695
        %v1536 = vpow.pop %v1535
        %v1537 = vsel %vm1190, %v1530, 0.0
        %1538 = vadd.xlane.f32.xlu0 %v1537
        %v1539 = vpop.xlane.xlu0 %1538
        %v1540 = vsel %vm1190, %v1532, 0.0
        %1541 = vadd.xlane.f32.xlu0 %v1540
        %v1542 = vpop.xlane.xlu0 %1541
        %v1543 = vsel %vm1190, %v1534, 0.0
        %1544 = vadd.xlane.f32.xlu0 %v1543
        %v1545 = vpop.xlane.xlu0 %1544
        %v1546 = vsel %vm1190, %v1536, 0.0
        %1547 = vadd.xlane.f32.xlu0 %v1546
        %v1548 = vpop.xlane.xlu0 %1547
        %v1549 = vrcp.pop %v1539
        %v1550 = vrcp.pop %v1542
        %v1551 = vrcp.pop %v1545
        %v1552 = vrcp.pop %v1548
        %v1553 = vmul.f32 %v1530, %v1549
        %v1554 = vmul.f32 %v1532, %v1550
        %v1555 = vmul.f32 %v1534, %v1551
        %v1556 = vmul.f32 %v1536, %v1552
        %v1557 = vpack.c.bf16 %v1554, %v1553
        %v1558 = vpack.c.bf16 %v1556, %v1555
        %1559 = vrot.lane.b32.xlu0 %v1253, 96
        %v1560 = vpop.permute.xlu0 %1559
        %1561 = vrot.lane.b32.xlu0 %v1254, 96
        %v1562 = vpop.permute.xlu0 %1561
        %1563 = vrot.lane.b32.xlu0 %v1255, 96
        %v1564 = vpop.permute.xlu0 %1563
        %1565 = vrot.lane.b32.xlu0 %v1256, 96
        %v1566 = vpop.permute.xlu0 %1565
        %v1572 = vsel %vm1190, %v1557, 0
        %v1575 = vsel %vm1190, %v1558, 0
        %1577 = vmatpush.bf16.msra.mxu0 0
        %1578 = vmatpush.bf16.msra.mxu0 0
        %1579 = vmatpush.bf16.msra.mxu0 0
        %1580 = vmatpush.bf16.msra.mxu0 0
        %1581 = vmatpush.bf16.msra.mxu0 %v1566
        %1582 = vmatpush.bf16.msra.mxu0 %v1564
        %1583 = vmatpush.bf16.msra.mxu0 %v1562
        %1584 = vmatpush.bf16.msra.mxu0 %v1560
        %1585 = vmatmul.bf16.gmra.mxu0 %v1572
        %v1586 = vpop.f32.mrf.mxu0
        %v1587 = vadd.f32 0.0, %v1586
        %v1588 = vpop.f32.mrf.mxu0
        %v1589 = vadd.f32 0.0, %v1588
        %1590 = vmatmul.bf16.gmra.mxu0 %v1575
        %v1591 = vpop.f32.mrf.mxu0
        %v1592 = vadd.f32 0.0, %v1591
        %v1593 = vpop.f32.mrf.mxu0
        %v1594 = vadd.f32 0.0, %v1593
        %1595 = vdwg.mxu0
        %v1596 = vpack.c.bf16 %v1589, %v1587
        %v1597 = vpack.c.bf16 %v1594, %v1592
        %v1598 = vld [vmem:[#allocation14 + $0x10] sm:$0xf]
        %v1599 = vld [vmem:[#allocation14 + $0x14] sm:$0xf]
        %v1602 = vunpack.c.l.b16 %v1598
        %v1603 = vunpack.c.l.b16 %v1599
        %v1604 = vpack.c.b16 %v1603, %v1602
        %v1607 = vsel %vm1164, %v1596, 0
        %v1610 = vsel %vm1164, %v1597, 0
        %1612 = vmatpush.bf16.msra.mxu0 0
        %1613 = vmatpush.bf16.msra.mxu0 0
        %1614 = vmatpush.bf16.msra.mxu0 0
        %1615 = vmatpush.bf16.msra.mxu0 0
        %1616 = vmatpush.bf16.msra.mxu0 0
        %1617 = vmatpush.bf16.msra.mxu0 0
        %1618 = vmatpush.bf16.msra.mxu0 0
        %1619 = vmatpush.bf16.msra.mxu0 %v1604
        %1620 = vmatmul.bf16.gmra.mxu0 %v1607
        %v1621 = vpop.f32.mrf.mxu0
        %v1622 = vadd.f32 0.0, %v1621
        %v1623 = vpop.f32.mrf.mxu0
        %v1624 = vadd.f32 0.0, %v1623
        %1625 = vmatmul.bf16.gmra.mxu0 %v1610
        %v1626 = vpop.f32.mrf.mxu0
        %v1627 = vadd.f32 0.0, %v1626
        %v1628 = vpop.f32.mrf.mxu0
        %v1629 = vadd.f32 0.0, %v1628
        %1630 = vdwg.mxu0
        %v1631 = vadd.f32 %v1467, %v1622
        %v1632 = vadd.f32 %v1469, %v1624
        %v1633 = vadd.f32 %v1472, %v1627
        %v1634 = vadd.f32 %v1474, %v1629
        %v1635 = vld [vmem:[#allocation3 + $0x18] sm:$0xf]
        %v1636 = vld [vmem:[#allocation3 + $0x1c] sm:$0xf]
        %1637 = vrot.lane.b32.xlu0 %v1156, 80
        %v1638 = vpop.permute.xlu0 %1637
        %1639 = vrot.lane.b32.xlu0 %v1157, 80
        %v1640 = vpop.permute.xlu0 %1639
        %v1643 = vunpack.c.l.b16 %v1635
        %v1644 = vunpack.c.l.b16 %v1636
        %v1645 = vpack.c.b16 %v1644, %v1643
        %v1648 = vsel %vm1164, %v1638, 0
        %v1651 = vsel %vm1164, %v1640, 0
        %1653 = vmatpush.bf16.msra.mxu0 0
        %1654 = vmatpush.bf16.msra.mxu0 0
        %1655 = vmatpush.bf16.msra.mxu0 0
        %1656 = vmatpush.bf16.msra.mxu0 0
        %1657 = vmatpush.bf16.msra.mxu0 0
        %1658 = vmatpush.bf16.msra.mxu0 0
        %1659 = vmatpush.bf16.msra.mxu0 0
        %1660 = vmatpush.bf16.msra.mxu0 %v1645
        %1661 = vmatmul.bf16.gmra.mxu0 %v1648
        %v1662 = vpop.f32.mrf.mxu0
        %v1663 = vadd.f32 0.0, %v1662
        %v1664 = vpop.f32.mrf.mxu0
        %v1665 = vadd.f32 0.0, %v1664
        %1666 = vmatmul.bf16.gmra.mxu0 %v1651
        %v1667 = vpop.f32.mrf.mxu0
        %v1668 = vadd.f32 0.0, %v1667
        %v1669 = vpop.f32.mrf.mxu0
        %v1670 = vadd.f32 0.0, %v1669
        %1671 = vdwg.mxu0
        %v1672 = vsel %vm1190, %v1663, -inf
        %1673 = vmax.xlane.f32.xlu0 %v1672
        %v1674 = vpop.xlane.xlu0 %1673
        %v1675 = vsel %vm1190, %v1665, -inf
        %1676 = vmax.xlane.f32.xlu0 %v1675
        %v1677 = vpop.xlane.xlu0 %1676
        %v1678 = vsel %vm1190, %v1668, -inf
        %1679 = vmax.xlane.f32.xlu0 %v1678
        %v1680 = vpop.xlane.xlu0 %1679
        %v1681 = vsel %vm1190, %v1670, -inf
        %1682 = vmax.xlane.f32.xlu0 %v1681
        %v1683 = vpop.xlane.xlu0 %1682
        %v1684 = vsub.f32 %v1663, %v1674
        %v1685 = vsub.f32 %v1665, %v1677
        %v1686 = vsub.f32 %v1668, %v1680
        %v1687 = vsub.f32 %v1670, %v1683
        %v1688 = vmul.f32 %v1684, 1.442695
        %v1689 = vpow.pop %v1688
        %v1690 = vmul.f32 %v1685, 1.442695
        %v1691 = vpow.pop %v1690
        %v1692 = vmul.f32 %v1686, 1.442695
        %v1693 = vpow.pop %v1692
        %v1694 = vmul.f32 %v1687, 1.442695
        %v1695 = vpow.pop %v1694
        %v1696 = vsel %vm1190, %v1689, 0.0
        %1697 = vadd.xlane.f32.xlu0 %v1696
        %v1698 = vpop.xlane.xlu0 %1697
        %v1699 = vsel %vm1190, %v1691, 0.0
        %1700 = vadd.xlane.f32.xlu0 %v1699
        %v1701 = vpop.xlane.xlu0 %1700
        %v1702 = vsel %vm1190, %v1693, 0.0
        %1703 = vadd.xlane.f32.xlu0 %v1702
        %v1704 = vpop.xlane.xlu0 %1703
        %v1705 = vsel %vm1190, %v1695, 0.0
        %1706 = vadd.xlane.f32.xlu0 %v1705
        %v1707 = vpop.xlane.xlu0 %1706
        %v1708 = vrcp.pop %v1698
        %v1709 = vrcp.pop %v1701
        %v1710 = vrcp.pop %v1704
        %v1711 = vrcp.pop %v1707
        %v1712 = vmul.f32 %v1689, %v1708
        %v1713 = vmul.f32 %v1691, %v1709
        %v1714 = vmul.f32 %v1693, %v1710
        %v1715 = vmul.f32 %v1695, %v1711
        %v1716 = vpack.c.bf16 %v1713, %v1712
        %v1717 = vpack.c.bf16 %v1715, %v1714
        %1718 = vrot.lane.b32.xlu0 %v1253, 80
        %v1719 = vpop.permute.xlu0 %1718
        %1720 = vrot.lane.b32.xlu0 %v1254, 80
        %v1721 = vpop.permute.xlu0 %1720
        %1722 = vrot.lane.b32.xlu0 %v1255, 80
        %v1723 = vpop.permute.xlu0 %1722
        %1724 = vrot.lane.b32.xlu0 %v1256, 80
        %v1725 = vpop.permute.xlu0 %1724
        %v1731 = vsel %vm1190, %v1716, 0
        %v1734 = vsel %vm1190, %v1717, 0
        %1736 = vmatpush.bf16.msra.mxu0 0
        %1737 = vmatpush.bf16.msra.mxu0 0
        %1738 = vmatpush.bf16.msra.mxu0 0
        %1739 = vmatpush.bf16.msra.mxu0 0
        %1740 = vmatpush.bf16.msra.mxu0 %v1725
        %1741 = vmatpush.bf16.msra.mxu0 %v1723
        %1742 = vmatpush.bf16.msra.mxu0 %v1721
        %1743 = vmatpush.bf16.msra.mxu0 %v1719
        %1744 = vmatmul.bf16.gmra.mxu0 %v1731
        %v1745 = vpop.f32.mrf.mxu0
        %v1746 = vadd.f32 0.0, %v1745
        %v1747 = vpop.f32.mrf.mxu0
        %v1748 = vadd.f32 0.0, %v1747
        %1749 = vmatmul.bf16.gmra.mxu0 %v1734
        %v1750 = vpop.f32.mrf.mxu0
        %v1751 = vadd.f32 0.0, %v1750
        %v1752 = vpop.f32.mrf.mxu0
        %v1753 = vadd.f32 0.0, %v1752
        %1754 = vdwg.mxu0
        %v1755 = vpack.c.bf16 %v1748, %v1746
        %v1756 = vpack.c.bf16 %v1753, %v1751
        %v1757 = vld [vmem:[#allocation14 + $0x18] sm:$0xf]
        %v1758 = vld [vmem:[#allocation14 + $0x1c] sm:$0xf]
        %v1761 = vunpack.c.l.b16 %v1757
        %v1762 = vunpack.c.l.b16 %v1758
        %v1763 = vpack.c.b16 %v1762, %v1761
        %v1766 = vsel %vm1164, %v1755, 0
        %v1769 = vsel %vm1164, %v1756, 0
        %1771 = vmatpush.bf16.msra.mxu0 0
        %1772 = vmatpush.bf16.msra.mxu0 0
        %1773 = vmatpush.bf16.msra.mxu0 0
        %1774 = vmatpush.bf16.msra.mxu0 0
        %1775 = vmatpush.bf16.msra.mxu0 0
        %1776 = vmatpush.bf16.msra.mxu0 0
        %1777 = vmatpush.bf16.msra.mxu0 0
        %1778 = vmatpush.bf16.msra.mxu0 %v1763
        %1779 = vmatmul.bf16.gmra.mxu0 %v1766
        %v1780 = vpop.f32.mrf.mxu0
        %v1781 = vadd.f32 0.0, %v1780
        %v1782 = vpop.f32.mrf.mxu0
        %v1783 = vadd.f32 0.0, %v1782
        %1784 = vmatmul.bf16.gmra.mxu0 %v1769
        %v1785 = vpop.f32.mrf.mxu0
        %v1786 = vadd.f32 0.0, %v1785
        %v1787 = vpop.f32.mrf.mxu0
        %v1788 = vadd.f32 0.0, %v1787
        %1789 = vdwg.mxu0
        %v1790 = vadd.f32 %v1631, %v1781
        %v1791 = vadd.f32 %v1632, %v1783
        %v1792 = vadd.f32 %v1633, %v1786
        %v1793 = vadd.f32 %v1634, %v1788
        %v1794 = vld [vmem:[#allocation3 + $0x20] sm:$0xf]
        %v1795 = vld [vmem:[#allocation3 + $0x24] sm:$0xf]
        %1796 = vrot.lane.b32.xlu0 %v1156, 64
        %v1797 = vpop.permute.xlu0 %1796
        %1798 = vrot.lane.b32.xlu0 %v1157, 64
        %v1799 = vpop.permute.xlu0 %1798
        %v1802 = vunpack.c.l.b16 %v1794
        %v1803 = vunpack.c.l.b16 %v1795
        %v1804 = vpack.c.b16 %v1803, %v1802
        %v1807 = vsel %vm1164, %v1797, 0
        %v1810 = vsel %vm1164, %v1799, 0
        %1812 = vmatpush.bf16.msra.mxu0 0
        %1813 = vmatpush.bf16.msra.mxu0 0
        %1814 = vmatpush.bf16.msra.mxu0 0
        %1815 = vmatpush.bf16.msra.mxu0 0
        %1816 = vmatpush.bf16.msra.mxu0 0
        %1817 = vmatpush.bf16.msra.mxu0 0
        %1818 = vmatpush.bf16.msra.mxu0 0
        %1819 = vmatpush.bf16.msra.mxu0 %v1804
        %1820 = vmatmul.bf16.gmra.mxu0 %v1807
        %v1821 = vpop.f32.mrf.mxu0
        %v1822 = vadd.f32 0.0, %v1821
        %v1823 = vpop.f32.mrf.mxu0
        %v1824 = vadd.f32 0.0, %v1823
        %1825 = vmatmul.bf16.gmra.mxu0 %v1810
        %v1826 = vpop.f32.mrf.mxu0
        %v1827 = vadd.f32 0.0, %v1826
        %v1828 = vpop.f32.mrf.mxu0
        %v1829 = vadd.f32 0.0, %v1828
        %1830 = vdwg.mxu0
        %v1831 = vsel %vm1190, %v1822, -inf
        %1832 = vmax.xlane.f32.xlu0 %v1831
        %v1833 = vpop.xlane.xlu0 %1832
        %v1834 = vsel %vm1190, %v1824, -inf
        %1835 = vmax.xlane.f32.xlu0 %v1834
        %v1836 = vpop.xlane.xlu0 %1835
        %v1837 = vsel %vm1190, %v1827, -inf
        %1838 = vmax.xlane.f32.xlu0 %v1837
        %v1839 = vpop.xlane.xlu0 %1838
        %v1840 = vsel %vm1190, %v1829, -inf
        %1841 = vmax.xlane.f32.xlu0 %v1840
        %v1842 = vpop.xlane.xlu0 %1841
        %v1843 = vsub.f32 %v1822, %v1833
        %v1844 = vsub.f32 %v1824, %v1836
        %v1845 = vsub.f32 %v1827, %v1839
        %v1846 = vsub.f32 %v1829, %v1842
        %v1847 = vmul.f32 %v1843, 1.442695
        %v1848 = vpow.pop %v1847
        %v1849 = vmul.f32 %v1844, 1.442695
        %v1850 = vpow.pop %v1849
        %v1851 = vmul.f32 %v1845, 1.442695
        %v1852 = vpow.pop %v1851
        %v1853 = vmul.f32 %v1846, 1.442695
        %v1854 = vpow.pop %v1853
        %v1855 = vsel %vm1190, %v1848, 0.0
        %1856 = vadd.xlane.f32.xlu0 %v1855
        %v1857 = vpop.xlane.xlu0 %1856
        %v1858 = vsel %vm1190, %v1850, 0.0
        %1859 = vadd.xlane.f32.xlu0 %v1858
        %v1860 = vpop.xlane.xlu0 %1859
        %v1861 = vsel %vm1190, %v1852, 0.0
        %1862 = vadd.xlane.f32.xlu0 %v1861
        %v1863 = vpop.xlane.xlu0 %1862
        %v1864 = vsel %vm1190, %v1854, 0.0
        %1865 = vadd.xlane.f32.xlu0 %v1864
        %v1866 = vpop.xlane.xlu0 %1865
        %v1867 = vrcp.pop %v1857
        %v1868 = vrcp.pop %v1860
        %v1869 = vrcp.pop %v1863
        %v1870 = vrcp.pop %v1866
        %v1871 = vmul.f32 %v1848, %v1867
        %v1872 = vmul.f32 %v1850, %v1868
        %v1873 = vmul.f32 %v1852, %v1869
        %v1874 = vmul.f32 %v1854, %v1870
        %v1875 = vpack.c.bf16 %v1872, %v1871
        %v1876 = vpack.c.bf16 %v1874, %v1873
        %1877 = vrot.lane.b32.xlu0 %v1253, 64
        %v1878 = vpop.permute.xlu0 %1877
        %1879 = vrot.lane.b32.xlu0 %v1254, 64
        %v1880 = vpop.permute.xlu0 %1879
        %1881 = vrot.lane.b32.xlu0 %v1255, 64
        %v1882 = vpop.permute.xlu0 %1881
        %1883 = vrot.lane.b32.xlu0 %v1256, 64
        %v1884 = vpop.permute.xlu0 %1883
        %v1890 = vsel %vm1190, %v1875, 0
        %v1893 = vsel %vm1190, %v1876, 0
        %1895 = vmatpush.bf16.msra.mxu0 0
        %1896 = vmatpush.bf16.msra.mxu0 0
        %1897 = vmatpush.bf16.msra.mxu0 0
        %1898 = vmatpush.bf16.msra.mxu0 0
        %1899 = vmatpush.bf16.msra.mxu0 %v1884
        %1900 = vmatpush.bf16.msra.mxu0 %v1882
        %1901 = vmatpush.bf16.msra.mxu0 %v1880
        %1902 = vmatpush.bf16.msra.mxu0 %v1878
        %1903 = vmatmul.bf16.gmra.mxu0 %v1890
        %v1904 = vpop.f32.mrf.mxu0
        %v1905 = vadd.f32 0.0, %v1904
        %v1906 = vpop.f32.mrf.mxu0
        %v1907 = vadd.f32 0.0, %v1906
        %1908 = vmatmul.bf16.gmra.mxu0 %v1893
        %v1909 = vpop.f32.mrf.mxu0
        %v1910 = vadd.f32 0.0, %v1909
        %v1911 = vpop.f32.mrf.mxu0
        %v1912 = vadd.f32 0.0, %v1911
        %1913 = vdwg.mxu0
        %v1914 = vpack.c.bf16 %v1907, %v1905
        %v1915 = vpack.c.bf16 %v1912, %v1910
        %v1916 = vld [vmem:[#allocation14 + $0x20] sm:$0xf]
        %v1917 = vld [vmem:[#allocation14 + $0x24] sm:$0xf]
        %v1920 = vunpack.c.l.b16 %v1916
        %v1921 = vunpack.c.l.b16 %v1917
        %v1922 = vpack.c.b16 %v1921, %v1920
        %v1925 = vsel %vm1164, %v1914, 0
        %v1928 = vsel %vm1164, %v1915, 0
        %1930 = vmatpush.bf16.msra.mxu0 0
        %1931 = vmatpush.bf16.msra.mxu0 0
        %1932 = vmatpush.bf16.msra.mxu0 0
        %1933 = vmatpush.bf16.msra.mxu0 0
        %1934 = vmatpush.bf16.msra.mxu0 0
        %1935 = vmatpush.bf16.msra.mxu0 0
        %1936 = vmatpush.bf16.msra.mxu0 0
        %1937 = vmatpush.bf16.msra.mxu0 %v1922
        %1938 = vmatmul.bf16.gmra.mxu0 %v1925
        %v1939 = vpop.f32.mrf.mxu0
        %v1940 = vadd.f32 0.0, %v1939
        %v1941 = vpop.f32.mrf.mxu0
        %v1942 = vadd.f32 0.0, %v1941
        %1943 = vmatmul.bf16.gmra.mxu0 %v1928
        %v1944 = vpop.f32.mrf.mxu0
        %v1945 = vadd.f32 0.0, %v1944
        %v1946 = vpop.f32.mrf.mxu0
        %v1947 = vadd.f32 0.0, %v1946
        %1948 = vdwg.mxu0
        %v1949 = vadd.f32 %v1790, %v1940
        %v1950 = vadd.f32 %v1791, %v1942
        %v1951 = vadd.f32 %v1792, %v1945
        %v1952 = vadd.f32 %v1793, %v1947
        %v1953 = vld [vmem:[#allocation3 + $0x28] sm:$0xf]
        %v1954 = vld [vmem:[#allocation3 + $0x2c] sm:$0xf]
        %1955 = vrot.lane.b32.xlu0 %v1156, 48
        %v1956 = vpop.permute.xlu0 %1955
        %1957 = vrot.lane.b32.xlu0 %v1157, 48
        %v1958 = vpop.permute.xlu0 %1957
        %v1961 = vunpack.c.l.b16 %v1953
        %v1962 = vunpack.c.l.b16 %v1954
        %v1963 = vpack.c.b16 %v1962, %v1961
        %v1966 = vsel %vm1164, %v1956, 0
        %v1969 = vsel %vm1164, %v1958, 0
        %1971 = vmatpush.bf16.msra.mxu0 0
        %1972 = vmatpush.bf16.msra.mxu0 0
        %1973 = vmatpush.bf16.msra.mxu0 0
        %1974 = vmatpush.bf16.msra.mxu0 0
        %1975 = vmatpush.bf16.msra.mxu0 0
        %1976 = vmatpush.bf16.msra.mxu0 0
        %1977 = vmatpush.bf16.msra.mxu0 0
        %1978 = vmatpush.bf16.msra.mxu0 %v1963
        %1979 = vmatmul.bf16.gmra.mxu0 %v1966
        %v1980 = vpop.f32.mrf.mxu0
        %v1981 = vadd.f32 0.0, %v1980
        %v1982 = vpop.f32.mrf.mxu0
        %v1983 = vadd.f32 0.0, %v1982
        %1984 = vmatmul.bf16.gmra.mxu0 %v1969
        %v1985 = vpop.f32.mrf.mxu0
        %v1986 = vadd.f32 0.0, %v1985
        %v1987 = vpop.f32.mrf.mxu0
        %v1988 = vadd.f32 0.0, %v1987
        %1989 = vdwg.mxu0
        %v1990 = vsel %vm1190, %v1981, -inf
        %1991 = vmax.xlane.f32.xlu0 %v1990
        %v1992 = vpop.xlane.xlu0 %1991
        %v1993 = vsel %vm1190, %v1983, -inf
        %1994 = vmax.xlane.f32.xlu0 %v1993
        %v1995 = vpop.xlane.xlu0 %1994
        %v1996 = vsel %vm1190, %v1986, -inf
        %1997 = vmax.xlane.f32.xlu0 %v1996
        %v1998 = vpop.xlane.xlu0 %1997
        %v1999 = vsel %vm1190, %v1988, -inf
        %2000 = vmax.xlane.f32.xlu0 %v1999
        %v2001 = vpop.xlane.xlu0 %2000
        %v2002 = vsub.f32 %v1981, %v1992
        %v2003 = vsub.f32 %v1983, %v1995
        %v2004 = vsub.f32 %v1986, %v1998
        %v2005 = vsub.f32 %v1988, %v2001
        %v2006 = vmul.f32 %v2002, 1.442695
        %v2007 = vpow.pop %v2006
        %v2008 = vmul.f32 %v2003, 1.442695
        %v2009 = vpow.pop %v2008
        %v2010 = vmul.f32 %v2004, 1.442695
        %v2011 = vpow.pop %v2010
        %v2012 = vmul.f32 %v2005, 1.442695
        %v2013 = vpow.pop %v2012
        %v2014 = vsel %vm1190, %v2007, 0.0
        %2015 = vadd.xlane.f32.xlu0 %v2014
        %v2016 = vpop.xlane.xlu0 %2015
        %v2017 = vsel %vm1190, %v2009, 0.0
        %2018 = vadd.xlane.f32.xlu0 %v2017
        %v2019 = vpop.xlane.xlu0 %2018
        %v2020 = vsel %vm1190, %v2011, 0.0
        %2021 = vadd.xlane.f32.xlu0 %v2020
        %v2022 = vpop.xlane.xlu0 %2021
        %v2023 = vsel %vm1190, %v2013, 0.0
        %2024 = vadd.xlane.f32.xlu0 %v2023
        %v2025 = vpop.xlane.xlu0 %2024
        %v2026 = vrcp.pop %v2016
        %v2027 = vrcp.pop %v2019
        %v2028 = vrcp.pop %v2022
        %v2029 = vrcp.pop %v2025
        %v2030 = vmul.f32 %v2007, %v2026
        %v2031 = vmul.f32 %v2009, %v2027
        %v2032 = vmul.f32 %v2011, %v2028
        %v2033 = vmul.f32 %v2013, %v2029
        %v2034 = vpack.c.bf16 %v2031, %v2030
        %v2035 = vpack.c.bf16 %v2033, %v2032
        %2036 = vrot.lane.b32.xlu0 %v1253, 48
        %v2037 = vpop.permute.xlu0 %2036
        %2038 = vrot.lane.b32.xlu0 %v1254, 48
        %v2039 = vpop.permute.xlu0 %2038
        %2040 = vrot.lane.b32.xlu0 %v1255, 48
        %v2041 = vpop.permute.xlu0 %2040
        %2042 = vrot.lane.b32.xlu0 %v1256, 48
        %v2043 = vpop.permute.xlu0 %2042
        %v2049 = vsel %vm1190, %v2034, 0
        %v2052 = vsel %vm1190, %v2035, 0
        %2054 = vmatpush.bf16.msra.mxu0 0
        %2055 = vmatpush.bf16.msra.mxu0 0
        %2056 = vmatpush.bf16.msra.mxu0 0
        %2057 = vmatpush.bf16.msra.mxu0 0
        %2058 = vmatpush.bf16.msra.mxu0 %v2043
        %2059 = vmatpush.bf16.msra.mxu0 %v2041
        %2060 = vmatpush.bf16.msra.mxu0 %v2039
        %2061 = vmatpush.bf16.msra.mxu0 %v2037
        %2062 = vmatmul.bf16.gmra.mxu0 %v2049
        %v2063 = vpop.f32.mrf.mxu0
        %v2064 = vadd.f32 0.0, %v2063
        %v2065 = vpop.f32.mrf.mxu0
        %v2066 = vadd.f32 0.0, %v2065
        %2067 = vmatmul.bf16.gmra.mxu0 %v2052
        %v2068 = vpop.f32.mrf.mxu0
        %v2069 = vadd.f32 0.0, %v2068
        %v2070 = vpop.f32.mrf.mxu0
        %v2071 = vadd.f32 0.0, %v2070
        %2072 = vdwg.mxu0
        %v2073 = vpack.c.bf16 %v2066, %v2064
        %v2074 = vpack.c.bf16 %v2071, %v2069
        %v2075 = vld [vmem:[#allocation14 + $0x28] sm:$0xf]
        %v2076 = vld [vmem:[#allocation14 + $0x2c] sm:$0xf]
        %v2079 = vunpack.c.l.b16 %v2075
        %v2080 = vunpack.c.l.b16 %v2076
        %v2081 = vpack.c.b16 %v2080, %v2079
        %v2084 = vsel %vm1164, %v2073, 0
        %v2087 = vsel %vm1164, %v2074, 0
        %2089 = vmatpush.bf16.msra.mxu0 0
        %2090 = vmatpush.bf16.msra.mxu0 0
        %2091 = vmatpush.bf16.msra.mxu0 0
        %2092 = vmatpush.bf16.msra.mxu0 0
        %2093 = vmatpush.bf16.msra.mxu0 0
        %2094 = vmatpush.bf16.msra.mxu0 0
        %2095 = vmatpush.bf16.msra.mxu0 0
        %2096 = vmatpush.bf16.msra.mxu0 %v2081
        %2097 = vmatmul.bf16.gmra.mxu0 %v2084
        %v2098 = vpop.f32.mrf.mxu0
        %v2099 = vadd.f32 0.0, %v2098
        %v2100 = vpop.f32.mrf.mxu0
        %v2101 = vadd.f32 0.0, %v2100
        %2102 = vmatmul.bf16.gmra.mxu0 %v2087
        %v2103 = vpop.f32.mrf.mxu0
        %v2104 = vadd.f32 0.0, %v2103
        %v2105 = vpop.f32.mrf.mxu0
        %v2106 = vadd.f32 0.0, %v2105
        %2107 = vdwg.mxu0
        %v2108 = vadd.f32 %v1949, %v2099
        %v2109 = vadd.f32 %v1950, %v2101
        %v2110 = vadd.f32 %v1951, %v2104
        %v2111 = vadd.f32 %v1952, %v2106
        %v2112 = vld [vmem:[#allocation3 + $0x30] sm:$0xf]
        %v2113 = vld [vmem:[#allocation3 + $0x34] sm:$0xf]
        %2114 = vrot.lane.b32.xlu0 %v1156, 32
        %v2115 = vpop.permute.xlu0 %2114
        %2116 = vrot.lane.b32.xlu0 %v1157, 32
        %v2117 = vpop.permute.xlu0 %2116
        %v2120 = vunpack.c.l.b16 %v2112
        %v2121 = vunpack.c.l.b16 %v2113
        %v2122 = vpack.c.b16 %v2121, %v2120
        %v2125 = vsel %vm1164, %v2115, 0
        %v2128 = vsel %vm1164, %v2117, 0
        %2130 = vmatpush.bf16.msra.mxu0 0
        %2131 = vmatpush.bf16.msra.mxu0 0
        %2132 = vmatpush.bf16.msra.mxu0 0
        %2133 = vmatpush.bf16.msra.mxu0 0
        %2134 = vmatpush.bf16.msra.mxu0 0
        %2135 = vmatpush.bf16.msra.mxu0 0
        %2136 = vmatpush.bf16.msra.mxu0 0
        %2137 = vmatpush.bf16.msra.mxu0 %v2122
        %2138 = vmatmul.bf16.gmra.mxu0 %v2125
        %v2139 = vpop.f32.mrf.mxu0
        %v2140 = vadd.f32 0.0, %v2139
        %v2141 = vpop.f32.mrf.mxu0
        %v2142 = vadd.f32 0.0, %v2141
        %2143 = vmatmul.bf16.gmra.mxu0 %v2128
        %v2144 = vpop.f32.mrf.mxu0
        %v2145 = vadd.f32 0.0, %v2144
        %v2146 = vpop.f32.mrf.mxu0
        %v2147 = vadd.f32 0.0, %v2146
        %2148 = vdwg.mxu0
        %v2149 = vsel %vm1190, %v2140, -inf
        %2150 = vmax.xlane.f32.xlu0 %v2149
        %v2151 = vpop.xlane.xlu0 %2150
        %v2152 = vsel %vm1190, %v2142, -inf
        %2153 = vmax.xlane.f32.xlu0 %v2152
        %v2154 = vpop.xlane.xlu0 %2153
        %v2155 = vsel %vm1190, %v2145, -inf
        %2156 = vmax.xlane.f32.xlu0 %v2155
        %v2157 = vpop.xlane.xlu0 %2156
        %v2158 = vsel %vm1190, %v2147, -inf
        %2159 = vmax.xlane.f32.xlu0 %v2158
        %v2160 = vpop.xlane.xlu0 %2159
        %v2161 = vsub.f32 %v2140, %v2151
        %v2162 = vsub.f32 %v2142, %v2154
        %v2163 = vsub.f32 %v2145, %v2157
        %v2164 = vsub.f32 %v2147, %v2160
        %v2165 = vmul.f32 %v2161, 1.442695
        %v2166 = vpow.pop %v2165
        %v2167 = vmul.f32 %v2162, 1.442695
        %v2168 = vpow.pop %v2167
        %v2169 = vmul.f32 %v2163, 1.442695
        %v2170 = vpow.pop %v2169
        %v2171 = vmul.f32 %v2164, 1.442695
        %v2172 = vpow.pop %v2171
        %v2173 = vsel %vm1190, %v2166, 0.0
        %2174 = vadd.xlane.f32.xlu0 %v2173
        %v2175 = vpop.xlane.xlu0 %2174
        %v2176 = vsel %vm1190, %v2168, 0.0
        %2177 = vadd.xlane.f32.xlu0 %v2176
        %v2178 = vpop.xlane.xlu0 %2177
        %v2179 = vsel %vm1190, %v2170, 0.0
        %2180 = vadd.xlane.f32.xlu0 %v2179
        %v2181 = vpop.xlane.xlu0 %2180
        %v2182 = vsel %vm1190, %v2172, 0.0
        %2183 = vadd.xlane.f32.xlu0 %v2182
        %v2184 = vpop.xlane.xlu0 %2183
        %v2185 = vrcp.pop %v2175
        %v2186 = vrcp.pop %v2178
        %v2187 = vrcp.pop %v2181
        %v2188 = vrcp.pop %v2184
        %v2189 = vmul.f32 %v2166, %v2185
        %v2190 = vmul.f32 %v2168, %v2186
        %v2191 = vmul.f32 %v2170, %v2187
        %v2192 = vmul.f32 %v2172, %v2188
        %v2193 = vpack.c.bf16 %v2190, %v2189
        %v2194 = vpack.c.bf16 %v2192, %v2191
        %2195 = vrot.lane.b32.xlu0 %v1253, 32
        %v2196 = vpop.permute.xlu0 %2195
        %2197 = vrot.lane.b32.xlu0 %v1254, 32
        %v2198 = vpop.permute.xlu0 %2197
        %2199 = vrot.lane.b32.xlu0 %v1255, 32
        %v2200 = vpop.permute.xlu0 %2199
        %2201 = vrot.lane.b32.xlu0 %v1256, 32
        %v2202 = vpop.permute.xlu0 %2201
        %v2208 = vsel %vm1190, %v2193, 0
        %v2211 = vsel %vm1190, %v2194, 0
        %2213 = vmatpush.bf16.msra.mxu0 0
        %2214 = vmatpush.bf16.msra.mxu0 0
        %2215 = vmatpush.bf16.msra.mxu0 0
        %2216 = vmatpush.bf16.msra.mxu0 0
        %2217 = vmatpush.bf16.msra.mxu0 %v2202
        %2218 = vmatpush.bf16.msra.mxu0 %v2200
        %2219 = vmatpush.bf16.msra.mxu0 %v2198
        %2220 = vmatpush.bf16.msra.mxu0 %v2196
        %2221 = vmatmul.bf16.gmra.mxu0 %v2208
        %v2222 = vpop.f32.mrf.mxu0
        %v2223 = vadd.f32 0.0, %v2222
        %v2224 = vpop.f32.mrf.mxu0
        %v2225 = vadd.f32 0.0, %v2224
        %2226 = vmatmul.bf16.gmra.mxu0 %v2211
        %v2227 = vpop.f32.mrf.mxu0
        %v2228 = vadd.f32 0.0, %v2227
        %v2229 = vpop.f32.mrf.mxu0
        %v2230 = vadd.f32 0.0, %v2229
        %2231 = vdwg.mxu0
        %v2232 = vpack.c.bf16 %v2225, %v2223
        %v2233 = vpack.c.bf16 %v2230, %v2228
        %v2234 = vld [vmem:[#allocation14 + $0x30] sm:$0xf]
        %v2235 = vld [vmem:[#allocation14 + $0x34] sm:$0xf]
        %v2238 = vunpack.c.l.b16 %v2234
        %v2239 = vunpack.c.l.b16 %v2235
        %v2240 = vpack.c.b16 %v2239, %v2238
        %v2243 = vsel %vm1164, %v2232, 0
        %v2246 = vsel %vm1164, %v2233, 0
        %2248 = vmatpush.bf16.msra.mxu0 0
        %2249 = vmatpush.bf16.msra.mxu0 0
        %2250 = vmatpush.bf16.msra.mxu0 0
        %2251 = vmatpush.bf16.msra.mxu0 0
        %2252 = vmatpush.bf16.msra.mxu0 0
        %2253 = vmatpush.bf16.msra.mxu0 0
        %2254 = vmatpush.bf16.msra.mxu0 0
        %2255 = vmatpush.bf16.msra.mxu0 %v2240
        %2256 = vmatmul.bf16.gmra.mxu0 %v2243
        %v2257 = vpop.f32.mrf.mxu0
        %v2258 = vadd.f32 0.0, %v2257
        %v2259 = vpop.f32.mrf.mxu0
        %v2260 = vadd.f32 0.0, %v2259
        %2261 = vmatmul.bf16.gmra.mxu0 %v2246
        %v2262 = vpop.f32.mrf.mxu0
        %v2263 = vadd.f32 0.0, %v2262
        %v2264 = vpop.f32.mrf.mxu0
        %v2265 = vadd.f32 0.0, %v2264
        %2266 = vdwg.mxu0
        %v2267 = vadd.f32 %v2108, %v2258
        %v2268 = vadd.f32 %v2109, %v2260
        %v2269 = vadd.f32 %v2110, %v2263
        %v2270 = vadd.f32 %v2111, %v2265
        %v2271 = vld [vmem:[#allocation3 + $0x38] sm:$0xf]
        %v2272 = vld [vmem:[#allocation3 + $0x3c] sm:$0xf]
        %2273 = vrot.lane.b32.xlu0 %v1156, 16
        %v2274 = vpop.permute.xlu0 %2273
        %2275 = vrot.lane.b32.xlu0 %v1157, 16
        %v2276 = vpop.permute.xlu0 %2275
        %v2279 = vunpack.c.l.b16 %v2271
        %v2280 = vunpack.c.l.b16 %v2272
        %v2281 = vpack.c.b16 %v2280, %v2279
        %v2284 = vsel %vm1164, %v2274, 0
        %v2287 = vsel %vm1164, %v2276, 0
        %2289 = vmatpush.bf16.msra.mxu0 0
        %2290 = vmatpush.bf16.msra.mxu0 0
        %2291 = vmatpush.bf16.msra.mxu0 0
        %2292 = vmatpush.bf16.msra.mxu0 0
        %2293 = vmatpush.bf16.msra.mxu0 0
        %2294 = vmatpush.bf16.msra.mxu0 0
        %2295 = vmatpush.bf16.msra.mxu0 0
        %2296 = vmatpush.bf16.msra.mxu0 %v2281
        %2297 = vmatmul.bf16.gmra.mxu0 %v2284
        %v2298 = vpop.f32.mrf.mxu0
        %v2299 = vadd.f32 0.0, %v2298
        %v2300 = vpop.f32.mrf.mxu0
        %v2301 = vadd.f32 0.0, %v2300
        %2302 = vmatmul.bf16.gmra.mxu0 %v2287
        %v2303 = vpop.f32.mrf.mxu0
        %v2304 = vadd.f32 0.0, %v2303
        %v2305 = vpop.f32.mrf.mxu0
        %v2306 = vadd.f32 0.0, %v2305
        %2307 = vdwg.mxu0
        %v2308 = vsel %vm1190, %v2299, -inf
        %2309 = vmax.xlane.f32.xlu0 %v2308
        %v2310 = vpop.xlane.xlu0 %2309
        %v2311 = vsel %vm1190, %v2301, -inf
        %2312 = vmax.xlane.f32.xlu0 %v2311
        %v2313 = vpop.xlane.xlu0 %2312
        %v2314 = vsel %vm1190, %v2304, -inf
        %2315 = vmax.xlane.f32.xlu0 %v2314
        %v2316 = vpop.xlane.xlu0 %2315
        %v2317 = vsel %vm1190, %v2306, -inf
        %2318 = vmax.xlane.f32.xlu0 %v2317
        %v2319 = vpop.xlane.xlu0 %2318
        %v2320 = vsub.f32 %v2299, %v2310
        %v2321 = vsub.f32 %v2301, %v2313
        %v2322 = vsub.f32 %v2304, %v2316
        %v2323 = vsub.f32 %v2306, %v2319
        %v2324 = vmul.f32 %v2320, 1.442695
        %v2325 = vpow.pop %v2324
        %v2326 = vmul.f32 %v2321, 1.442695
        %v2327 = vpow.pop %v2326
        %v2328 = vmul.f32 %v2322, 1.442695
        %v2329 = vpow.pop %v2328
        %v2330 = vmul.f32 %v2323, 1.442695
        %v2331 = vpow.pop %v2330
        %v2332 = vsel %vm1190, %v2325, 0.0
        %2333 = vadd.xlane.f32.xlu0 %v2332
        %v2334 = vpop.xlane.xlu0 %2333
        %v2335 = vsel %vm1190, %v2327, 0.0
        %2336 = vadd.xlane.f32.xlu0 %v2335
        %v2337 = vpop.xlane.xlu0 %2336
        %v2338 = vsel %vm1190, %v2329, 0.0
        %2339 = vadd.xlane.f32.xlu0 %v2338
        %v2340 = vpop.xlane.xlu0 %2339
        %v2341 = vsel %vm1190, %v2331, 0.0
        %2342 = vadd.xlane.f32.xlu0 %v2341
        %v2343 = vpop.xlane.xlu0 %2342
        %v2344 = vrcp.pop %v2334
        %v2345 = vrcp.pop %v2337
        %v2346 = vrcp.pop %v2340
        %v2347 = vrcp.pop %v2343
        %v2348 = vmul.f32 %v2325, %v2344
        %v2349 = vmul.f32 %v2327, %v2345
        %v2350 = vmul.f32 %v2329, %v2346
        %v2351 = vmul.f32 %v2331, %v2347
        %v2352 = vpack.c.bf16 %v2349, %v2348
        %v2353 = vpack.c.bf16 %v2351, %v2350
        %2354 = vrot.lane.b32.xlu0 %v1253, 16
        %v2355 = vpop.permute.xlu0 %2354
        %2356 = vrot.lane.b32.xlu0 %v1254, 16
        %v2357 = vpop.permute.xlu0 %2356
        %2358 = vrot.lane.b32.xlu0 %v1255, 16
        %v2359 = vpop.permute.xlu0 %2358
        %2360 = vrot.lane.b32.xlu0 %v1256, 16
        %v2361 = vpop.permute.xlu0 %2360
        %v2367 = vsel %vm1190, %v2352, 0
        %v2370 = vsel %vm1190, %v2353, 0
        %2372 = vmatpush.bf16.msra.mxu0 0
        %2373 = vmatpush.bf16.msra.mxu0 0
        %2374 = vmatpush.bf16.msra.mxu0 0
        %2375 = vmatpush.bf16.msra.mxu0 0
        %2376 = vmatpush.bf16.msra.mxu0 %v2361
        %2377 = vmatpush.bf16.msra.mxu0 %v2359
        %2378 = vmatpush.bf16.msra.mxu0 %v2357
        %2379 = vmatpush.bf16.msra.mxu0 %v2355
        %2380 = vmatmul.bf16.gmra.mxu0 %v2367
        %v2381 = vpop.f32.mrf.mxu0
        %v2382 = vadd.f32 0.0, %v2381
        %v2383 = vpop.f32.mrf.mxu0
        %v2384 = vadd.f32 0.0, %v2383
        %2385 = vmatmul.bf16.gmra.mxu0 %v2370
        %v2386 = vpop.f32.mrf.mxu0
        %v2387 = vadd.f32 0.0, %v2386
        %v2388 = vpop.f32.mrf.mxu0
        %v2389 = vadd.f32 0.0, %v2388
        %2390 = vdwg.mxu0
        %v2391 = vpack.c.bf16 %v2384, %v2382
        %v2392 = vpack.c.bf16 %v2389, %v2387
        %v2393 = vld [vmem:[#allocation14 + $0x38] sm:$0xf]
        %v2394 = vld [vmem:[#allocation14 + $0x3c] sm:$0xf]
        %v2397 = vunpack.c.l.b16 %v2393
        %v2398 = vunpack.c.l.b16 %v2394
        %v2399 = vpack.c.b16 %v2398, %v2397
        %v2402 = vsel %vm1164, %v2391, 0
        %v2405 = vsel %vm1164, %v2392, 0
        %2407 = vmatpush.bf16.msra.mxu0 0
        %2408 = vmatpush.bf16.msra.mxu0 0
        %2409 = vmatpush.bf16.msra.mxu0 0
        %2410 = vmatpush.bf16.msra.mxu0 0
        %2411 = vmatpush.bf16.msra.mxu0 0
        %2412 = vmatpush.bf16.msra.mxu0 0
        %2413 = vmatpush.bf16.msra.mxu0 0
        %2414 = vmatpush.bf16.msra.mxu0 %v2399
        %2415 = vmatmul.bf16.gmra.mxu0 %v2402
        %v2416 = vpop.f32.mrf.mxu0
        %v2417 = vadd.f32 0.0, %v2416
        %v2418 = vpop.f32.mrf.mxu0
        %v2419 = vadd.f32 0.0, %v2418
        %2420 = vmatmul.bf16.gmra.mxu0 %v2405
        %v2421 = vpop.f32.mrf.mxu0
        %v2422 = vadd.f32 0.0, %v2421
        %v2423 = vpop.f32.mrf.mxu0
        %v2424 = vadd.f32 0.0, %v2423
        %2425 = vdwg.mxu0
        %v2426 = vadd.f32 %v2267, %v2417
        %v2427 = vadd.f32 %v2268, %v2419
        %v2428 = vadd.f32 %v2269, %v2422
        %v2429 = vadd.f32 %v2270, %v2424
        %v2430 = vld [vmem:[%s8] sm:$0x1]
        %v2432 = vperm.slane %v2430, 0
        %v2434 = vadd.f32 %v2426, %v2432
        %v2435 = vadd.f32 %v2427, %v2432
        %v2436 = vadd.f32 %v2428, %v2432
        %v2437 = vadd.f32 %v2429, %v2432
        %v2438 = vld [vmem:[%s631] sm:$0xff]
        %v2439 = vld [vmem:[%s631 + $0x8] sm:$0xff]
        %v2440 = vld [vmem:[%s631 + $0x10] sm:$0xff]
        %v2441 = vld [vmem:[%s631 + $0x18] sm:$0xff]
        %v2442 = vadd.f32 %v2438, %v2434
        %v2443 = vadd.f32 %v2439, %v2435
        %v2444 = vadd.f32 %v2440, %v2436
        %v2445 = vadd.f32 %v2441, %v2437
        %v2446 = vld [vmem:[%s13] sm:$0x1]
        %v2447 = vld [vmem:[%s14] sm:$0x1]
        %2448 = vadd.xlane.f32.xlu0 %v2442
        %v2449 = vpop.xlane.xlu0 %2448
        %2450 = vadd.xlane.f32.xlu0 %v2443
        %v2451 = vpop.xlane.xlu0 %2450
        %2452 = vadd.xlane.f32.xlu0 %v2444
        %v2453 = vpop.xlane.xlu0 %2452
        %2454 = vadd.xlane.f32.xlu0 %v2445
        %v2455 = vpop.xlane.xlu0 %2454
        %v2456 = vmul.f32 %v2449, 0.0078125
        %v2457 = vmul.f32 %v2451, 0.0078125
        %v2458 = vmul.f32 %v2453, 0.0078125
        %v2459 = vmul.f32 %v2455, 0.0078125
        %v2460 = vsub.f32 %v2442, %v2456
        %v2461 = vsub.f32 %v2443, %v2457
        %v2462 = vsub.f32 %v2444, %v2458
        %v2463 = vsub.f32 %v2445, %v2459
        %v2464 = vmul.f32 %v2460, %v2460
        %v2465 = vmul.f32 %v2461, %v2461
        %v2466 = vmul.f32 %v2462, %v2462
        %v2467 = vmul.f32 %v2463, %v2463
        %2468 = vadd.xlane.f32.xlu0 %v2464
        %v2469 = vpop.xlane.xlu0 %2468
        %2470 = vadd.xlane.f32.xlu0 %v2465
        %v2471 = vpop.xlane.xlu0 %2470
        %2472 = vadd.xlane.f32.xlu0 %v2466
        %v2473 = vpop.xlane.xlu0 %2472
        %2474 = vadd.xlane.f32.xlu0 %v2467
        %v2475 = vpop.xlane.xlu0 %2474
        %v2476 = vmul.f32 %v2469, 0.0078125
        %v2477 = vmul.f32 %v2471, 0.0078125
        %v2478 = vmul.f32 %v2473, 0.0078125
        %v2479 = vmul.f32 %v2475, 0.0078125
        %v2480 = vadd.f32 %v2476, 1e-05
        %v2481 = vadd.f32 %v2477, 1e-05
        %v2482 = vadd.f32 %v2478, 1e-05
        %v2483 = vadd.f32 %v2479, 1e-05
        %v2484 = vrsqrt.pop %v2480
        %v2485 = vmul.f32 %v2484, %v2480
        %v2486 = vmul.f32 %v2485, %v2484
        %v2487 = vmul.f32 0.5, %v2486
        %v2488 = vsub.f32 1.5, %v2487
        %v2489 = vmul.f32 %v2484, %v2488
        %vm2490 = vweird.f32 %v2480
        %vm2491 = vweird.f32 %v2484
        %vm2492 = vmor %vm2490, %vm2491
        %v2493 = vsel %vm2492, %v2484, %v2489
        %v2494 = vrsqrt.pop %v2481
        %v2495 = vmul.f32 %v2494, %v2481
        %v2496 = vmul.f32 %v2495, %v2494
        %v2497 = vmul.f32 0.5, %v2496
        %v2498 = vsub.f32 1.5, %v2497
        %v2499 = vmul.f32 %v2494, %v2498
        %vm2500 = vweird.f32 %v2481
        %vm2501 = vweird.f32 %v2494
        %vm2502 = vmor %vm2500, %vm2501
        %v2503 = vsel %vm2502, %v2494, %v2499
        %v2504 = vrsqrt.pop %v2482
        %v2505 = vmul.f32 %v2504, %v2482
        %v2506 = vmul.f32 %v2505, %v2504
        %v2507 = vmul.f32 0.5, %v2506
        %v2508 = vsub.f32 1.5, %v2507
        %v2509 = vmul.f32 %v2504, %v2508
        %vm2510 = vweird.f32 %v2482
        %vm2511 = vweird.f32 %v2504
        %vm2512 = vmor %vm2510, %vm2511
        %v2513 = vsel %vm2512, %v2504, %v2509
        %v2514 = vrsqrt.pop %v2483
        %v2515 = vmul.f32 %v2514, %v2483
        %v2516 = vmul.f32 %v2515, %v2514
        %v2517 = vmul.f32 0.5, %v2516
        %v2518 = vsub.f32 1.5, %v2517
        %v2519 = vmul.f32 %v2514, %v2518
        %vm2520 = vweird.f32 %v2483
        %vm2521 = vweird.f32 %v2514
        %vm2522 = vmor %vm2520, %vm2521
        %v2523 = vsel %vm2522, %v2514, %v2519
        %v2524 = vmul.f32 %v2460, %v2493
        %v2525 = vmul.f32 %v2461, %v2503
        %v2526 = vmul.f32 %v2462, %v2513
        %v2527 = vmul.f32 %v2463, %v2523
        %v2529 = vperm.slane %v2446, 0
        %v2531 = vmul.f32 %v2524, %v2529
        %v2532 = vmul.f32 %v2525, %v2529
        %v2533 = vmul.f32 %v2526, %v2529
        %v2534 = vmul.f32 %v2527, %v2529
        %v2536 = vperm.slane %v2447, 0
        %v2538 = vadd.f32 %v2531, %v2536
        %v2539 = vadd.f32 %v2532, %v2536
        %v2540 = vadd.f32 %v2533, %v2536
        %v2541 = vadd.f32 %v2534, %v2536
        %v2542 = vpack.c.bf16 %v2539, %v2538
        %v2543 = vpack.c.bf16 %v2541, %v2540
        %v2544 = vld [vmem:[#allocation16] sm:$0xff]
        %v2545 = vld [vmem:[#allocation16 + $0x8] sm:$0xff]
        %v2546 = vld [vmem:[#allocation16 + $0x10] sm:$0xff]
        %v2547 = vld [vmem:[#allocation16 + $0x18] sm:$0xff]
        %v2548 = vld [vmem:[#allocation16 + $0x20] sm:$0xff]
        %v2549 = vld [vmem:[#allocation16 + $0x28] sm:$0xff]
        %v2550 = vld [vmem:[#allocation16 + $0x30] sm:$0xff]
        %v2551 = vld [vmem:[#allocation16 + $0x38] sm:$0xff]
        %v2552 = vld [vmem:[#allocation16 + $0x40] sm:$0xff]
        %v2553 = vld [vmem:[#allocation16 + $0x48] sm:$0xff]
        %v2554 = vld [vmem:[#allocation16 + $0x50] sm:$0xff]
        %v2555 = vld [vmem:[#allocation16 + $0x58] sm:$0xff]
        %v2556 = vld [vmem:[#allocation16 + $0x60] sm:$0xff]
        %v2557 = vld [vmem:[#allocation16 + $0x68] sm:$0xff]
        %v2558 = vld [vmem:[#allocation16 + $0x70] sm:$0xff]
        %v2559 = vld [vmem:[#allocation16 + $0x78] sm:$0xff]
        %v2560 = vld [vmem:[%s10] sm:$0x3]
        %v2562 = vperm.slane %v2560, 0
        %v2563 = vperm.slane %v2560, 1
        %v2582 = vunpack.c.l.b16 %v2544
        %v2583 = vunpack.c.h.b16 %v2544
        %v2584 = vunpack.c.l.b16 %v2545
        %v2585 = vunpack.c.h.b16 %v2545
        %v2586 = vunpack.c.l.b16 %v2546
        %v2587 = vunpack.c.h.b16 %v2546
        %v2588 = vunpack.c.l.b16 %v2547
        %v2589 = vunpack.c.h.b16 %v2547
        %v2590 = vunpack.c.l.b16 %v2548
        %v2591 = vunpack.c.h.b16 %v2548
        %v2592 = vunpack.c.l.b16 %v2549
        %v2593 = vunpack.c.h.b16 %v2549
        %v2594 = vunpack.c.l.b16 %v2550
        %v2595 = vunpack.c.h.b16 %v2550
        %v2596 = vunpack.c.l.b16 %v2551
        %v2597 = vunpack.c.h.b16 %v2551
        %v2598 = vunpack.c.l.b16 %v2552
        %v2599 = vunpack.c.h.b16 %v2552
        %v2600 = vunpack.c.l.b16 %v2553
        %v2601 = vunpack.c.h.b16 %v2553
        %v2602 = vunpack.c.l.b16 %v2554
        %v2603 = vunpack.c.h.b16 %v2554
        %v2604 = vunpack.c.l.b16 %v2555
        %v2605 = vunpack.c.h.b16 %v2555
        %v2606 = vunpack.c.l.b16 %v2556
        %v2607 = vunpack.c.h.b16 %v2556
        %v2608 = vunpack.c.l.b16 %v2557
        %v2609 = vunpack.c.h.b16 %v2557
        %v2610 = vunpack.c.l.b16 %v2558
        %v2611 = vunpack.c.h.b16 %v2558
        %v2612 = vunpack.c.l.b16 %v2559
        %v2613 = vunpack.c.h.b16 %v2559
        %v2614 = vpack.c.b16 %v2584, %v2582
        %v2615 = vpack.c.b16 %v2585, %v2583
        %v2616 = vpack.c.b16 %v2588, %v2586
        %v2617 = vpack.c.b16 %v2589, %v2587
        %v2618 = vpack.c.b16 %v2592, %v2590
        %v2619 = vpack.c.b16 %v2593, %v2591
        %v2620 = vpack.c.b16 %v2596, %v2594
        %v2621 = vpack.c.b16 %v2597, %v2595
        %v2622 = vpack.c.b16 %v2600, %v2598
        %v2623 = vpack.c.b16 %v2601, %v2599
        %v2624 = vpack.c.b16 %v2604, %v2602
        %v2625 = vpack.c.b16 %v2605, %v2603
        %v2626 = vpack.c.b16 %v2608, %v2606
        %v2627 = vpack.c.b16 %v2609, %v2607
        %v2628 = vpack.c.b16 %v2612, %v2610
        %v2629 = vpack.c.b16 %v2613, %v2611
        %2646 = vmatpush.bf16.msra.mxu0 %v2628
        %2647 = vmatpush.bf16.msra.mxu0 %v2626
        %2648 = vmatpush.bf16.msra.mxu0 %v2624
        %2649 = vmatpush.bf16.msra.mxu0 %v2622
        %2650 = vmatpush.bf16.msra.mxu0 %v2620
        %2651 = vmatpush.bf16.msra.mxu0 %v2618
        %2652 = vmatpush.bf16.msra.mxu0 %v2616
        %2653 = vmatpush.bf16.msra.mxu0 %v2614
        %2654 = vmatmul.bf16.gmra.mxu0 %v2542
        %v2655 = vpop.f32.mrf.mxu0
        %v2656 = vadd.f32 %v2562, %v2655
        %v2657 = vpop.f32.mrf.mxu0
        %v2658 = vadd.f32 %v2562, %v2657
        %2659 = vmatmul.bf16.gmra.mxu0 %v2543
        %v2660 = vpop.f32.mrf.mxu0
        %v2661 = vadd.f32 %v2562, %v2660
        %v2662 = vpop.f32.mrf.mxu0
        %v2663 = vadd.f32 %v2562, %v2662
        %2664 = vdwg.mxu0
        %2665 = vmatpush.bf16.msra.mxu0 %v2629
        %2666 = vmatpush.bf16.msra.mxu0 %v2627
        %2667 = vmatpush.bf16.msra.mxu0 %v2625
        %2668 = vmatpush.bf16.msra.mxu0 %v2623
        %2669 = vmatpush.bf16.msra.mxu0 %v2621
        %2670 = vmatpush.bf16.msra.mxu0 %v2619
        %2671 = vmatpush.bf16.msra.mxu0 %v2617
        %2672 = vmatpush.bf16.msra.mxu0 %v2615
        %2673 = vmatmul.bf16.gmra.mxu0 %v2542
        %v2674 = vpop.f32.mrf.mxu0
        %v2675 = vadd.f32 %v2563, %v2674
        %v2676 = vpop.f32.mrf.mxu0
        %v2677 = vadd.f32 %v2563, %v2676
        %2678 = vmatmul.bf16.gmra.mxu0 %v2543
        %v2679 = vpop.f32.mrf.mxu0
        %v2680 = vadd.f32 %v2563, %v2679
        %v2681 = vpop.f32.mrf.mxu0
        %v2682 = vadd.f32 %v2563, %v2681
        %2683 = vdwg.mxu0
        %v2684 = vmul.f32 %v2656, 0.5
        %v2685 = vmul.f32 %v2675, 0.5
        %v2686 = vmul.f32 %v2658, 0.5
        %v2687 = vmul.f32 %v2677, 0.5
        %v2688 = vmul.f32 %v2661, 0.5
        %v2689 = vmul.f32 %v2680, 0.5
        %v2690 = vmul.f32 %v2663, 0.5
        %v2691 = vmul.f32 %v2682, 0.5
        %v2692 = vmul.f32 %v2656, 0.044715
        %v2693 = vmul.f32 %v2675, 0.044715
        %v2694 = vmul.f32 %v2658, 0.044715
        %v2695 = vmul.f32 %v2677, 0.044715
        %v2696 = vmul.f32 %v2661, 0.044715
        %v2697 = vmul.f32 %v2680, 0.044715
        %v2698 = vmul.f32 %v2663, 0.044715
        %v2699 = vmul.f32 %v2682, 0.044715
        %v2700 = vmul.f32 %v2692, %v2656
        %v2701 = vmul.f32 %v2693, %v2675
        %v2702 = vmul.f32 %v2694, %v2658
        %v2703 = vmul.f32 %v2695, %v2677
        %v2704 = vmul.f32 %v2696, %v2661
        %v2705 = vmul.f32 %v2697, %v2680
        %v2706 = vmul.f32 %v2698, %v2663
        %v2707 = vmul.f32 %v2699, %v2682
        %v2708 = vmul.f32 %v2700, %v2656
        %v2709 = vmul.f32 %v2701, %v2675
        %v2710 = vmul.f32 %v2702, %v2658
        %v2711 = vmul.f32 %v2703, %v2677
        %v2712 = vmul.f32 %v2704, %v2661
        %v2713 = vmul.f32 %v2705, %v2680
        %v2714 = vmul.f32 %v2706, %v2663
        %v2715 = vmul.f32 %v2707, %v2682
        %v2716 = vadd.f32 %v2656, %v2708
        %v2717 = vadd.f32 %v2675, %v2709
        %v2718 = vadd.f32 %v2658, %v2710
        %v2719 = vadd.f32 %v2677, %v2711
        %v2720 = vadd.f32 %v2661, %v2712
        %v2721 = vadd.f32 %v2680, %v2713
        %v2722 = vadd.f32 %v2663, %v2714
        %v2723 = vadd.f32 %v2682, %v2715
        %v2724 = vmul.f32 %v2716, 0.7978846
        %v2725 = vmul.f32 %v2717, 0.7978846
        %v2726 = vmul.f32 %v2718, 0.7978846
        %v2727 = vmul.f32 %v2719, 0.7978846
        %v2728 = vmul.f32 %v2720, 0.7978846
        %v2729 = vmul.f32 %v2721, 0.7978846
        %v2730 = vmul.f32 %v2722, 0.7978846
        %v2731 = vmul.f32 %v2723, 0.7978846
        %v2732 = vtanh.pop %v2724
        %v2733 = vtanh.pop %v2725
        %v2734 = vtanh.pop %v2726
        %v2735 = vtanh.pop %v2727
        %v2736 = vtanh.pop %v2728
        %v2737 = vtanh.pop %v2729
        %v2738 = vtanh.pop %v2730
        %v2739 = vtanh.pop %v2731
        %v2740 = vadd.f32 %v2732, 1.0
        %v2741 = vadd.f32 %v2733, 1.0
        %v2742 = vadd.f32 %v2734, 1.0
        %v2743 = vadd.f32 %v2735, 1.0
        %v2744 = vadd.f32 %v2736, 1.0
        %v2745 = vadd.f32 %v2737, 1.0
        %v2746 = vadd.f32 %v2738, 1.0
        %v2747 = vadd.f32 %v2739, 1.0
        %v2748 = vmul.f32 %v2684, %v2740
        %v2749 = vmul.f32 %v2685, %v2741
        %v2750 = vmul.f32 %v2686, %v2742
        %v2751 = vmul.f32 %v2687, %v2743
        %v2752 = vmul.f32 %v2688, %v2744
        %v2753 = vmul.f32 %v2689, %v2745
        %v2754 = vmul.f32 %v2690, %v2746
        %v2755 = vmul.f32 %v2691, %v2747
        %v2756 = vpack.c.bf16 %v2750, %v2748
        %v2757 = vpack.c.bf16 %v2751, %v2749
        %v2758 = vpack.c.bf16 %v2754, %v2752
        %v2759 = vpack.c.bf16 %v2755, %v2753
        %v2760 = vld [vmem:[#allocation17] sm:$0xf]
        %v2761 = vld [vmem:[#allocation17 + $0x4] sm:$0xf]
        %v2762 = vld [vmem:[#allocation17 + $0x8] sm:$0xf]
        %v2763 = vld [vmem:[#allocation17 + $0xc] sm:$0xf]
        %v2764 = vld [vmem:[#allocation17 + $0x10] sm:$0xf]
        %v2765 = vld [vmem:[#allocation17 + $0x14] sm:$0xf]
        %v2766 = vld [vmem:[#allocation17 + $0x18] sm:$0xf]
        %v2767 = vld [vmem:[#allocation17 + $0x1c] sm:$0xf]
        %v2768 = vld [vmem:[#allocation17 + $0x20] sm:$0xf]
        %v2769 = vld [vmem:[#allocation17 + $0x24] sm:$0xf]
        %v2770 = vld [vmem:[#allocation17 + $0x28] sm:$0xf]
        %v2771 = vld [vmem:[#allocation17 + $0x2c] sm:$0xf]
        %v2772 = vld [vmem:[#allocation17 + $0x30] sm:$0xf]
        %v2773 = vld [vmem:[#allocation17 + $0x34] sm:$0xf]
        %v2774 = vld [vmem:[#allocation17 + $0x38] sm:$0xf]
        %v2775 = vld [vmem:[#allocation17 + $0x3c] sm:$0xf]
        %v2776 = vld [vmem:[#allocation17 + $0x40] sm:$0xf]
        %v2777 = vld [vmem:[#allocation17 + $0x44] sm:$0xf]
        %v2778 = vld [vmem:[#allocation17 + $0x48] sm:$0xf]
        %v2779 = vld [vmem:[#allocation17 + $0x4c] sm:$0xf]
        %v2780 = vld [vmem:[#allocation17 + $0x50] sm:$0xf]
        %v2781 = vld [vmem:[#allocation17 + $0x54] sm:$0xf]
        %v2782 = vld [vmem:[#allocation17 + $0x58] sm:$0xf]
        %v2783 = vld [vmem:[#allocation17 + $0x5c] sm:$0xf]
        %v2784 = vld [vmem:[#allocation17 + $0x60] sm:$0xf]
        %v2785 = vld [vmem:[#allocation17 + $0x64] sm:$0xf]
        %v2786 = vld [vmem:[#allocation17 + $0x68] sm:$0xf]
        %v2787 = vld [vmem:[#allocation17 + $0x6c] sm:$0xf]
        %v2788 = vld [vmem:[#allocation17 + $0x70] sm:$0xf]
        %v2789 = vld [vmem:[#allocation17 + $0x74] sm:$0xf]
        %v2790 = vld [vmem:[#allocation17 + $0x78] sm:$0xf]
        %v2791 = vld [vmem:[#allocation17 + $0x7c] sm:$0xf]
        %v2792 = vld [vmem:[%s12] sm:$0x1]
        %v2794 = vperm.slane %v2792, 0
        %v2828 = vunpack.c.l.b16 %v2760
        %v2829 = vunpack.c.l.b16 %v2761
        %v2830 = vunpack.c.l.b16 %v2762
        %v2831 = vunpack.c.l.b16 %v2763
        %v2832 = vunpack.c.l.b16 %v2764
        %v2833 = vunpack.c.l.b16 %v2765
        %v2834 = vunpack.c.l.b16 %v2766
        %v2835 = vunpack.c.l.b16 %v2767
        %v2836 = vunpack.c.l.b16 %v2768
        %v2837 = vunpack.c.l.b16 %v2769
        %v2838 = vunpack.c.l.b16 %v2770
        %v2839 = vunpack.c.l.b16 %v2771
        %v2840 = vunpack.c.l.b16 %v2772
        %v2841 = vunpack.c.l.b16 %v2773
        %v2842 = vunpack.c.l.b16 %v2774
        %v2843 = vunpack.c.l.b16 %v2775
        %v2844 = vunpack.c.l.b16 %v2776
        %v2845 = vunpack.c.l.b16 %v2777
        %v2846 = vunpack.c.l.b16 %v2778
        %v2847 = vunpack.c.l.b16 %v2779
        %v2848 = vunpack.c.l.b16 %v2780
        %v2849 = vunpack.c.l.b16 %v2781
        %v2850 = vunpack.c.l.b16 %v2782
        %v2851 = vunpack.c.l.b16 %v2783
        %v2852 = vunpack.c.l.b16 %v2784
        %v2853 = vunpack.c.l.b16 %v2785
        %v2854 = vunpack.c.l.b16 %v2786
        %v2855 = vunpack.c.l.b16 %v2787
        %v2856 = vunpack.c.l.b16 %v2788
        %v2857 = vunpack.c.l.b16 %v2789
        %v2858 = vunpack.c.l.b16 %v2790
        %v2859 = vunpack.c.l.b16 %v2791
        %v2860 = vpack.c.b16 %v2829, %v2828
        %v2861 = vpack.c.b16 %v2831, %v2830
        %v2862 = vpack.c.b16 %v2833, %v2832
        %v2863 = vpack.c.b16 %v2835, %v2834
        %v2864 = vpack.c.b16 %v2837, %v2836
        %v2865 = vpack.c.b16 %v2839, %v2838
        %v2866 = vpack.c.b16 %v2841, %v2840
        %v2867 = vpack.c.b16 %v2843, %v2842
        %v2868 = vpack.c.b16 %v2845, %v2844
        %v2869 = vpack.c.b16 %v2847, %v2846
        %v2870 = vpack.c.b16 %v2849, %v2848
        %v2871 = vpack.c.b16 %v2851, %v2850
        %v2872 = vpack.c.b16 %v2853, %v2852
        %v2873 = vpack.c.b16 %v2855, %v2854
        %v2874 = vpack.c.b16 %v2857, %v2856
        %v2875 = vpack.c.b16 %v2859, %v2858
        %2892 = vmatpush.bf16.msra.mxu0 %v2867
        %2893 = vmatpush.bf16.msra.mxu0 %v2866
        %2894 = vmatpush.bf16.msra.mxu0 %v2865
        %2895 = vmatpush.bf16.msra.mxu0 %v2864
        %2896 = vmatpush.bf16.msra.mxu0 %v2863
        %2897 = vmatpush.bf16.msra.mxu0 %v2862
        %2898 = vmatpush.bf16.msra.mxu0 %v2861
        %2899 = vmatpush.bf16.msra.mxu0 %v2860
        %2900 = vmatmul.bf16.gmra.mxu0 %v2756
        %v2901 = vpop.f32.mrf.mxu0
        %v2902 = vadd.f32 %v2794, %v2901
        %v2903 = vpop.f32.mrf.mxu0
        %v2904 = vadd.f32 %v2794, %v2903
        %2905 = vmatmul.bf16.gmra.mxu0 %v2758
        %v2906 = vpop.f32.mrf.mxu0
        %v2907 = vadd.f32 %v2794, %v2906
        %v2908 = vpop.f32.mrf.mxu0
        %v2909 = vadd.f32 %v2794, %v2908
        %2910 = vdwg.mxu0
        %2911 = vmatpush.bf16.msra.mxu0 %v2875
        %2912 = vmatpush.bf16.msra.mxu0 %v2874
        %2913 = vmatpush.bf16.msra.mxu0 %v2873
        %2914 = vmatpush.bf16.msra.mxu0 %v2872
        %2915 = vmatpush.bf16.msra.mxu0 %v2871
        %2916 = vmatpush.bf16.msra.mxu0 %v2870
        %2917 = vmatpush.bf16.msra.mxu0 %v2869
        %2918 = vmatpush.bf16.msra.mxu0 %v2868
        %2919 = vmatmul.bf16.gmra.mxu0 %v2757
        %v2920 = vpop.f32.mrf.mxu0
        %v2921 = vadd.f32 %v2902, %v2920
        %v2922 = vpop.f32.mrf.mxu0
        %v2923 = vadd.f32 %v2904, %v2922
        %2924 = vmatmul.bf16.gmra.mxu0 %v2759
        %v2925 = vpop.f32.mrf.mxu0
        %v2926 = vadd.f32 %v2907, %v2925
        %v2927 = vpop.f32.mrf.mxu0
        %v2928 = vadd.f32 %v2909, %v2927
        %2929 = vdwg.mxu0
        %v2930 = vadd.f32 %v2538, %v2921
        %v2931 = vadd.f32 %v2539, %v2923
        %v2932 = vadd.f32 %v2540, %v2926
        %v2933 = vadd.f32 %v2541, %v2928
        %v2934 = vld [vmem:[%s15] sm:$0x1]
        %v2935 = vld [vmem:[%s16] sm:$0x1]
        %2936 = vadd.xlane.f32.xlu0 %v2930
        %v2937 = vpop.xlane.xlu0 %2936
        %2938 = vadd.xlane.f32.xlu0 %v2931
        %v2939 = vpop.xlane.xlu0 %2938
        %2940 = vadd.xlane.f32.xlu0 %v2932
        %v2941 = vpop.xlane.xlu0 %2940
        %2942 = vadd.xlane.f32.xlu0 %v2933
        %v2943 = vpop.xlane.xlu0 %2942
        %v2944 = vmul.f32 %v2937, 0.0078125
        %v2945 = vmul.f32 %v2939, 0.0078125
        %v2946 = vmul.f32 %v2941, 0.0078125
        %v2947 = vmul.f32 %v2943, 0.0078125
        %v2948 = vsub.f32 %v2930, %v2944
        %v2949 = vsub.f32 %v2931, %v2945
        %v2950 = vsub.f32 %v2932, %v2946
        %v2951 = vsub.f32 %v2933, %v2947
        %v2952 = vmul.f32 %v2948, %v2948
        %v2953 = vmul.f32 %v2949, %v2949
        %v2954 = vmul.f32 %v2950, %v2950
        %v2955 = vmul.f32 %v2951, %v2951
        %2956 = vadd.xlane.f32.xlu0 %v2952
        %v2957 = vpop.xlane.xlu0 %2956
        %2958 = vadd.xlane.f32.xlu0 %v2953
        %v2959 = vpop.xlane.xlu0 %2958
        %2960 = vadd.xlane.f32.xlu0 %v2954
        %v2961 = vpop.xlane.xlu0 %2960
        %2962 = vadd.xlane.f32.xlu0 %v2955
        %v2963 = vpop.xlane.xlu0 %2962
        %v2964 = vmul.f32 %v2957, 0.0078125
        %v2965 = vmul.f32 %v2959, 0.0078125
        %v2966 = vmul.f32 %v2961, 0.0078125
        %v2967 = vmul.f32 %v2963, 0.0078125
        %v2968 = vadd.f32 %v2964, 1e-05
        %v2969 = vadd.f32 %v2965, 1e-05
        %v2970 = vadd.f32 %v2966, 1e-05
        %v2971 = vadd.f32 %v2967, 1e-05
        %v2972 = vrsqrt.pop %v2968
        %v2973 = vmul.f32 %v2972, %v2968
        %v2974 = vmul.f32 %v2973, %v2972
        %v2975 = vmul.f32 0.5, %v2974
        %v2976 = vsub.f32 1.5, %v2975
        %v2977 = vmul.f32 %v2972, %v2976
        %vm2978 = vweird.f32 %v2968
        %vm2979 = vweird.f32 %v2972
        %vm2980 = vmor %vm2978, %vm2979
        %v2981 = vsel %vm2980, %v2972, %v2977
        %v2982 = vrsqrt.pop %v2969
        %v2983 = vmul.f32 %v2982, %v2969
        %v2984 = vmul.f32 %v2983, %v2982
        %v2985 = vmul.f32 0.5, %v2984
        %v2986 = vsub.f32 1.5, %v2985
        %v2987 = vmul.f32 %v2982, %v2986
        %vm2988 = vweird.f32 %v2969
        %vm2989 = vweird.f32 %v2982
        %vm2990 = vmor %vm2988, %vm2989
        %v2991 = vsel %vm2990, %v2982, %v2987
        %v2992 = vrsqrt.pop %v2970
        %v2993 = vmul.f32 %v2992, %v2970
        %v2994 = vmul.f32 %v2993, %v2992
        %v2995 = vmul.f32 0.5, %v2994
        %v2996 = vsub.f32 1.5, %v2995
        %v2997 = vmul.f32 %v2992, %v2996
        %vm2998 = vweird.f32 %v2970
        %vm2999 = vweird.f32 %v2992
        %vm3000 = vmor %vm2998, %vm2999
        %v3001 = vsel %vm3000, %v2992, %v2997
        %v3002 = vrsqrt.pop %v2971
        %v3003 = vmul.f32 %v3002, %v2971
        %v3004 = vmul.f32 %v3003, %v3002
        %v3005 = vmul.f32 0.5, %v3004
        %v3006 = vsub.f32 1.5, %v3005
        %v3007 = vmul.f32 %v3002, %v3006
        %vm3008 = vweird.f32 %v2971
        %vm3009 = vweird.f32 %v3002
        %vm3010 = vmor %vm3008, %vm3009
        %v3011 = vsel %vm3010, %v3002, %v3007
        %v3012 = vmul.f32 %v2948, %v2981
        %v3013 = vmul.f32 %v2949, %v2991
        %v3014 = vmul.f32 %v2950, %v3001
        %v3015 = vmul.f32 %v2951, %v3011
        %v3017 = vperm.slane %v2934, 0
        %v3019 = vmul.f32 %v3012, %v3017
        %v3020 = vmul.f32 %v3013, %v3017
        %v3021 = vmul.f32 %v3014, %v3017
        %v3022 = vmul.f32 %v3015, %v3017
        %v3024 = vperm.slane %v2935, 0
        %v3026 = vadd.f32 %v3019, %v3024
        %v3027 = vadd.f32 %v3020, %v3024
        %v3028 = vadd.f32 %v3021, %v3024
        %v3029 = vadd.f32 %v3022, %v3024
        %3030 = vst [vmem:[%s727] sm:$0xff] %v3026
        %3031 = vst [vmem:[%s727 + $0x8] sm:$0xff] %v3027
        %3032 = vst [vmem:[%s727 + $0x10] sm:$0xff] %v3028
        %3033 = vst [vmem:[%s727 + $0x18] sm:$0xff] %v3029
        %s3034 = sand.u32 %s431, 1
        %s3035 = scalar_lea.sflag [#allocation7], %s3034
        %s3036 = sand.u32 %s431, 1
        %s3037 = smul.addr %s3036, 32
        %s3038 = scalar_lea.vmem [#allocation19], %s3037
        // Predicated region
        $region125: #{tpu_custom_call.1} parent=87 // pred_check
          %p3039 = pneg %p441
        $region126: #{tpu_custom_call.1} parent=87 // pred_check_branch
          %3041 = sbr.rel (%p3039) target = $region128
        $region127: #{tpu_custom_call.1} parent=87 // pred_region
          %s3042 = smul.u32 4, %s45
          %3044 = vsyncadd %s3035, 0
          %s3045 = smul.addr %s44, 8
          %s3046 = sadd.s32 %s3042, %s3045
          %s3047 = smul.addr %s3046, 8
          %s3048 = scalar_lea.hbm %s17, %s3047
          %s3049 = sshll.u32 %s3038, 4
          %s3050 = int_to_ptr.vmem [resolvable:$true] %s3049
          %s3051 = sshll.u32 %s3048, 4
          %s3052 = int_to_ptr.hbm [resolvable:$true] %s3051
          %3057 = dma.vmem_to_hbm [thread:$0]  %s3050, 512, %s3052, %s3035, 128, 128, 8
        $region128: #{tpu_custom_call.1} parent=87 // pred_fallthru
          _
      $region88: #{tpu_custom_call.1} parent=5 // pred_fallthru
        _
      %p3058 = scmp.le.s32.totalorder 2, %s35
      // Predicated region
      $region129: #{tpu_custom_call.1} parent=5 // pred_check
        %p3059 = pneg %p3058
      $region130: #{tpu_custom_call.1} parent=5 // pred_check_branch
        %3061 = sbr.rel (%p3059) target = $region132
      $region131: #{tpu_custom_call.1} parent=5 // pred_region
        %s3062 = ssub.s32 %s35, 2
        // Predicated region
        $region133: #{tpu_custom_call.1} parent=131 // pred_check
          %p3063 = pneg %p447
        $region134: #{tpu_custom_call.1} parent=131 // pred_check_branch
          %3065 = sbr.rel (%p3063) target = $region136
        $region135: #{tpu_custom_call.1} parent=131 // pred_region
          %s3066 = sand.u32 %s432, 1
          %s3067 = scalar_lea.sflag [#allocation7], %s3066
          %s3068 = sand.u32 %s432, 1
          %s3069 = smul.addr %s3068, 32
          %s3070 = scalar_lea.vmem [#allocation19], %s3069
          %3072 = dma.done %s3067, 512
        $region136: #{tpu_custom_call.1} parent=131 // pred_fallthru
          _
      $region132: #{tpu_custom_call.1} parent=5 // pred_fallthru
        _
    $region6: #{tpu_custom_call.1} parent=1 // loop_footer
      %s39 = sadd.s32 1, %s35
    $region7: #{tpu_custom_call.1} parent=1 // loop_footer_branch
      %34 = sbr.rel target = $region3
    $region8: #{tpu_custom_call.1} parent=1 // loop_exit
      _
    %3073 = vsyncpa [#allocation6], 1
    %s3074 = scalar_lea.sflag [#allocation6], 1
    %3075 = vsyncpa %s3074, 1
    %3076 = vsyncpa [#allocation9], 1
    %s3077 = scalar_lea.sflag [#allocation9], 1
    %3078 = vsyncpa %s3077, 1
    %3079 = vsyncpa [#allocation12], 1
    %3080 = vsyncpa [#allocation15], 1
    %3081 = vsyncpa [#allocation18], 1
    %3082 = vsyncpa [#allocation7], 1
    %s3083 = scalar_lea.sflag [#allocation7], 1
    %3084 = vsyncpa %s3083, 1

</llo_original>
